<compile_context>
chip_gen: v5e
topology: v5e:2x2
jax: 0.10.0
libtpu: 0.0.40
codegen_flags: <defaults>
</compile_context>

<pallas_src>
import math

import jax
import jax.numpy as jnp
from jax.experimental import pallas as pl
from jax.experimental.pallas import tpu as pltpu

# ----------------------------- model hyper-parameters -----------------------------
B = 2            # batch
L = 16           # sequence length
D_INPUT = 12     # per the reference script
D_OUTPUT = 8     # per the reference script
D_MODEL = 64     # d_model (PyTorch default is 256; small synthetic size)
N_LAYERS = 4
D_STATE = 64     # S4D default d_state (N); kernel uses N//2 complex modes
N2 = D_STATE // 2
LN_EPS = 1e-5
SQRT_HALF = 0.7071067811865476
CONV_UNROLL = 4  # independent partial accumulators in the depthwise-conv loop (L % 4 == 0)


# ------------------------------ in-kernel math helpers ----------------------------
def _erf(z):
    # Abramowitz & Stegun 7.1.26 rational approximation (max abs err ~1.5e-7),
    # built only from exp / mul / add so it is guaranteed to lower in Mosaic.
    a1, a2, a3, a4, a5 = 0.254829592, -0.284496736, 1.421413741, -1.453152027, 1.061405429
    p = 0.3275911
    az = jnp.abs(z)
    t = 1.0 / (1.0 + p * az)
    poly = t * (a1 + t * (a2 + t * (a3 + t * (a4 + t * a5))))
    r = 1.0 - poly * jnp.exp(-az * az)
    return jnp.where(z >= 0.0, r, -r)


def _gelu(z):
    # erf-based GELU, matching torch.nn.GELU() default (to ~1.5e-7)
    return 0.5 * z * (1.0 + _erf(z * SQRT_HALF))


# ----------------------------------- Pallas kernel ---------------------------------
def s4model_kernel(x_ref, w_enc_t_ref, b_enc_ref, tfull_ref,
                   wc_t_ref, bc_ref, gamma_ref, beta_ref,
                   w_dec_t_ref, b_dec_ref, out_ref, u_scr):
    # One batch element per grid program; activations are (L, H) slabs throughout.
    x = x_ref[0]                                                    # (L, D_INPUT)

    # ---- encoder: Linear(d_input -> d_model) ----
    h = jnp.dot(x, w_enc_t_ref[...], preferred_element_type=jnp.float32) + b_enc_ref[...]
    # h: (L, H)

    for layer in range(N_LAYERS):
        u = h                                   # residual input (kept live as a value)
        u_scr[...] = h                          # staged in VMEM for cheap per-row ref loads

        # ---- S4D causal depthwise conv (D skip already folded into the Toeplitz diagonal) ----
        # y[l, h] = sum_j T[layer, j, l, h] * u[j, h]; 4 independent partial accumulators
        # break the serial dependency chain so the VALU can co-issue.
        acc = [tfull_ref[layer, r, :, :] * u_scr[pl.ds(r, 1), :]
               for r in range(CONV_UNROLL)]
        for j in range(CONV_UNROLL, L, CONV_UNROLL):
            for r in range(CONV_UNROLL):
                acc[r] = acc[r] + tfull_ref[layer, j + r, :, :] * u_scr[pl.ds(j + r, 1), :]
        y = (acc[0] + acc[1]) + (acc[2] + acc[3])                   # (L, H)

        # ---- GELU activation ----
        y = _gelu(y)
        # TODO(synk): DropoutNd / nn.Dropout are identity here (inference / eval mode).

        # ---- output_linear: Conv1d(H, 2H, k=1) + GLU fused into one 64x128 matmul ----
        v = jnp.dot(y, wc_t_ref[layer], preferred_element_type=jnp.float32) + bc_ref[layer]
        z = v[:, :D_MODEL] * jax.nn.sigmoid(v[:, D_MODEL:])         # value * sigmoid(gate)

        # ---- residual + post-LayerNorm over channels (one-pass mean / E[x^2]) ----
        h = z + u
        mean = jnp.mean(h, axis=-1, keepdims=True)
        msq = jnp.mean(h * h, axis=-1, keepdims=True)
        var = msq - mean * mean
        h = (h - mean) * jax.lax.rsqrt(var + LN_EPS)
        h = h * gamma_ref[layer] + beta_ref[layer]

    # ---- mean pool over sequence, decoder, sigmoid ----
    pooled = jnp.mean(h, axis=0, keepdims=True)                     # (1, H)
    logits = jnp.dot(pooled, w_dec_t_ref[...], preferred_element_type=jnp.float32) + b_dec_ref[...]
    out_ref[0] = jax.nn.sigmoid(logits)                             # block (1, 1, D_OUTPUT)


# ----------------------------- parameter / kernel glue ------------------------------
def compute_ssm_kernels(log_dt, c_re, c_im, log_a_real, a_imag, seq_len):
    """Faithful reimplementation of S4DKernel.forward(L). Returns (n_layers, H, L)."""
    dt = jnp.exp(log_dt)                                        # (nl, H)
    c = c_re + 1j * c_im                                        # (nl, H, N2)
    a = -jnp.exp(log_a_real) + 1j * a_imag                      # (nl, H, N2)
    dt_a = a * dt[..., None]                                    # (nl, H, N2)
    k_exp = jnp.exp(dt_a[..., None] * jnp.arange(seq_len))      # (nl, H, N2, L)
    c2 = c * (jnp.exp(dt_a) - 1.0) / a
    k = 2.0 * jnp.einsum('ahn,ahnl->ahl', c2, k_exp).real       # (nl, H, L)
    return k.astype(jnp.float32)


def build_causal_toeplitz(k, d_skip, seq_len):
    """k: (nl,H,L), d_skip: (nl,H) -> T: (nl, L_in, L_out, H) with
    T[a,j,l,h] = k[a,h,l-j] if l>=j else 0, plus d_skip[a,h] on the l==j diagonal.
    Row-major in j so T[a,j] is a contiguous (L_out,H) slab for in-kernel row loads."""
    li = jnp.arange(seq_len)[:, None]                           # output position l
    ji = jnp.arange(seq_len)[None, :]                           # input position j
    diff = li - ji
    mask = diff >= 0
    gathered = k[:, :, jnp.clip(diff, 0, seq_len - 1)]          # (nl, H, L_out, L_in)
    gathered = jnp.where(mask[None, None], gathered, 0.0)
    tfull = jnp.transpose(gathered, (0, 3, 2, 1))               # (nl, L_in, L_out, H)
    # Fold the D skip term into the diagonal (parameter-only, wrapper-side work).
    eye = jnp.eye(seq_len, dtype=k.dtype)
    return tfull + eye[None, :, :, None] * d_skip[:, None, None, :]


def init_params(key):
    ks = jax.random.split(key, 12)
    f32 = jnp.float32
    k_enc = 1.0 / math.sqrt(D_INPUT)
    w_enc = jax.random.uniform(ks[0], (D_MODEL, D_INPUT), f32, -k_enc, k_enc)
    b_enc = jax.random.uniform(ks[1], (D_MODEL,), f32, -k_enc, k_enc)

    # S4DKernel parameters per layer
    log_dt = (jax.random.uniform(ks[2], (N_LAYERS, D_MODEL), f32)
              * (math.log(0.1) - math.log(0.001)) + math.log(0.001))
    c_re = jax.random.normal(ks[3], (N_LAYERS, D_MODEL, N2), f32) * SQRT_HALF
    c_im = jax.random.normal(ks[4], (N_LAYERS, D_MODEL, N2), f32) * SQRT_HALF
    log_a_real = jnp.full((N_LAYERS, D_MODEL, N2), math.log(0.5), f32)
    a_imag = jnp.broadcast_to(math.pi * jnp.arange(N2, dtype=f32), (N_LAYERS, D_MODEL, N2))

    d_skip = jax.random.normal(ks[5], (N_LAYERS, D_MODEL), f32)

    k_conv = 1.0 / math.sqrt(D_MODEL)
    wc = jax.random.uniform(ks[6], (N_LAYERS, 2 * D_MODEL, D_MODEL), f32, -k_conv, k_conv)
    bc = jax.random.uniform(ks[7], (N_LAYERS, 2 * D_MODEL), f32, -k_conv, k_conv)

    gamma = jnp.ones((N_LAYERS, D_MODEL), f32)
    beta = jnp.zeros((N_LAYERS, D_MODEL), f32)

    k_dec = 1.0 / math.sqrt(D_MODEL)
    w_dec = jax.random.uniform(ks[8], (D_OUTPUT, D_MODEL), f32, -k_dec, k_dec)
    b_dec = jax.random.uniform(ks[9], (D_OUTPUT,), f32, -k_dec, k_dec)

    return dict(w_enc=w_enc, b_enc=b_enc, log_dt=log_dt, c_re=c_re, c_im=c_im,
                log_a_real=log_a_real, a_imag=a_imag, d_skip=d_skip, wc=wc, bc=bc,
                gamma=gamma, beta=beta, w_dec=w_dec, b_dec=b_dec)


def _full_spec(shape):
    """Full-array block, same block for every grid point (weights / tables)."""
    zeros = (0,) * len(shape)
    return pl.BlockSpec(shape, lambda b: zeros)


def s4model_forward(x, params):
    # Parameter-only preprocessing (glue): SSM kernel K, causal Toeplitz form, D-skip fold.
    k = compute_ssm_kernels(params['log_dt'], params['c_re'], params['c_im'],
                            params['log_a_real'], params['a_imag'], L)
    tfull = build_causal_toeplitz(k, params['d_skip'], L)       # (nl, L, L, H), ~256 KiB
    # NOTE(v7x): tfull is N_LAYERS*L*L*H*4 B; fine here, but for long L stream one layer's
    # (L,L,H) slab at a time (layer grid axis) to stay inside the 64 MiB VMEM budget.

    # Pre-transpose matmul weights; fuse the GLU value/gate halves into one (H, 2H) weight.
    w_enc_t = params['w_enc'].T                                 # (D_INPUT, H)
    b_enc = params['b_enc'].reshape(1, D_MODEL)
    wc_t = jnp.transpose(params['wc'], (0, 2, 1))               # (nl, H, 2H): cols [:H]=value, [H:]=gate
    bc = params['bc'].reshape(N_LAYERS, 1, 2 * D_MODEL)
    gamma = params['gamma'].reshape(N_LAYERS, 1, D_MODEL)
    beta = params['beta'].reshape(N_LAYERS, 1, D_MODEL)
    w_dec_t = params['w_dec'].T                                 # (H, D_OUTPUT)
    b_dec = params['b_dec'].reshape(1, D_OUTPUT)

    grid_spec = pltpu.PrefetchScalarGridSpec(
        num_scalar_prefetch=0,
        grid=(B,),                                              # one batch element per program
        in_specs=[
            pl.BlockSpec((1, L, D_INPUT), lambda b: (b, 0, 0)),
            _full_spec((D_INPUT, D_MODEL)),
            _full_spec((1, D_MODEL)),
            _full_spec((N_LAYERS, L, L, D_MODEL)),
            _full_spec((N_LAYERS, D_MODEL, 2 * D_MODEL)),
            _full_spec((N_LAYERS, 1, 2 * D_MODEL)),
            _full_spec((N_LAYERS, 1, D_MODEL)),
            _full_spec((N_LAYERS, 1, D_MODEL)),
            _full_spec((D_MODEL, D_OUTPUT)),
            _full_spec((1, D_OUTPUT)),
        ],
        out_specs=pl.BlockSpec((1, 1, D_OUTPUT), lambda b: (b, 0, 0)),
        scratch_shapes=[pltpu.VMEM((L, D_MODEL), jnp.float32)],  # staged residual input
    )

    out = pl.pallas_call(
        s4model_kernel,
        out_shape=jax.ShapeDtypeStruct((B, 1, D_OUTPUT), jnp.float32),
        grid_spec=grid_spec,
        compiler_params=pltpu.CompilerParams(dimension_semantics=("parallel",)),
    )(x, w_enc_t, b_enc, tfull, wc_t, bc, gamma, beta, w_dec_t, b_dec)
    return out.reshape(B, D_OUTPUT)


if __name__ == "__main__":
    key = jax.random.PRNGKey(0)
    k_params, k_x = jax.random.split(key)
    params = init_params(k_params)
    x = jax.random.normal(k_x, (B, L, D_INPUT), jnp.float32)    # (B, L, d_input)

    out = jax.jit(s4model_forward)(x, params)
    out = jax.block_until_ready(out)
    assert out.shape == (B, D_OUTPUT)
    assert bool(jnp.all(jnp.isfinite(out)))
    print("KERNEL_OK")
</pallas_src>

<mosaic_0001>
module attributes {stable_mosaic.version = 11 : i64} {
  func.func @s4model_kernel(%arg0: i32, %arg1: memref<1x16x12xf32, #tpu.memory_space<vmem>>, %arg2: memref<12x64xf32, #tpu.memory_space<vmem>>, %arg3: memref<1x64xf32, #tpu.memory_space<vmem>>, %arg4: memref<4x16x16x64xf32, #tpu.memory_space<vmem>>, %arg5: memref<4x64x128xf32, #tpu.memory_space<vmem>>, %arg6: memref<4x1x128xf32, #tpu.memory_space<vmem>>, %arg7: memref<4x1x64xf32, #tpu.memory_space<vmem>>, %arg8: memref<4x1x64xf32, #tpu.memory_space<vmem>>, %arg9: memref<64x8xf32, #tpu.memory_space<vmem>>, %arg10: memref<1x8xf32, #tpu.memory_space<vmem>>, %arg11: memref<1x1x8xf32, #tpu.memory_space<vmem>>, %arg12: memref<16x64xf32, #tpu.memory_space<vmem>>) attributes {dimension_semantics = [#tpu.dimension_semantics<parallel>], iteration_bounds = array<i64: 2>, scalar_prefetch = 0 : i64, scratch_operands = 1 : i64, tpu.core_type = #tpu.core_type<tc>, window_params = [{transform_indices = @transform_0, window_bounds = array<i64: 1, 16, 12>}, {pipeline_mode = #tpu.pipeline_mode<synchronous>, transform_indices = @transform_1, window_bounds = array<i64: 12, 64>}, {pipeline_mode = #tpu.pipeline_mode<synchronous>, transform_indices = @transform_2, window_bounds = array<i64: 1, 64>}, {pipeline_mode = #tpu.pipeline_mode<synchronous>, transform_indices = @transform_3, window_bounds = array<i64: 4, 16, 16, 64>}, {pipeline_mode = #tpu.pipeline_mode<synchronous>, transform_indices = @transform_4, window_bounds = array<i64: 4, 64, 128>}, {pipeline_mode = #tpu.pipeline_mode<synchronous>, transform_indices = @transform_5, window_bounds = array<i64: 4, 1, 128>}, {pipeline_mode = #tpu.pipeline_mode<synchronous>, transform_indices = @transform_6, window_bounds = array<i64: 4, 1, 64>}, {pipeline_mode = #tpu.pipeline_mode<synchronous>, transform_indices = @transform_7, window_bounds = array<i64: 4, 1, 64>}, {pipeline_mode = #tpu.pipeline_mode<synchronous>, transform_indices = @transform_8, window_bounds = array<i64: 64, 8>}, {pipeline_mode = #tpu.pipeline_mode<synchronous>, transform_indices = @transform_9, window_bounds = array<i64: 1, 8>}, {transform_indices = @transform_10, window_bounds = array<i64: 1, 1, 8>}]} {
    %c0 = arith.constant 0 : index
    %c0_0 = arith.constant 0 : index
    %c0_1 = arith.constant 0 : index
    %0 = vector.load %arg1[%c0, %c0_0, %c0_1] : memref<1x16x12xf32, #tpu.memory_space<vmem>>, vector<1x16x12xf32>
    %1 = vector.shape_cast %0 : vector<1x16x12xf32> to vector<16x12xf32>
    %c0_2 = arith.constant 0 : index
    %c0_3 = arith.constant 0 : index
    %2 = vector.load %arg2[%c0_2, %c0_3] : memref<12x64xf32, #tpu.memory_space<vmem>>, vector<12x64xf32>
    %cst = arith.constant dense<0.000000e+00> : vector<16x64xf32>
    %3 = tpu.matmul %1, %2, %cst {dimension_numbers = #tpu.dot_dimension_numbers<[1], [0], [0], [1], [0, 0, 1, 1], [], []>} : vector<16x12xf32>, vector<12x64xf32>, vector<16x64xf32> -> vector<16x64xf32>
    %c0_4 = arith.constant 0 : index
    %c0_5 = arith.constant 0 : index
    %4 = vector.load %arg3[%c0_4, %c0_5] : memref<1x64xf32, #tpu.memory_space<vmem>>, vector<1x64xf32>
    %5 = vector.broadcast %4 : vector<1x64xf32> to vector<16x64xf32>
    %6 = arith.addf %3, %5 : vector<16x64xf32>
    %c0_6 = arith.constant 0 : index
    %c0_7 = arith.constant 0 : index
    %7 = vector.load %arg12[%c0_6, %c0_7] : memref<16x64xf32, #tpu.memory_space<vmem>>, vector<16x64xf32>
    tpu.vector_store %arg12[%c0_6, %c0_7], %6 {strides = array<i32>} : memref<16x64xf32, #tpu.memory_space<vmem>>, vector<16x64xf32>,
    %c0_8 = arith.constant 0 : index
    %c0_9 = arith.constant 0 : index
    %c0_10 = arith.constant 0 : index
    %c0_11 = arith.constant 0 : index
    %8 = vector.load %arg4[%c0_8, %c0_9, %c0_10, %c0_11] : memref<4x16x16x64xf32, #tpu.memory_space<vmem>>, vector<1x1x16x64xf32>
    %9 = vector.shape_cast %8 : vector<1x1x16x64xf32> to vector<16x64xf32>
    %c0_12 = arith.constant 0 : index
    %c0_13 = arith.constant 0 : index
    %10 = vector.load %arg12[%c0_12, %c0_13] : memref<16x64xf32, #tpu.memory_space<vmem>>, vector<1x64xf32>
    %11 = vector.broadcast %10 : vector<1x64xf32> to vector<16x64xf32>
    %12 = arith.mulf %9, %11 : vector<16x64xf32>
    %c0_14 = arith.constant 0 : index
    %c1 = arith.constant 1 : index
    %c0_15 = arith.constant 0 : index
    %c0_16 = arith.constant 0 : index
    %13 = vector.load %arg4[%c0_14, %c1, %c0_15, %c0_16] : memref<4x16x16x64xf32, #tpu.memory_space<vmem>>, vector<1x1x16x64xf32>
    %14 = vector.shape_cast %13 : vector<1x1x16x64xf32> to vector<16x64xf32>
    %c1_17 = arith.constant 1 : index
    %c0_18 = arith.constant 0 : index
    %15 = vector.load %arg12[%c1_17, %c0_18] : memref<16x64xf32, #tpu.memory_space<vmem>>, vector<1x64xf32>
    %16 = vector.broadcast %15 : vector<1x64xf32> to vector<16x64xf32>
    %17 = arith.mulf %14, %16 : vector<16x64xf32>
    %c0_19 = arith.constant 0 : index
    %c2 = arith.constant 2 : index
    %c0_20 = arith.constant 0 : index
    %c0_21 = arith.constant 0 : index
    %18 = vector.load %arg4[%c0_19, %c2, %c0_20, %c0_21] : memref<4x16x16x64xf32, #tpu.memory_space<vmem>>, vector<1x1x16x64xf32>
    %19 = vector.shape_cast %18 : vector<1x1x16x64xf32> to vector<16x64xf32>
    %c2_22 = arith.constant 2 : index
    %c0_23 = arith.constant 0 : index
    %20 = vector.load %arg12[%c2_22, %c0_23] : memref<16x64xf32, #tpu.memory_space<vmem>>, vector<1x64xf32>
    %21 = vector.broadcast %20 : vector<1x64xf32> to vector<16x64xf32>
    %22 = arith.mulf %19, %21 : vector<16x64xf32>
    %c0_24 = arith.constant 0 : index
    %c3 = arith.constant 3 : index
    %c0_25 = arith.constant 0 : index
    %c0_26 = arith.constant 0 : index
    %23 = vector.load %arg4[%c0_24, %c3, %c0_25, %c0_26] : memref<4x16x16x64xf32, #tpu.memory_space<vmem>>, vector<1x1x16x64xf32>
    %24 = vector.shape_cast %23 : vector<1x1x16x64xf32> to vector<16x64xf32>
    %c3_27 = arith.constant 3 : index
    %c0_28 = arith.constant 0 : index
    %25 = vector.load %arg12[%c3_27, %c0_28] : memref<16x64xf32, #tpu.memory_space<vmem>>, vector<1x64xf32>
    %26 = vector.broadcast %25 : vector<1x64xf32> to vector<16x64xf32>
    %27 = arith.mulf %24, %26 : vector<16x64xf32>
    %c0_29 = arith.constant 0 : index
    %c4 = arith.constant 4 : index
    %c0_30 = arith.constant 0 : index
    %c0_31 = arith.constant 0 : index
    %28 = vector.load %arg4[%c0_29, %c4, %c0_30, %c0_31] : memref<4x16x16x64xf32, #tpu.memory_space<vmem>>, vector<1x1x16x64xf32>
    %29 = vector.shape_cast %28 : vector<1x1x16x64xf32> to vector<16x64xf32>
    %c4_32 = arith.constant 4 : index
    %c0_33 = arith.constant 0 : index
    %30 = vector.load %arg12[%c4_32, %c0_33] : memref<16x64xf32, #tpu.memory_space<vmem>>, vector<1x64xf32>
    %31 = vector.broadcast %30 : vector<1x64xf32> to vector<16x64xf32>
    %32 = arith.mulf %29, %31 : vector<16x64xf32>
    %33 = arith.addf %12, %32 : vector<16x64xf32>
    %c0_34 = arith.constant 0 : index
    %c5 = arith.constant 5 : index
    %c0_35 = arith.constant 0 : index
    %c0_36 = arith.constant 0 : index
    %34 = vector.load %arg4[%c0_34, %c5, %c0_35, %c0_36] : memref<4x16x16x64xf32, #tpu.memory_space<vmem>>, vector<1x1x16x64xf32>
    %35 = vector.shape_cast %34 : vector<1x1x16x64xf32> to vector<16x64xf32>
    %c5_37 = arith.constant 5 : index
    %c0_38 = arith.constant 0 : index
    %36 = vector.load %arg12[%c5_37, %c0_38] : memref<16x64xf32, #tpu.memory_space<vmem>>, vector<1x64xf32>
    %37 = vector.broadcast %36 : vector<1x64xf32> to vector<16x64xf32>
    %38 = arith.mulf %35, %37 : vector<16x64xf32>
    %39 = arith.addf %17, %38 : vector<16x64xf32>
    %c0_39 = arith.constant 0 : index
    %c6 = arith.constant 6 : index
    %c0_40 = arith.constant 0 : index
    %c0_41 = arith.constant 0 : index
    %40 = vector.load %arg4[%c0_39, %c6, %c0_40, %c0_41] : memref<4x16x16x64xf32, #tpu.memory_space<vmem>>, vector<1x1x16x64xf32>
    %41 = vector.shape_cast %40 : vector<1x1x16x64xf32> to vector<16x64xf32>
    %c6_42 = arith.constant 6 : index
    %c0_43 = arith.constant 0 : index
    %42 = vector.load %arg12[%c6_42, %c0_43] : memref<16x64xf32, #tpu.memory_space<vmem>>, vector<1x64xf32>
    %43 = vector.broadcast %42 : vector<1x64xf32> to vector<16x64xf32>
    %44 = arith.mulf %41, %43 : vector<16x64xf32>
    %45 = arith.addf %22, %44 : vector<16x64xf32>
    %c0_44 = arith.constant 0 : index
    %c7 = arith.constant 7 : index
    %c0_45 = arith.constant 0 : index
    %c0_46 = arith.constant 0 : index
    %46 = vector.load %arg4[%c0_44, %c7, %c0_45, %c0_46] : memref<4x16x16x64xf32, #tpu.memory_space<vmem>>, vector<1x1x16x64xf32>
    %47 = vector.shape_cast %46 : vector<1x1x16x64xf32> to vector<16x64xf32>
    %c7_47 = arith.constant 7 : index
    %c0_48 = arith.constant 0 : index
    %48 = vector.load %arg12[%c7_47, %c0_48] : memref<16x64xf32, #tpu.memory_space<vmem>>, vector<1x64xf32>
    %49 = vector.broadcast %48 : vector<1x64xf32> to vector<16x64xf32>
    %50 = arith.mulf %47, %49 : vector<16x64xf32>
    %51 = arith.addf %27, %50 : vector<16x64xf32>
    %c0_49 = arith.constant 0 : index
    %c8 = arith.constant 8 : index
    %c0_50 = arith.constant 0 : index
    %c0_51 = arith.constant 0 : index
    %52 = vector.load %arg4[%c0_49, %c8, %c0_50, %c0_51] : memref<4x16x16x64xf32, #tpu.memory_space<vmem>>, vector<1x1x16x64xf32>
    %53 = vector.shape_cast %52 : vector<1x1x16x64xf32> to vector<16x64xf32>
    %c8_52 = arith.constant 8 : index
    %c0_53 = arith.constant 0 : index
    %54 = vector.load %arg12[%c8_52, %c0_53] : memref<16x64xf32, #tpu.memory_space<vmem>>, vector<1x64xf32>
    %55 = vector.broadcast %54 : vector<1x64xf32> to vector<16x64xf32>
    %56 = arith.mulf %53, %55 : vector<16x64xf32>
    %57 = arith.addf %33, %56 : vector<16x64xf32>
    %c0_54 = arith.constant 0 : index
    %c9 = arith.constant 9 : index
    %c0_55 = arith.constant 0 : index
    %c0_56 = arith.constant 0 : index
    %58 = vector.load %arg4[%c0_54, %c9, %c0_55, %c0_56] : memref<4x16x16x64xf32, #tpu.memory_space<vmem>>, vector<1x1x16x64xf32>
    %59 = vector.shape_cast %58 : vector<1x1x16x64xf32> to vector<16x64xf32>
    %c9_57 = arith.constant 9 : index
    %c0_58 = arith.constant 0 : index
    %60 = vector.load %arg12[%c9_57, %c0_58] : memref<16x64xf32, #tpu.memory_space<vmem>>, vector<1x64xf32>
    %61 = vector.broadcast %60 : vector<1x64xf32> to vector<16x64xf32>
    %62 = arith.mulf %59, %61 : vector<16x64xf32>
    %63 = arith.addf %39, %62 : vector<16x64xf32>
    %c0_59 = arith.constant 0 : index
    %c10 = arith.constant 10 : index
    %c0_60 = arith.constant 0 : index
    %c0_61 = arith.constant 0 : index
    %64 = vector.load %arg4[%c0_59, %c10, %c0_60, %c0_61] : memref<4x16x16x64xf32, #tpu.memory_space<vmem>>, vector<1x1x16x64xf32>
    %65 = vector.shape_cast %64 : vector<1x1x16x64xf32> to vector<16x64xf32>
    %c10_62 = arith.constant 10 : index
    %c0_63 = arith.constant 0 : index
    %66 = vector.load %arg12[%c10_62, %c0_63] : memref<16x64xf32, #tpu.memory_space<vmem>>, vector<1x64xf32>
    %67 = vector.broadcast %66 : vector<1x64xf32> to vector<16x64xf32>
    %68 = arith.mulf %65, %67 : vector<16x64xf32>
    %69 = arith.addf %45, %68 : vector<16x64xf32>
    %c0_64 = arith.constant 0 : index
    %c11 = arith.constant 11 : index
    %c0_65 = arith.constant 0 : index
    %c0_66 = arith.constant 0 : index
    %70 = vector.load %arg4[%c0_64, %c11, %c0_65, %c0_66] : memref<4x16x16x64xf32, #tpu.memory_space<vmem>>, vector<1x1x16x64xf32>
    %71 = vector.shape_cast %70 : vector<1x1x16x64xf32> to vector<16x64xf32>
    %c11_67 = arith.constant 11 : index
    %c0_68 = arith.constant 0 : index
    %72 = vector.load %arg12[%c11_67, %c0_68] : memref<16x64xf32, #tpu.memory_space<vmem>>, vector<1x64xf32>
    %73 = vector.broadcast %72 : vector<1x64xf32> to vector<16x64xf32>
    %74 = arith.mulf %71, %73 : vector<16x64xf32>
    %75 = arith.addf %51, %74 : vector<16x64xf32>
    %c0_69 = arith.constant 0 : index
    %c12 = arith.constant 12 : index
    %c0_70 = arith.constant 0 : index
    %c0_71 = arith.constant 0 : index
    %76 = vector.load %arg4[%c0_69, %c12, %c0_70, %c0_71] : memref<4x16x16x64xf32, #tpu.memory_space<vmem>>, vector<1x1x16x64xf32>
    %77 = vector.shape_cast %76 : vector<1x1x16x64xf32> to vector<16x64xf32>
    %c12_72 = arith.constant 12 : index
    %c0_73 = arith.constant 0 : index
    %78 = vector.load %arg12[%c12_72, %c0_73] : memref<16x64xf32, #tpu.memory_space<vmem>>, vector<1x64xf32>
    %79 = vector.broadcast %78 : vector<1x64xf32> to vector<16x64xf32>
    %80 = arith.mulf %77, %79 : vector<16x64xf32>
    %81 = arith.addf %57, %80 : vector<16x64xf32>
    %c0_74 = arith.constant 0 : index
    %c13 = arith.constant 13 : index
    %c0_75 = arith.constant 0 : index
    %c0_76 = arith.constant 0 : index
    %82 = vector.load %arg4[%c0_74, %c13, %c0_75, %c0_76] : memref<4x16x16x64xf32, #tpu.memory_space<vmem>>, vector<1x1x16x64xf32>
    %83 = vector.shape_cast %82 : vector<1x1x16x64xf32> to vector<16x64xf32>
    %c13_77 = arith.constant 13 : index
    %c0_78 = arith.constant 0 : index
    %84 = vector.load %arg12[%c13_77, %c0_78] : memref<16x64xf32, #tpu.memory_space<vmem>>, vector<1x64xf32>
    %85 = vector.broadcast %84 : vector<1x64xf32> to vector<16x64xf32>
    %86 = arith.mulf %83, %85 : vector<16x64xf32>
    %87 = arith.addf %63, %86 : vector<16x64xf32>
    %c0_79 = arith.constant 0 : index
    %c14 = arith.constant 14 : index
    %c0_80 = arith.constant 0 : index
    %c0_81 = arith.constant 0 : index
    %88 = vector.load %arg4[%c0_79, %c14, %c0_80, %c0_81] : memref<4x16x16x64xf32, #tpu.memory_space<vmem>>, vector<1x1x16x64xf32>
    %89 = vector.shape_cast %88 : vector<1x1x16x64xf32> to vector<16x64xf32>
    %c14_82 = arith.constant 14 : index
    %c0_83 = arith.constant 0 : index
    %90 = vector.load %arg12[%c14_82, %c0_83] : memref<16x64xf32, #tpu.memory_space<vmem>>, vector<1x64xf32>
    %91 = vector.broadcast %90 : vector<1x64xf32> to vector<16x64xf32>
    %92 = arith.mulf %89, %91 : vector<16x64xf32>
    %93 = arith.addf %69, %92 : vector<16x64xf32>
    %c0_84 = arith.constant 0 : index
    %c15 = arith.constant 15 : index
    %c0_85 = arith.constant 0 : index
    %c0_86 = arith.constant 0 : index
    %94 = vector.load %arg4[%c0_84, %c15, %c0_85, %c0_86] : memref<4x16x16x64xf32, #tpu.memory_space<vmem>>, vector<1x1x16x64xf32>
    %95 = vector.shape_cast %94 : vector<1x1x16x64xf32> to vector<16x64xf32>
    %c15_87 = arith.constant 15 : index
    %c0_88 = arith.constant 0 : index
    %96 = vector.load %arg12[%c15_87, %c0_88] : memref<16x64xf32, #tpu.memory_space<vmem>>, vector<1x64xf32>
    %97 = vector.broadcast %96 : vector<1x64xf32> to vector<16x64xf32>
    %98 = arith.mulf %95, %97 : vector<16x64xf32>
    %99 = arith.addf %75, %98 : vector<16x64xf32>
    %100 = arith.addf %81, %87 : vector<16x64xf32>
    %101 = arith.addf %93, %99 : vector<16x64xf32>
    %102 = arith.addf %100, %101 : vector<16x64xf32>
    %cst_89 = arith.constant 5.000000e-01 : f32
    %103 = vector.broadcast %cst_89 : f32 to vector<16x64xf32>
    %104 = arith.mulf %103, %102 : vector<16x64xf32>
    %cst_90 = arith.constant 0.707106769 : f32
    %105 = vector.broadcast %cst_90 : f32 to vector<16x64xf32>
    %106 = arith.mulf %102, %105 : vector<16x64xf32>
    %107 = math.absf %106 : vector<16x64xf32>
    %cst_91 = arith.constant 0.327591091 : f32
    %108 = vector.broadcast %cst_91 : f32 to vector<16x64xf32>
    %109 = arith.mulf %108, %107 : vector<16x64xf32>
    %cst_92 = arith.constant 1.000000e+00 : f32
    %110 = vector.broadcast %cst_92 : f32 to vector<16x64xf32>
    %111 = arith.addf %110, %109 : vector<16x64xf32>
    %cst_93 = arith.constant 1.000000e+00 : f32
    %112 = vector.broadcast %cst_93 : f32 to vector<16x64xf32>
    %113 = arith.divf %112, %111 : vector<16x64xf32>
    %cst_94 = arith.constant 1.06140542 : f32
    %114 = vector.broadcast %cst_94 : f32 to vector<16x64xf32>
    %115 = arith.mulf %113, %114 : vector<16x64xf32>
    %cst_95 = arith.constant -1.45315206 : f32
    %116 = vector.broadcast %cst_95 : f32 to vector<16x64xf32>
    %117 = arith.addf %116, %115 : vector<16x64xf32>
    %118 = arith.mulf %113, %117 : vector<16x64xf32>
    %cst_96 = arith.constant 1.42141378 : f32
    %119 = vector.broadcast %cst_96 : f32 to vector<16x64xf32>
    %120 = arith.addf %119, %118 : vector<16x64xf32>
    %121 = arith.mulf %113, %120 : vector<16x64xf32>
    %cst_97 = arith.constant -0.284496725 : f32
    %122 = vector.broadcast %cst_97 : f32 to vector<16x64xf32>
    %123 = arith.addf %122, %121 : vector<16x64xf32>
    %124 = arith.mulf %113, %123 : vector<16x64xf32>
    %cst_98 = arith.constant 0.254829586 : f32
    %125 = vector.broadcast %cst_98 : f32 to vector<16x64xf32>
    %126 = arith.addf %125, %124 : vector<16x64xf32>
    %127 = arith.mulf %113, %126 : vector<16x64xf32>
    %cst_99 = arith.constant 0.000000e+00 : f32
    %128 = vector.broadcast %cst_99 : f32 to vector<16x64xf32>
    %129 = arith.subf %128, %107 : vector<16x64xf32>
    %130 = arith.mulf %129, %107 : vector<16x64xf32>
    %131 = math.exp %130 : vector<16x64xf32>
    %132 = arith.mulf %127, %131 : vector<16x64xf32>
    %cst_100 = arith.constant 1.000000e+00 : f32
    %133 = vector.broadcast %cst_100 : f32 to vector<16x64xf32>
    %134 = arith.subf %133, %132 : vector<16x64xf32>
    %cst_101 = arith.constant 0.000000e+00 : f32
    %135 = vector.broadcast %cst_101 : f32 to vector<16x64xf32>
    %136 = arith.cmpf oge, %106, %135 : vector<16x64xf32>
    %cst_102 = arith.constant 0.000000e+00 : f32
    %137 = vector.broadcast %cst_102 : f32 to vector<16x64xf32>
    %138 = arith.subf %137, %134 : vector<16x64xf32>
    %139 = arith.select %136, %134, %138 : vector<16x64xi1>, vector<16x64xf32>
    %cst_103 = arith.constant 1.000000e+00 : f32
    %140 = vector.broadcast %cst_103 : f32 to vector<16x64xf32>
    %141 = arith.addf %140, %139 : vector<16x64xf32>
    %142 = arith.mulf %104, %141 : vector<16x64xf32>
    %c0_104 = arith.constant 0 : index
    %c0_105 = arith.constant 0 : index
    %c0_106 = arith.constant 0 : index
    %143 = vector.load %arg5[%c0_104, %c0_105, %c0_106] : memref<4x64x128xf32, #tpu.memory_space<vmem>>, vector<1x64x128xf32>
    %144 = vector.shape_cast %143 : vector<1x64x128xf32> to vector<64x128xf32>
    %cst_107 = arith.constant dense<0.000000e+00> : vector<16x128xf32>
    %145 = tpu.matmul %142, %144, %cst_107 {dimension_numbers = #tpu.dot_dimension_numbers<[1], [0], [0], [1], [0, 0, 1, 1], [], []>} : vector<16x64xf32>, vector<64x128xf32>, vector<16x128xf32> -> vector<16x128xf32>
    %c0_108 = arith.constant 0 : index
    %c0_109 = arith.constant 0 : index
    %c0_110 = arith.constant 0 : index
    %146 = vector.load %arg6[%c0_108, %c0_109, %c0_110] : memref<4x1x128xf32, #tpu.memory_space<vmem>>, vector<1x1x128xf32>
    %147 = vector.shape_cast %146 : vector<1x1x128xf32> to vector<1x128xf32>
    %148 = vector.broadcast %147 : vector<1x128xf32> to vector<16x128xf32>
    %149 = arith.addf %145, %148 : vector<16x128xf32>
    %150 = vector.extract_strided_slice %149 {offsets = [0, 0], sizes = [16, 64], strides = [1, 1]} : vector<16x128xf32> to vector<16x64xf32>
    %151 = vector.extract_strided_slice %149 {offsets = [0, 64], sizes = [16, 64], strides = [1, 1]} : vector<16x128xf32> to vector<16x64xf32>
    %152 = arith.negf %151 : vector<16x64xf32>
    %153 = math.exp %152 : vector<16x64xf32>
    %cst_111 = arith.constant 1.000000e+00 : f32
    %154 = vector.broadcast %cst_111 : f32 to vector<16x64xf32>
    %155 = arith.addf %154, %153 : vector<16x64xf32>
    %156 = arith.divf %154, %155 : vector<16x64xf32>
    %157 = arith.mulf %150, %156 : vector<16x64xf32>
    %158 = arith.addf %157, %6 : vector<16x64xf32>
    %cst_112 = arith.constant dense<0.000000e+00> : vector<16xf32>
    %159 = vector.multi_reduction <add>, %158, %cst_112 [1] : vector<16x64xf32> to vector<16xf32>
    %160 = vector.shape_cast %159 : vector<16xf32> to vector<16x1xf32>
    %cst_113 = arith.constant 6.400000e+01 : f32
    %161 = vector.broadcast %cst_113 : f32 to vector<16x1xf32>
    %162 = arith.divf %160, %161 : vector<16x1xf32>
    %163 = arith.mulf %158, %158 : vector<16x64xf32>
    %cst_114 = arith.constant dense<0.000000e+00> : vector<16xf32>
    %164 = vector.multi_reduction <add>, %163, %cst_114 [1] : vector<16x64xf32> to vector<16xf32>
    %165 = vector.shape_cast %164 : vector<16xf32> to vector<16x1xf32>
    %cst_115 = arith.constant 6.400000e+01 : f32
    %166 = vector.broadcast %cst_115 : f32 to vector<16x1xf32>
    %167 = arith.divf %165, %166 : vector<16x1xf32>
    %168 = arith.mulf %162, %162 : vector<16x1xf32>
    %169 = arith.subf %167, %168 : vector<16x1xf32>
    %170 = vector.broadcast %162 : vector<16x1xf32> to vector<16x64xf32>
    %171 = arith.subf %158, %170 : vector<16x64xf32>
    %cst_116 = arith.constant 9.99999974E-6 : f32
    %172 = vector.broadcast %cst_116 : f32 to vector<16x1xf32>
    %173 = arith.addf %169, %172 : vector<16x1xf32>
    %174 = math.rsqrt %173 : vector<16x1xf32>
    %175 = vector.broadcast %174 : vector<16x1xf32> to vector<16x64xf32>
    %176 = arith.mulf %171, %175 : vector<16x64xf32>
    %c0_117 = arith.constant 0 : index
    %c0_118 = arith.constant 0 : index
    %c0_119 = arith.constant 0 : index
    %177 = vector.load %arg7[%c0_117, %c0_118, %c0_119] : memref<4x1x64xf32, #tpu.memory_space<vmem>>, vector<1x1x64xf32>
    %178 = vector.shape_cast %177 : vector<1x1x64xf32> to vector<1x64xf32>
    %179 = vector.broadcast %178 : vector<1x64xf32> to vector<16x64xf32>
    %180 = arith.mulf %176, %179 : vector<16x64xf32>
    %c0_120 = arith.constant 0 : index
    %c0_121 = arith.constant 0 : index
    %c0_122 = arith.constant 0 : index
    %181 = vector.load %arg8[%c0_120, %c0_121, %c0_122] : memref<4x1x64xf32, #tpu.memory_space<vmem>>, vector<1x1x64xf32>
    %182 = vector.shape_cast %181 : vector<1x1x64xf32> to vector<1x64xf32>
    %183 = vector.broadcast %182 : vector<1x64xf32> to vector<16x64xf32>
    %184 = arith.addf %180, %183 : vector<16x64xf32>
    %c0_123 = arith.constant 0 : index
    %c0_124 = arith.constant 0 : index
    %185 = vector.load %arg12[%c0_123, %c0_124] : memref<16x64xf32, #tpu.memory_space<vmem>>, vector<16x64xf32>
    tpu.vector_store %arg12[%c0_123, %c0_124], %184 {strides = array<i32>} : memref<16x64xf32, #tpu.memory_space<vmem>>, vector<16x64xf32>,
    %c1_125 = arith.constant 1 : index
    %c0_126 = arith.constant 0 : index
    %c0_127 = arith.constant 0 : index
    %c0_128 = arith.constant 0 : index
    %186 = vector.load %arg4[%c1_125, %c0_126, %c0_127, %c0_128] : memref<4x16x16x64xf32, #tpu.memory_space<vmem>>, vector<1x1x16x64xf32>
    %187 = vector.shape_cast %186 : vector<1x1x16x64xf32> to vector<16x64xf32>
    %c0_129 = arith.constant 0 : index
    %c0_130 = arith.constant 0 : index
    %188 = vector.load %arg12[%c0_129, %c0_130] : memref<16x64xf32, #tpu.memory_space<vmem>>, vector<1x64xf32>
    %189 = vector.broadcast %188 : vector<1x64xf32> to vector<16x64xf32>
    %190 = arith.mulf %187, %189 : vector<16x64xf32>
    %c1_131 = arith.constant 1 : index
    %c1_132 = arith.constant 1 : index
    %c0_133 = arith.constant 0 : index
    %c0_134 = arith.constant 0 : index
    %191 = vector.load %arg4[%c1_131, %c1_132, %c0_133, %c0_134] : memref<4x16x16x64xf32, #tpu.memory_space<vmem>>, vector<1x1x16x64xf32>
    %192 = vector.shape_cast %191 : vector<1x1x16x64xf32> to vector<16x64xf32>
    %c1_135 = arith.constant 1 : index
    %c0_136 = arith.constant 0 : index
    %193 = vector.load %arg12[%c1_135, %c0_136] : memref<16x64xf32, #tpu.memory_space<vmem>>, vector<1x64xf32>
    %194 = vector.broadcast %193 : vector<1x64xf32> to vector<16x64xf32>
    %195 = arith.mulf %192, %194 : vector<16x64xf32>
    %c1_137 = arith.constant 1 : index
    %c2_138 = arith.constant 2 : index
    %c0_139 = arith.constant 0 : index
    %c0_140 = arith.constant 0 : index
    %196 = vector.load %arg4[%c1_137, %c2_138, %c0_139, %c0_140] : memref<4x16x16x64xf32, #tpu.memory_space<vmem>>, vector<1x1x16x64xf32>
    %197 = vector.shape_cast %196 : vector<1x1x16x64xf32> to vector<16x64xf32>
    %c2_141 = arith.constant 2 : index
    %c0_142 = arith.constant 0 : index
    %198 = vector.load %arg12[%c2_141, %c0_142] : memref<16x64xf32, #tpu.memory_space<vmem>>, vector<1x64xf32>
    %199 = vector.broadcast %198 : vector<1x64xf32> to vector<16x64xf32>
    %200 = arith.mulf %197, %199 : vector<16x64xf32>
    %c1_143 = arith.constant 1 : index
    %c3_144 = arith.constant 3 : index
    %c0_145 = arith.constant 0 : index
    %c0_146 = arith.constant 0 : index
    %201 = vector.load %arg4[%c1_143, %c3_144, %c0_145, %c0_146] : memref<4x16x16x64xf32, #tpu.memory_space<vmem>>, vector<1x1x16x64xf32>
    %202 = vector.shape_cast %201 : vector<1x1x16x64xf32> to vector<16x64xf32>
    %c3_147 = arith.constant 3 : index
    %c0_148 = arith.constant 0 : index
    %203 = vector.load %arg12[%c3_147, %c0_148] : memref<16x64xf32, #tpu.memory_space<vmem>>, vector<1x64xf32>
    %204 = vector.broadcast %203 : vector<1x64xf32> to vector<16x64xf32>
    %205 = arith.mulf %202, %204 : vector<16x64xf32>
    %c1_149 = arith.constant 1 : index
    %c4_150 = arith.constant 4 : index
    %c0_151 = arith.constant 0 : index
    %c0_152 = arith.constant 0 : index
    %206 = vector.load %arg4[%c1_149, %c4_150, %c0_151, %c0_152] : memref<4x16x16x64xf32, #tpu.memory_space<vmem>>, vector<1x1x16x64xf32>
    %207 = vector.shape_cast %206 : vector<1x1x16x64xf32> to vector<16x64xf32>
    %c4_153 = arith.constant 4 : index
    %c0_154 = arith.constant 0 : index
    %208 = vector.load %arg12[%c4_153, %c0_154] : memref<16x64xf32, #tpu.memory_space<vmem>>, vector<1x64xf32>
    %209 = vector.broadcast %208 : vector<1x64xf32> to vector<16x64xf32>
    %210 = arith.mulf %207, %209 : vector<16x64xf32>
    %211 = arith.addf %190, %210 : vector<16x64xf32>
    %c1_155 = arith.constant 1 : index
    %c5_156 = arith.constant 5 : index
    %c0_157 = arith.constant 0 : index
    %c0_158 = arith.constant 0 : index
    %212 = vector.load %arg4[%c1_155, %c5_156, %c0_157, %c0_158] : memref<4x16x16x64xf32, #tpu.memory_space<vmem>>, vector<1x1x16x64xf32>
    %213 = vector.shape_cast %212 : vector<1x1x16x64xf32> to vector<16x64xf32>
    %c5_159 = arith.constant 5 : index
    %c0_160 = arith.constant 0 : index
    %214 = vector.load %arg12[%c5_159, %c0_160] : memref<16x64xf32, #tpu.memory_space<vmem>>, vector<1x64xf32>
    %215 = vector.broadcast %214 : vector<1x64xf32> to vector<16x64xf32>
    %216 = arith.mulf %213, %215 : vector<16x64xf32>
    %217 = arith.addf %195, %216 : vector<16x64xf32>
    %c1_161 = arith.constant 1 : index
    %c6_162 = arith.constant 6 : index
    %c0_163 = arith.constant 0 : index
    %c0_164 = arith.constant 0 : index
    %218 = vector.load %arg4[%c1_161, %c6_162, %c0_163, %c0_164] : memref<4x16x16x64xf32, #tpu.memory_space<vmem>>, vector<1x1x16x64xf32>
    %219 = vector.shape_cast %218 : vector<1x1x16x64xf32> to vector<16x64xf32>
    %c6_165 = arith.constant 6 : index
    %c0_166 = arith.constant 0 : index
    %220 = vector.load %arg12[%c6_165, %c0_166] : memref<16x64xf32, #tpu.memory_space<vmem>>, vector<1x64xf32>
    %221 = vector.broadcast %220 : vector<1x64xf32> to vector<16x64xf32>
    %222 = arith.mulf %219, %221 : vector<16x64xf32>
    %223 = arith.addf %200, %222 : vector<16x64xf32>
    %c1_167 = arith.constant 1 : index
    %c7_168 = arith.constant 7 : index
    %c0_169 = arith.constant 0 : index
    %c0_170 = arith.constant 0 : index
    %224 = vector.load %arg4[%c1_167, %c7_168, %c0_169, %c0_170] : memref<4x16x16x64xf32, #tpu.memory_space<vmem>>, vector<1x1x16x64xf32>
    %225 = vector.shape_cast %224 : vector<1x1x16x64xf32> to vector<16x64xf32>
    %c7_171 = arith.constant 7 : index
    %c0_172 = arith.constant 0 : index
    %226 = vector.load %arg12[%c7_171, %c0_172] : memref<16x64xf32, #tpu.memory_space<vmem>>, vector<1x64xf32>
    %227 = vector.broadcast %226 : vector<1x64xf32> to vector<16x64xf32>
    %228 = arith.mulf %225, %227 : vector<16x64xf32>
    %229 = arith.addf %205, %228 : vector<16x64xf32>
    %c1_173 = arith.constant 1 : index
    %c8_174 = arith.constant 8 : index
    %c0_175 = arith.constant 0 : index
    %c0_176 = arith.constant 0 : index
    %230 = vector.load %arg4[%c1_173, %c8_174, %c0_175, %c0_176] : memref<4x16x16x64xf32, #tpu.memory_space<vmem>>, vector<1x1x16x64xf32>
    %231 = vector.shape_cast %230 : vector<1x1x16x64xf32> to vector<16x64xf32>
    %c8_177 = arith.constant 8 : index
    %c0_178 = arith.constant 0 : index
    %232 = vector.load %arg12[%c8_177, %c0_178] : memref<16x64xf32, #tpu.memory_space<vmem>>, vector<1x64xf32>
    %233 = vector.broadcast %232 : vector<1x64xf32> to vector<16x64xf32>
    %234 = arith.mulf %231, %233 : vector<16x64xf32>
    %235 = arith.addf %211, %234 : vector<16x64xf32>
    %c1_179 = arith.constant 1 : index
    %c9_180 = arith.constant 9 : index
    %c0_181 = arith.constant 0 : index
    %c0_182 = arith.constant 0 : index
    %236 = vector.load %arg4[%c1_179, %c9_180, %c0_181, %c0_182] : memref<4x16x16x64xf32, #tpu.memory_space<vmem>>, vector<1x1x16x64xf32>
    %237 = vector.shape_cast %236 : vector<1x1x16x64xf32> to vector<16x64xf32>
    %c9_183 = arith.constant 9 : index
    %c0_184 = arith.constant 0 : index
    %238 = vector.load %arg12[%c9_183, %c0_184] : memref<16x64xf32, #tpu.memory_space<vmem>>, vector<1x64xf32>
    %239 = vector.broadcast %238 : vector<1x64xf32> to vector<16x64xf32>
    %240 = arith.mulf %237, %239 : vector<16x64xf32>
    %241 = arith.addf %217, %240 : vector<16x64xf32>
    %c1_185 = arith.constant 1 : index
    %c10_186 = arith.constant 10 : index
    %c0_187 = arith.constant 0 : index
    %c0_188 = arith.constant 0 : index
    %242 = vector.load %arg4[%c1_185, %c10_186, %c0_187, %c0_188] : memref<4x16x16x64xf32, #tpu.memory_space<vmem>>, vector<1x1x16x64xf32>
    %243 = vector.shape_cast %242 : vector<1x1x16x64xf32> to vector<16x64xf32>
    %c10_189 = arith.constant 10 : index
    %c0_190 = arith.constant 0 : index
    %244 = vector.load %arg12[%c10_189, %c0_190] : memref<16x64xf32, #tpu.memory_space<vmem>>, vector<1x64xf32>
    %245 = vector.broadcast %244 : vector<1x64xf32> to vector<16x64xf32>
    %246 = arith.mulf %243, %245 : vector<16x64xf32>
    %247 = arith.addf %223, %246 : vector<16x64xf32>
    %c1_191 = arith.constant 1 : index
    %c11_192 = arith.constant 11 : index
    %c0_193 = arith.constant 0 : index
    %c0_194 = arith.constant 0 : index
    %248 = vector.load %arg4[%c1_191, %c11_192, %c0_193, %c0_194] : memref<4x16x16x64xf32, #tpu.memory_space<vmem>>, vector<1x1x16x64xf32>
    %249 = vector.shape_cast %248 : vector<1x1x16x64xf32> to vector<16x64xf32>
    %c11_195 = arith.constant 11 : index
    %c0_196 = arith.constant 0 : index
    %250 = vector.load %arg12[%c11_195, %c0_196] : memref<16x64xf32, #tpu.memory_space<vmem>>, vector<1x64xf32>
    %251 = vector.broadcast %250 : vector<1x64xf32> to vector<16x64xf32>
    %252 = arith.mulf %249, %251 : vector<16x64xf32>
    %253 = arith.addf %229, %252 : vector<16x64xf32>
    %c1_197 = arith.constant 1 : index
    %c12_198 = arith.constant 12 : index
    %c0_199 = arith.constant 0 : index
    %c0_200 = arith.constant 0 : index
    %254 = vector.load %arg4[%c1_197, %c12_198, %c0_199, %c0_200] : memref<4x16x16x64xf32, #tpu.memory_space<vmem>>, vector<1x1x16x64xf32>
    %255 = vector.shape_cast %254 : vector<1x1x16x64xf32> to vector<16x64xf32>
    %c12_201 = arith.constant 12 : index
    %c0_202 = arith.constant 0 : index
    %256 = vector.load %arg12[%c12_201, %c0_202] : memref<16x64xf32, #tpu.memory_space<vmem>>, vector<1x64xf32>
    %257 = vector.broadcast %256 : vector<1x64xf32> to vector<16x64xf32>
    %258 = arith.mulf %255, %257 : vector<16x64xf32>
    %259 = arith.addf %235, %258 : vector<16x64xf32>
    %c1_203 = arith.constant 1 : index
    %c13_204 = arith.constant 13 : index
    %c0_205 = arith.constant 0 : index
    %c0_206 = arith.constant 0 : index
    %260 = vector.load %arg4[%c1_203, %c13_204, %c0_205, %c0_206] : memref<4x16x16x64xf32, #tpu.memory_space<vmem>>, vector<1x1x16x64xf32>
    %261 = vector.shape_cast %260 : vector<1x1x16x64xf32> to vector<16x64xf32>
    %c13_207 = arith.constant 13 : index
    %c0_208 = arith.constant 0 : index
    %262 = vector.load %arg12[%c13_207, %c0_208] : memref<16x64xf32, #tpu.memory_space<vmem>>, vector<1x64xf32>
    %263 = vector.broadcast %262 : vector<1x64xf32> to vector<16x64xf32>
    %264 = arith.mulf %261, %263 : vector<16x64xf32>
    %265 = arith.addf %241, %264 : vector<16x64xf32>
    %c1_209 = arith.constant 1 : index
    %c14_210 = arith.constant 14 : index
    %c0_211 = arith.constant 0 : index
    %c0_212 = arith.constant 0 : index
    %266 = vector.load %arg4[%c1_209, %c14_210, %c0_211, %c0_212] : memref<4x16x16x64xf32, #tpu.memory_space<vmem>>, vector<1x1x16x64xf32>
    %267 = vector.shape_cast %266 : vector<1x1x16x64xf32> to vector<16x64xf32>
    %c14_213 = arith.constant 14 : index
    %c0_214 = arith.constant 0 : index
    %268 = vector.load %arg12[%c14_213, %c0_214] : memref<16x64xf32, #tpu.memory_space<vmem>>, vector<1x64xf32>
    %269 = vector.broadcast %268 : vector<1x64xf32> to vector<16x64xf32>
    %270 = arith.mulf %267, %269 : vector<16x64xf32>
    %271 = arith.addf %247, %270 : vector<16x64xf32>
    %c1_215 = arith.constant 1 : index
    %c15_216 = arith.constant 15 : index
    %c0_217 = arith.constant 0 : index
    %c0_218 = arith.constant 0 : index
    %272 = vector.load %arg4[%c1_215, %c15_216, %c0_217, %c0_218] : memref<4x16x16x64xf32, #tpu.memory_space<vmem>>, vector<1x1x16x64xf32>
    %273 = vector.shape_cast %272 : vector<1x1x16x64xf32> to vector<16x64xf32>
    %c15_219 = arith.constant 15 : index
    %c0_220 = arith.constant 0 : index
    %274 = vector.load %arg12[%c15_219, %c0_220] : memref<16x64xf32, #tpu.memory_space<vmem>>, vector<1x64xf32>
    %275 = vector.broadcast %274 : vector<1x64xf32> to vector<16x64xf32>
    %276 = arith.mulf %273, %275 : vector<16x64xf32>
    %277 = arith.addf %253, %276 : vector<16x64xf32>
    %278 = arith.addf %259, %265 : vector<16x64xf32>
    %279 = arith.addf %271, %277 : vector<16x64xf32>
    %280 = arith.addf %278, %279 : vector<16x64xf32>
    %cst_221 = arith.constant 5.000000e-01 : f32
    %281 = vector.broadcast %cst_221 : f32 to vector<16x64xf32>
    %282 = arith.mulf %281, %280 : vector<16x64xf32>
    %cst_222 = arith.constant 0.707106769 : f32
    %283 = vector.broadcast %cst_222 : f32 to vector<16x64xf32>
    %284 = arith.mulf %280, %283 : vector<16x64xf32>
    %285 = math.absf %284 : vector<16x64xf32>
    %cst_223 = arith.constant 0.327591091 : f32
    %286 = vector.broadcast %cst_223 : f32 to vector<16x64xf32>
    %287 = arith.mulf %286, %285 : vector<16x64xf32>
    %cst_224 = arith.constant 1.000000e+00 : f32
    %288 = vector.broadcast %cst_224 : f32 to vector<16x64xf32>
    %289 = arith.addf %288, %287 : vector<16x64xf32>
    %cst_225 = arith.constant 1.000000e+00 : f32
    %290 = vector.broadcast %cst_225 : f32 to vector<16x64xf32>
    %291 = arith.divf %290, %289 : vector<16x64xf32>
    %cst_226 = arith.constant 1.06140542 : f32
    %292 = vector.broadcast %cst_226 : f32 to vector<16x64xf32>
    %293 = arith.mulf %291, %292 : vector<16x64xf32>
    %cst_227 = arith.constant -1.45315206 : f32
    %294 = vector.broadcast %cst_227 : f32 to vector<16x64xf32>
    %295 = arith.addf %294, %293 : vector<16x64xf32>
    %296 = arith.mulf %291, %295 : vector<16x64xf32>
    %cst_228 = arith.constant 1.42141378 : f32
    %297 = vector.broadcast %cst_228 : f32 to vector<16x64xf32>
    %298 = arith.addf %297, %296 : vector<16x64xf32>
    %299 = arith.mulf %291, %298 : vector<16x64xf32>
    %cst_229 = arith.constant -0.284496725 : f32
    %300 = vector.broadcast %cst_229 : f32 to vector<16x64xf32>
    %301 = arith.addf %300, %299 : vector<16x64xf32>
    %302 = arith.mulf %291, %301 : vector<16x64xf32>
    %cst_230 = arith.constant 0.254829586 : f32
    %303 = vector.broadcast %cst_230 : f32 to vector<16x64xf32>
    %304 = arith.addf %303, %302 : vector<16x64xf32>
    %305 = arith.mulf %291, %304 : vector<16x64xf32>
    %cst_231 = arith.constant 0.000000e+00 : f32
    %306 = vector.broadcast %cst_231 : f32 to vector<16x64xf32>
    %307 = arith.subf %306, %285 : vector<16x64xf32>
    %308 = arith.mulf %307, %285 : vector<16x64xf32>
    %309 = math.exp %308 : vector<16x64xf32>
    %310 = arith.mulf %305, %309 : vector<16x64xf32>
    %cst_232 = arith.constant 1.000000e+00 : f32
    %311 = vector.broadcast %cst_232 : f32 to vector<16x64xf32>
    %312 = arith.subf %311, %310 : vector<16x64xf32>
    %cst_233 = arith.constant 0.000000e+00 : f32
    %313 = vector.broadcast %cst_233 : f32 to vector<16x64xf32>
    %314 = arith.cmpf oge, %284, %313 : vector<16x64xf32>
    %cst_234 = arith.constant 0.000000e+00 : f32
    %315 = vector.broadcast %cst_234 : f32 to vector<16x64xf32>
    %316 = arith.subf %315, %312 : vector<16x64xf32>
    %317 = arith.select %314, %312, %316 : vector<16x64xi1>, vector<16x64xf32>
    %cst_235 = arith.constant 1.000000e+00 : f32
    %318 = vector.broadcast %cst_235 : f32 to vector<16x64xf32>
    %319 = arith.addf %318, %317 : vector<16x64xf32>
    %320 = arith.mulf %282, %319 : vector<16x64xf32>
    %c1_236 = arith.constant 1 : index
    %c0_237 = arith.constant 0 : index
    %c0_238 = arith.constant 0 : index
    %321 = vector.load %arg5[%c1_236, %c0_237, %c0_238] : memref<4x64x128xf32, #tpu.memory_space<vmem>>, vector<1x64x128xf32>
    %322 = vector.shape_cast %321 : vector<1x64x128xf32> to vector<64x128xf32>
    %cst_239 = arith.constant dense<0.000000e+00> : vector<16x128xf32>
    %323 = tpu.matmul %320, %322, %cst_239 {dimension_numbers = #tpu.dot_dimension_numbers<[1], [0], [0], [1], [0, 0, 1, 1], [], []>} : vector<16x64xf32>, vector<64x128xf32>, vector<16x128xf32> -> vector<16x128xf32>
    %c1_240 = arith.constant 1 : index
    %c0_241 = arith.constant 0 : index
    %c0_242 = arith.constant 0 : index
    %324 = vector.load %arg6[%c1_240, %c0_241, %c0_242] : memref<4x1x128xf32, #tpu.memory_space<vmem>>, vector<1x1x128xf32>
    %325 = vector.shape_cast %324 : vector<1x1x128xf32> to vector<1x128xf32>
    %326 = vector.broadcast %325 : vector<1x128xf32> to vector<16x128xf32>
    %327 = arith.addf %323, %326 : vector<16x128xf32>
    %328 = vector.extract_strided_slice %327 {offsets = [0, 0], sizes = [16, 64], strides = [1, 1]} : vector<16x128xf32> to vector<16x64xf32>
    %329 = vector.extract_strided_slice %327 {offsets = [0, 64], sizes = [16, 64], strides = [1, 1]} : vector<16x128xf32> to vector<16x64xf32>
    %330 = arith.negf %329 : vector<16x64xf32>
    %331 = math.exp %330 : vector<16x64xf32>
    %cst_243 = arith.constant 1.000000e+00 : f32
    %332 = vector.broadcast %cst_243 : f32 to vector<16x64xf32>
    %333 = arith.addf %332, %331 : vector<16x64xf32>
    %334 = arith.divf %332, %333 : vector<16x64xf32>
    %335 = arith.mulf %328, %334 : vector<16x64xf32>
    %336 = arith.addf %335, %184 : vector<16x64xf32>
    %cst_244 = arith.constant dense<0.000000e+00> : vector<16xf32>
    %337 = vector.multi_reduction <add>, %336, %cst_244 [1] : vector<16x64xf32> to vector<16xf32>
    %338 = vector.shape_cast %337 : vector<16xf32> to vector<16x1xf32>
    %cst_245 = arith.constant 6.400000e+01 : f32
    %339 = vector.broadcast %cst_245 : f32 to vector<16x1xf32>
    %340 = arith.divf %338, %339 : vector<16x1xf32>
    %341 = arith.mulf %336, %336 : vector<16x64xf32>
    %cst_246 = arith.constant dense<0.000000e+00> : vector<16xf32>
    %342 = vector.multi_reduction <add>, %341, %cst_246 [1] : vector<16x64xf32> to vector<16xf32>
    %343 = vector.shape_cast %342 : vector<16xf32> to vector<16x1xf32>
    %cst_247 = arith.constant 6.400000e+01 : f32
    %344 = vector.broadcast %cst_247 : f32 to vector<16x1xf32>
    %345 = arith.divf %343, %344 : vector<16x1xf32>
    %346 = arith.mulf %340, %340 : vector<16x1xf32>
    %347 = arith.subf %345, %346 : vector<16x1xf32>
    %348 = vector.broadcast %340 : vector<16x1xf32> to vector<16x64xf32>
    %349 = arith.subf %336, %348 : vector<16x64xf32>
    %cst_248 = arith.constant 9.99999974E-6 : f32
    %350 = vector.broadcast %cst_248 : f32 to vector<16x1xf32>
    %351 = arith.addf %347, %350 : vector<16x1xf32>
    %352 = math.rsqrt %351 : vector<16x1xf32>
    %353 = vector.broadcast %352 : vector<16x1xf32> to vector<16x64xf32>
    %354 = arith.mulf %349, %353 : vector<16x64xf32>
    %c1_249 = arith.constant 1 : index
    %c0_250 = arith.constant 0 : index
    %c0_251 = arith.constant 0 : index
    %355 = vector.load %arg7[%c1_249, %c0_250, %c0_251] : memref<4x1x64xf32, #tpu.memory_space<vmem>>, vector<1x1x64xf32>
    %356 = vector.shape_cast %355 : vector<1x1x64xf32> to vector<1x64xf32>
    %357 = vector.broadcast %356 : vector<1x64xf32> to vector<16x64xf32>
    %358 = arith.mulf %354, %357 : vector<16x64xf32>
    %c1_252 = arith.constant 1 : index
    %c0_253 = arith.constant 0 : index
    %c0_254 = arith.constant 0 : index
    %359 = vector.load %arg8[%c1_252, %c0_253, %c0_254] : memref<4x1x64xf32, #tpu.memory_space<vmem>>, vector<1x1x64xf32>
    %360 = vector.shape_cast %359 : vector<1x1x64xf32> to vector<1x64xf32>
    %361 = vector.broadcast %360 : vector<1x64xf32> to vector<16x64xf32>
    %362 = arith.addf %358, %361 : vector<16x64xf32>
    %c0_255 = arith.constant 0 : index
    %c0_256 = arith.constant 0 : index
    %363 = vector.load %arg12[%c0_255, %c0_256] : memref<16x64xf32, #tpu.memory_space<vmem>>, vector<16x64xf32>
    tpu.vector_store %arg12[%c0_255, %c0_256], %362 {strides = array<i32>} : memref<16x64xf32, #tpu.memory_space<vmem>>, vector<16x64xf32>,
    %c2_257 = arith.constant 2 : index
    %c0_258 = arith.constant 0 : index
    %c0_259 = arith.constant 0 : index
    %c0_260 = arith.constant 0 : index
    %364 = vector.load %arg4[%c2_257, %c0_258, %c0_259, %c0_260] : memref<4x16x16x64xf32, #tpu.memory_space<vmem>>, vector<1x1x16x64xf32>
    %365 = vector.shape_cast %364 : vector<1x1x16x64xf32> to vector<16x64xf32>
    %c0_261 = arith.constant 0 : index
    %c0_262 = arith.constant 0 : index
    %366 = vector.load %arg12[%c0_261, %c0_262] : memref<16x64xf32, #tpu.memory_space<vmem>>, vector<1x64xf32>
    %367 = vector.broadcast %366 : vector<1x64xf32> to vector<16x64xf32>
    %368 = arith.mulf %365, %367 : vector<16x64xf32>
    %c2_263 = arith.constant 2 : index
    %c1_264 = arith.constant 1 : index
    %c0_265 = arith.constant 0 : index
    %c0_266 = arith.constant 0 : index
    %369 = vector.load %arg4[%c2_263, %c1_264, %c0_265, %c0_266] : memref<4x16x16x64xf32, #tpu.memory_space<vmem>>, vector<1x1x16x64xf32>
    %370 = vector.shape_cast %369 : vector<1x1x16x64xf32> to vector<16x64xf32>
    %c1_267 = arith.constant 1 : index
    %c0_268 = arith.constant 0 : index
    %371 = vector.load %arg12[%c1_267, %c0_268] : memref<16x64xf32, #tpu.memory_space<vmem>>, vector<1x64xf32>
    %372 = vector.broadcast %371 : vector<1x64xf32> to vector<16x64xf32>
    %373 = arith.mulf %370, %372 : vector<16x64xf32>
    %c2_269 = arith.constant 2 : index
    %c2_270 = arith.constant 2 : index
    %c0_271 = arith.constant 0 : index
    %c0_272 = arith.constant 0 : index
    %374 = vector.load %arg4[%c2_269, %c2_270, %c0_271, %c0_272] : memref<4x16x16x64xf32, #tpu.memory_space<vmem>>, vector<1x1x16x64xf32>
    %375 = vector.shape_cast %374 : vector<1x1x16x64xf32> to vector<16x64xf32>
    %c2_273 = arith.constant 2 : index
    %c0_274 = arith.constant 0 : index
    %376 = vector.load %arg12[%c2_273, %c0_274] : memref<16x64xf32, #tpu.memory_space<vmem>>, vector<1x64xf32>
    %377 = vector.broadcast %376 : vector<1x64xf32> to vector<16x64xf32>
    %378 = arith.mulf %375, %377 : vector<16x64xf32>
    %c2_275 = arith.constant 2 : index
    %c3_276 = arith.constant 3 : index
    %c0_277 = arith.constant 0 : index
    %c0_278 = arith.constant 0 : index
    %379 = vector.load %arg4[%c2_275, %c3_276, %c0_277, %c0_278] : memref<4x16x16x64xf32, #tpu.memory_space<vmem>>, vector<1x1x16x64xf32>
    %380 = vector.shape_cast %379 : vector<1x1x16x64xf32> to vector<16x64xf32>
    %c3_279 = arith.constant 3 : index
    %c0_280 = arith.constant 0 : index
    %381 = vector.load %arg12[%c3_279, %c0_280] : memref<16x64xf32, #tpu.memory_space<vmem>>, vector<1x64xf32>
    %382 = vector.broadcast %381 : vector<1x64xf32> to vector<16x64xf32>
    %383 = arith.mulf %380, %382 : vector<16x64xf32>
    %c2_281 = arith.constant 2 : index
    %c4_282 = arith.constant 4 : index
    %c0_283 = arith.constant 0 : index
    %c0_284 = arith.constant 0 : index
    %384 = vector.load %arg4[%c2_281, %c4_282, %c0_283, %c0_284] : memref<4x16x16x64xf32, #tpu.memory_space<vmem>>, vector<1x1x16x64xf32>
    %385 = vector.shape_cast %384 : vector<1x1x16x64xf32> to vector<16x64xf32>
    %c4_285 = arith.constant 4 : index
    %c0_286 = arith.constant 0 : index
    %386 = vector.load %arg12[%c4_285, %c0_286] : memref<16x64xf32, #tpu.memory_space<vmem>>, vector<1x64xf32>
    %387 = vector.broadcast %386 : vector<1x64xf32> to vector<16x64xf32>
    %388 = arith.mulf %385, %387 : vector<16x64xf32>
    %389 = arith.addf %368, %388 : vector<16x64xf32>
    %c2_287 = arith.constant 2 : index
    %c5_288 = arith.constant 5 : index
    %c0_289 = arith.constant 0 : index
    %c0_290 = arith.constant 0 : index
    %390 = vector.load %arg4[%c2_287, %c5_288, %c0_289, %c0_290] : memref<4x16x16x64xf32, #tpu.memory_space<vmem>>, vector<1x1x16x64xf32>
    %391 = vector.shape_cast %390 : vector<1x1x16x64xf32> to vector<16x64xf32>
    %c5_291 = arith.constant 5 : index
    %c0_292 = arith.constant 0 : index
    %392 = vector.load %arg12[%c5_291, %c0_292] : memref<16x64xf32, #tpu.memory_space<vmem>>, vector<1x64xf32>
    %393 = vector.broadcast %392 : vector<1x64xf32> to vector<16x64xf32>
    %394 = arith.mulf %391, %393 : vector<16x64xf32>
    %395 = arith.addf %373, %394 : vector<16x64xf32>
    %c2_293 = arith.constant 2 : index
    %c6_294 = arith.constant 6 : index
    %c0_295 = arith.constant 0 : index
    %c0_296 = arith.constant 0 : index
    %396 = vector.load %arg4[%c2_293, %c6_294, %c0_295, %c0_296] : memref<4x16x16x64xf32, #tpu.memory_space<vmem>>, vector<1x1x16x64xf32>
    %397 = vector.shape_cast %396 : vector<1x1x16x64xf32> to vector<16x64xf32>
    %c6_297 = arith.constant 6 : index
    %c0_298 = arith.constant 0 : index
    %398 = vector.load %arg12[%c6_297, %c0_298] : memref<16x64xf32, #tpu.memory_space<vmem>>, vector<1x64xf32>
    %399 = vector.broadcast %398 : vector<1x64xf32> to vector<16x64xf32>
    %400 = arith.mulf %397, %399 : vector<16x64xf32>
    %401 = arith.addf %378, %400 : vector<16x64xf32>
    %c2_299 = arith.constant 2 : index
    %c7_300 = arith.constant 7 : index
    %c0_301 = arith.constant 0 : index
    %c0_302 = arith.constant 0 : index
    %402 = vector.load %arg4[%c2_299, %c7_300, %c0_301, %c0_302] : memref<4x16x16x64xf32, #tpu.memory_space<vmem>>, vector<1x1x16x64xf32>
    %403 = vector.shape_cast %402 : vector<1x1x16x64xf32> to vector<16x64xf32>
    %c7_303 = arith.constant 7 : index
    %c0_304 = arith.constant 0 : index
    %404 = vector.load %arg12[%c7_303, %c0_304] : memref<16x64xf32, #tpu.memory_space<vmem>>, vector<1x64xf32>
    %405 = vector.broadcast %404 : vector<1x64xf32> to vector<16x64xf32>
    %406 = arith.mulf %403, %405 : vector<16x64xf32>
    %407 = arith.addf %383, %406 : vector<16x64xf32>
    %c2_305 = arith.constant 2 : index
    %c8_306 = arith.constant 8 : index
    %c0_307 = arith.constant 0 : index
    %c0_308 = arith.constant 0 : index
    %408 = vector.load %arg4[%c2_305, %c8_306, %c0_307, %c0_308] : memref<4x16x16x64xf32, #tpu.memory_space<vmem>>, vector<1x1x16x64xf32>
    %409 = vector.shape_cast %408 : vector<1x1x16x64xf32> to vector<16x64xf32>
    %c8_309 = arith.constant 8 : index
    %c0_310 = arith.constant 0 : index
    %410 = vector.load %arg12[%c8_309, %c0_310] : memref<16x64xf32, #tpu.memory_space<vmem>>, vector<1x64xf32>
    %411 = vector.broadcast %410 : vector<1x64xf32> to vector<16x64xf32>
    %412 = arith.mulf %409, %411 : vector<16x64xf32>
    %413 = arith.addf %389, %412 : vector<16x64xf32>
    %c2_311 = arith.constant 2 : index
    %c9_312 = arith.constant 9 : index
    %c0_313 = arith.constant 0 : index
    %c0_314 = arith.constant 0 : index
    %414 = vector.load %arg4[%c2_311, %c9_312, %c0_313, %c0_314] : memref<4x16x16x64xf32, #tpu.memory_space<vmem>>, vector<1x1x16x64xf32>
    %415 = vector.shape_cast %414 : vector<1x1x16x64xf32> to vector<16x64xf32>
    %c9_315 = arith.constant 9 : index
    %c0_316 = arith.constant 0 : index
    %416 = vector.load %arg12[%c9_315, %c0_316] : memref<16x64xf32, #tpu.memory_space<vmem>>, vector<1x64xf32>
    %417 = vector.broadcast %416 : vector<1x64xf32> to vector<16x64xf32>
    %418 = arith.mulf %415, %417 : vector<16x64xf32>
    %419 = arith.addf %395, %418 : vector<16x64xf32>
    %c2_317 = arith.constant 2 : index
    %c10_318 = arith.constant 10 : index
    %c0_319 = arith.constant 0 : index
    %c0_320 = arith.constant 0 : index
    %420 = vector.load %arg4[%c2_317, %c10_318, %c0_319, %c0_320] : memref<4x16x16x64xf32, #tpu.memory_space<vmem>>, vector<1x1x16x64xf32>
    %421 = vector.shape_cast %420 : vector<1x1x16x64xf32> to vector<16x64xf32>
    %c10_321 = arith.constant 10 : index
    %c0_322 = arith.constant 0 : index
    %422 = vector.load %arg12[%c10_321, %c0_322] : memref<16x64xf32, #tpu.memory_space<vmem>>, vector<1x64xf32>
    %423 = vector.broadcast %422 : vector<1x64xf32> to vector<16x64xf32>
    %424 = arith.mulf %421, %423 : vector<16x64xf32>
    %425 = arith.addf %401, %424 : vector<16x64xf32>
    %c2_323 = arith.constant 2 : index
    %c11_324 = arith.constant 11 : index
    %c0_325 = arith.constant 0 : index
    %c0_326 = arith.constant 0 : index
    %426 = vector.load %arg4[%c2_323, %c11_324, %c0_325, %c0_326] : memref<4x16x16x64xf32, #tpu.memory_space<vmem>>, vector<1x1x16x64xf32>
    %427 = vector.shape_cast %426 : vector<1x1x16x64xf32> to vector<16x64xf32>
    %c11_327 = arith.constant 11 : index
    %c0_328 = arith.constant 0 : index
    %428 = vector.load %arg12[%c11_327, %c0_328] : memref<16x64xf32, #tpu.memory_space<vmem>>, vector<1x64xf32>
    %429 = vector.broadcast %428 : vector<1x64xf32> to vector<16x64xf32>
    %430 = arith.mulf %427, %429 : vector<16x64xf32>
    %431 = arith.addf %407, %430 : vector<16x64xf32>
    %c2_329 = arith.constant 2 : index
    %c12_330 = arith.constant 12 : index
    %c0_331 = arith.constant 0 : index
    %c0_332 = arith.constant 0 : index
    %432 = vector.load %arg4[%c2_329, %c12_330, %c0_331, %c0_332] : memref<4x16x16x64xf32, #tpu.memory_space<vmem>>, vector<1x1x16x64xf32>
    %433 = vector.shape_cast %432 : vector<1x1x16x64xf32> to vector<16x64xf32>
    %c12_333 = arith.constant 12 : index
    %c0_334 = arith.constant 0 : index
    %434 = vector.load %arg12[%c12_333, %c0_334] : memref<16x64xf32, #tpu.memory_space<vmem>>, vector<1x64xf32>
    %435 = vector.broadcast %434 : vector<1x64xf32> to vector<16x64xf32>
    %436 = arith.mulf %433, %435 : vector<16x64xf32>
    %437 = arith.addf %413, %436 : vector<16x64xf32>
    %c2_335 = arith.constant 2 : index
    %c13_336 = arith.constant 13 : index
    %c0_337 = arith.constant 0 : index
    %c0_338 = arith.constant 0 : index
    %438 = vector.load %arg4[%c2_335, %c13_336, %c0_337, %c0_338] : memref<4x16x16x64xf32, #tpu.memory_space<vmem>>, vector<1x1x16x64xf32>
    %439 = vector.shape_cast %438 : vector<1x1x16x64xf32> to vector<16x64xf32>
    %c13_339 = arith.constant 13 : index
    %c0_340 = arith.constant 0 : index
    %440 = vector.load %arg12[%c13_339, %c0_340] : memref<16x64xf32, #tpu.memory_space<vmem>>, vector<1x64xf32>
    %441 = vector.broadcast %440 : vector<1x64xf32> to vector<16x64xf32>
    %442 = arith.mulf %439, %441 : vector<16x64xf32>
    %443 = arith.addf %419, %442 : vector<16x64xf32>
    %c2_341 = arith.constant 2 : index
    %c14_342 = arith.constant 14 : index
    %c0_343 = arith.constant 0 : index
    %c0_344 = arith.constant 0 : index
    %444 = vector.load %arg4[%c2_341, %c14_342, %c0_343, %c0_344] : memref<4x16x16x64xf32, #tpu.memory_space<vmem>>, vector<1x1x16x64xf32>
    %445 = vector.shape_cast %444 : vector<1x1x16x64xf32> to vector<16x64xf32>
    %c14_345 = arith.constant 14 : index
    %c0_346 = arith.constant 0 : index
    %446 = vector.load %arg12[%c14_345, %c0_346] : memref<16x64xf32, #tpu.memory_space<vmem>>, vector<1x64xf32>
    %447 = vector.broadcast %446 : vector<1x64xf32> to vector<16x64xf32>
    %448 = arith.mulf %445, %447 : vector<16x64xf32>
    %449 = arith.addf %425, %448 : vector<16x64xf32>
    %c2_347 = arith.constant 2 : index
    %c15_348 = arith.constant 15 : index
    %c0_349 = arith.constant 0 : index
    %c0_350 = arith.constant 0 : index
    %450 = vector.load %arg4[%c2_347, %c15_348, %c0_349, %c0_350] : memref<4x16x16x64xf32, #tpu.memory_space<vmem>>, vector<1x1x16x64xf32>
    %451 = vector.shape_cast %450 : vector<1x1x16x64xf32> to vector<16x64xf32>
    %c15_351 = arith.constant 15 : index
    %c0_352 = arith.constant 0 : index
    %452 = vector.load %arg12[%c15_351, %c0_352] : memref<16x64xf32, #tpu.memory_space<vmem>>, vector<1x64xf32>
    %453 = vector.broadcast %452 : vector<1x64xf32> to vector<16x64xf32>
    %454 = arith.mulf %451, %453 : vector<16x64xf32>
    %455 = arith.addf %431, %454 : vector<16x64xf32>
    %456 = arith.addf %437, %443 : vector<16x64xf32>
    %457 = arith.addf %449, %455 : vector<16x64xf32>
    %458 = arith.addf %456, %457 : vector<16x64xf32>
    %cst_353 = arith.constant 5.000000e-01 : f32
    %459 = vector.broadcast %cst_353 : f32 to vector<16x64xf32>
    %460 = arith.mulf %459, %458 : vector<16x64xf32>
    %cst_354 = arith.constant 0.707106769 : f32
    %461 = vector.broadcast %cst_354 : f32 to vector<16x64xf32>
    %462 = arith.mulf %458, %461 : vector<16x64xf32>
    %463 = math.absf %462 : vector<16x64xf32>
    %cst_355 = arith.constant 0.327591091 : f32
    %464 = vector.broadcast %cst_355 : f32 to vector<16x64xf32>
    %465 = arith.mulf %464, %463 : vector<16x64xf32>
    %cst_356 = arith.constant 1.000000e+00 : f32
    %466 = vector.broadcast %cst_356 : f32 to vector<16x64xf32>
    %467 = arith.addf %466, %465 : vector<16x64xf32>
    %cst_357 = arith.constant 1.000000e+00 : f32
    %468 = vector.broadcast %cst_357 : f32 to vector<16x64xf32>
    %469 = arith.divf %468, %467 : vector<16x64xf32>
    %cst_358 = arith.constant 1.06140542 : f32
    %470 = vector.broadcast %cst_358 : f32 to vector<16x64xf32>
    %471 = arith.mulf %469, %470 : vector<16x64xf32>
    %cst_359 = arith.constant -1.45315206 : f32
    %472 = vector.broadcast %cst_359 : f32 to vector<16x64xf32>
    %473 = arith.addf %472, %471 : vector<16x64xf32>
    %474 = arith.mulf %469, %473 : vector<16x64xf32>
    %cst_360 = arith.constant 1.42141378 : f32
    %475 = vector.broadcast %cst_360 : f32 to vector<16x64xf32>
    %476 = arith.addf %475, %474 : vector<16x64xf32>
    %477 = arith.mulf %469, %476 : vector<16x64xf32>
    %cst_361 = arith.constant -0.284496725 : f32
    %478 = vector.broadcast %cst_361 : f32 to vector<16x64xf32>
    %479 = arith.addf %478, %477 : vector<16x64xf32>
    %480 = arith.mulf %469, %479 : vector<16x64xf32>
    %cst_362 = arith.constant 0.254829586 : f32
    %481 = vector.broadcast %cst_362 : f32 to vector<16x64xf32>
    %482 = arith.addf %481, %480 : vector<16x64xf32>
    %483 = arith.mulf %469, %482 : vector<16x64xf32>
    %cst_363 = arith.constant 0.000000e+00 : f32
    %484 = vector.broadcast %cst_363 : f32 to vector<16x64xf32>
    %485 = arith.subf %484, %463 : vector<16x64xf32>
    %486 = arith.mulf %485, %463 : vector<16x64xf32>
    %487 = math.exp %486 : vector<16x64xf32>
    %488 = arith.mulf %483, %487 : vector<16x64xf32>
    %cst_364 = arith.constant 1.000000e+00 : f32
    %489 = vector.broadcast %cst_364 : f32 to vector<16x64xf32>
    %490 = arith.subf %489, %488 : vector<16x64xf32>
    %cst_365 = arith.constant 0.000000e+00 : f32
    %491 = vector.broadcast %cst_365 : f32 to vector<16x64xf32>
    %492 = arith.cmpf oge, %462, %491 : vector<16x64xf32>
    %cst_366 = arith.constant 0.000000e+00 : f32
    %493 = vector.broadcast %cst_366 : f32 to vector<16x64xf32>
    %494 = arith.subf %493, %490 : vector<16x64xf32>
    %495 = arith.select %492, %490, %494 : vector<16x64xi1>, vector<16x64xf32>
    %cst_367 = arith.constant 1.000000e+00 : f32
    %496 = vector.broadcast %cst_367 : f32 to vector<16x64xf32>
    %497 = arith.addf %496, %495 : vector<16x64xf32>
    %498 = arith.mulf %460, %497 : vector<16x64xf32>
    %c2_368 = arith.constant 2 : index
    %c0_369 = arith.constant 0 : index
    %c0_370 = arith.constant 0 : index
    %499 = vector.load %arg5[%c2_368, %c0_369, %c0_370] : memref<4x64x128xf32, #tpu.memory_space<vmem>>, vector<1x64x128xf32>
    %500 = vector.shape_cast %499 : vector<1x64x128xf32> to vector<64x128xf32>
    %cst_371 = arith.constant dense<0.000000e+00> : vector<16x128xf32>
    %501 = tpu.matmul %498, %500, %cst_371 {dimension_numbers = #tpu.dot_dimension_numbers<[1], [0], [0], [1], [0, 0, 1, 1], [], []>} : vector<16x64xf32>, vector<64x128xf32>, vector<16x128xf32> -> vector<16x128xf32>
    %c2_372 = arith.constant 2 : index
    %c0_373 = arith.constant 0 : index
    %c0_374 = arith.constant 0 : index
    %502 = vector.load %arg6[%c2_372, %c0_373, %c0_374] : memref<4x1x128xf32, #tpu.memory_space<vmem>>, vector<1x1x128xf32>
    %503 = vector.shape_cast %502 : vector<1x1x128xf32> to vector<1x128xf32>
    %504 = vector.broadcast %503 : vector<1x128xf32> to vector<16x128xf32>
    %505 = arith.addf %501, %504 : vector<16x128xf32>
    %506 = vector.extract_strided_slice %505 {offsets = [0, 0], sizes = [16, 64], strides = [1, 1]} : vector<16x128xf32> to vector<16x64xf32>
    %507 = vector.extract_strided_slice %505 {offsets = [0, 64], sizes = [16, 64], strides = [1, 1]} : vector<16x128xf32> to vector<16x64xf32>
    %508 = arith.negf %507 : vector<16x64xf32>
    %509 = math.exp %508 : vector<16x64xf32>
    %cst_375 = arith.constant 1.000000e+00 : f32
    %510 = vector.broadcast %cst_375 : f32 to vector<16x64xf32>
    %511 = arith.addf %510, %509 : vector<16x64xf32>
    %512 = arith.divf %510, %511 : vector<16x64xf32>
    %513 = arith.mulf %506, %512 : vector<16x64xf32>
    %514 = arith.addf %513, %362 : vector<16x64xf32>
    %cst_376 = arith.constant dense<0.000000e+00> : vector<16xf32>
    %515 = vector.multi_reduction <add>, %514, %cst_376 [1] : vector<16x64xf32> to vector<16xf32>
    %516 = vector.shape_cast %515 : vector<16xf32> to vector<16x1xf32>
    %cst_377 = arith.constant 6.400000e+01 : f32
    %517 = vector.broadcast %cst_377 : f32 to vector<16x1xf32>
    %518 = arith.divf %516, %517 : vector<16x1xf32>
    %519 = arith.mulf %514, %514 : vector<16x64xf32>
    %cst_378 = arith.constant dense<0.000000e+00> : vector<16xf32>
    %520 = vector.multi_reduction <add>, %519, %cst_378 [1] : vector<16x64xf32> to vector<16xf32>
    %521 = vector.shape_cast %520 : vector<16xf32> to vector<16x1xf32>
    %cst_379 = arith.constant 6.400000e+01 : f32
    %522 = vector.broadcast %cst_379 : f32 to vector<16x1xf32>
    %523 = arith.divf %521, %522 : vector<16x1xf32>
    %524 = arith.mulf %518, %518 : vector<16x1xf32>
    %525 = arith.subf %523, %524 : vector<16x1xf32>
    %526 = vector.broadcast %518 : vector<16x1xf32> to vector<16x64xf32>
    %527 = arith.subf %514, %526 : vector<16x64xf32>
    %cst_380 = arith.constant 9.99999974E-6 : f32
    %528 = vector.broadcast %cst_380 : f32 to vector<16x1xf32>
    %529 = arith.addf %525, %528 : vector<16x1xf32>
    %530 = math.rsqrt %529 : vector<16x1xf32>
    %531 = vector.broadcast %530 : vector<16x1xf32> to vector<16x64xf32>
    %532 = arith.mulf %527, %531 : vector<16x64xf32>
    %c2_381 = arith.constant 2 : index
    %c0_382 = arith.constant 0 : index
    %c0_383 = arith.constant 0 : index
    %533 = vector.load %arg7[%c2_381, %c0_382, %c0_383] : memref<4x1x64xf32, #tpu.memory_space<vmem>>, vector<1x1x64xf32>
    %534 = vector.shape_cast %533 : vector<1x1x64xf32> to vector<1x64xf32>
    %535 = vector.broadcast %534 : vector<1x64xf32> to vector<16x64xf32>
    %536 = arith.mulf %532, %535 : vector<16x64xf32>
    %c2_384 = arith.constant 2 : index
    %c0_385 = arith.constant 0 : index
    %c0_386 = arith.constant 0 : index
    %537 = vector.load %arg8[%c2_384, %c0_385, %c0_386] : memref<4x1x64xf32, #tpu.memory_space<vmem>>, vector<1x1x64xf32>
    %538 = vector.shape_cast %537 : vector<1x1x64xf32> to vector<1x64xf32>
    %539 = vector.broadcast %538 : vector<1x64xf32> to vector<16x64xf32>
    %540 = arith.addf %536, %539 : vector<16x64xf32>
    %c0_387 = arith.constant 0 : index
    %c0_388 = arith.constant 0 : index
    %541 = vector.load %arg12[%c0_387, %c0_388] : memref<16x64xf32, #tpu.memory_space<vmem>>, vector<16x64xf32>
    tpu.vector_store %arg12[%c0_387, %c0_388], %540 {strides = array<i32>} : memref<16x64xf32, #tpu.memory_space<vmem>>, vector<16x64xf32>,
    %c3_389 = arith.constant 3 : index
    %c0_390 = arith.constant 0 : index
    %c0_391 = arith.constant 0 : index
    %c0_392 = arith.constant 0 : index
    %542 = vector.load %arg4[%c3_389, %c0_390, %c0_391, %c0_392] : memref<4x16x16x64xf32, #tpu.memory_space<vmem>>, vector<1x1x16x64xf32>
    %543 = vector.shape_cast %542 : vector<1x1x16x64xf32> to vector<16x64xf32>
    %c0_393 = arith.constant 0 : index
    %c0_394 = arith.constant 0 : index
    %544 = vector.load %arg12[%c0_393, %c0_394] : memref<16x64xf32, #tpu.memory_space<vmem>>, vector<1x64xf32>
    %545 = vector.broadcast %544 : vector<1x64xf32> to vector<16x64xf32>
    %546 = arith.mulf %543, %545 : vector<16x64xf32>
    %c3_395 = arith.constant 3 : index
    %c1_396 = arith.constant 1 : index
    %c0_397 = arith.constant 0 : index
    %c0_398 = arith.constant 0 : index
    %547 = vector.load %arg4[%c3_395, %c1_396, %c0_397, %c0_398] : memref<4x16x16x64xf32, #tpu.memory_space<vmem>>, vector<1x1x16x64xf32>
    %548 = vector.shape_cast %547 : vector<1x1x16x64xf32> to vector<16x64xf32>
    %c1_399 = arith.constant 1 : index
    %c0_400 = arith.constant 0 : index
    %549 = vector.load %arg12[%c1_399, %c0_400] : memref<16x64xf32, #tpu.memory_space<vmem>>, vector<1x64xf32>
    %550 = vector.broadcast %549 : vector<1x64xf32> to vector<16x64xf32>
    %551 = arith.mulf %548, %550 : vector<16x64xf32>
    %c3_401 = arith.constant 3 : index
    %c2_402 = arith.constant 2 : index
    %c0_403 = arith.constant 0 : index
    %c0_404 = arith.constant 0 : index
    %552 = vector.load %arg4[%c3_401, %c2_402, %c0_403, %c0_404] : memref<4x16x16x64xf32, #tpu.memory_space<vmem>>, vector<1x1x16x64xf32>
    %553 = vector.shape_cast %552 : vector<1x1x16x64xf32> to vector<16x64xf32>
    %c2_405 = arith.constant 2 : index
    %c0_406 = arith.constant 0 : index
    %554 = vector.load %arg12[%c2_405, %c0_406] : memref<16x64xf32, #tpu.memory_space<vmem>>, vector<1x64xf32>
    %555 = vector.broadcast %554 : vector<1x64xf32> to vector<16x64xf32>
    %556 = arith.mulf %553, %555 : vector<16x64xf32>
    %c3_407 = arith.constant 3 : index
    %c3_408 = arith.constant 3 : index
    %c0_409 = arith.constant 0 : index
    %c0_410 = arith.constant 0 : index
    %557 = vector.load %arg4[%c3_407, %c3_408, %c0_409, %c0_410] : memref<4x16x16x64xf32, #tpu.memory_space<vmem>>, vector<1x1x16x64xf32>
    %558 = vector.shape_cast %557 : vector<1x1x16x64xf32> to vector<16x64xf32>
    %c3_411 = arith.constant 3 : index
    %c0_412 = arith.constant 0 : index
    %559 = vector.load %arg12[%c3_411, %c0_412] : memref<16x64xf32, #tpu.memory_space<vmem>>, vector<1x64xf32>
    %560 = vector.broadcast %559 : vector<1x64xf32> to vector<16x64xf32>
    %561 = arith.mulf %558, %560 : vector<16x64xf32>
    %c3_413 = arith.constant 3 : index
    %c4_414 = arith.constant 4 : index
    %c0_415 = arith.constant 0 : index
    %c0_416 = arith.constant 0 : index
    %562 = vector.load %arg4[%c3_413, %c4_414, %c0_415, %c0_416] : memref<4x16x16x64xf32, #tpu.memory_space<vmem>>, vector<1x1x16x64xf32>
    %563 = vector.shape_cast %562 : vector<1x1x16x64xf32> to vector<16x64xf32>
    %c4_417 = arith.constant 4 : index
    %c0_418 = arith.constant 0 : index
    %564 = vector.load %arg12[%c4_417, %c0_418] : memref<16x64xf32, #tpu.memory_space<vmem>>, vector<1x64xf32>
    %565 = vector.broadcast %564 : vector<1x64xf32> to vector<16x64xf32>
    %566 = arith.mulf %563, %565 : vector<16x64xf32>
    %567 = arith.addf %546, %566 : vector<16x64xf32>
    %c3_419 = arith.constant 3 : index
    %c5_420 = arith.constant 5 : index
    %c0_421 = arith.constant 0 : index
    %c0_422 = arith.constant 0 : index
    %568 = vector.load %arg4[%c3_419, %c5_420, %c0_421, %c0_422] : memref<4x16x16x64xf32, #tpu.memory_space<vmem>>, vector<1x1x16x64xf32>
    %569 = vector.shape_cast %568 : vector<1x1x16x64xf32> to vector<16x64xf32>
    %c5_423 = arith.constant 5 : index
    %c0_424 = arith.constant 0 : index
    %570 = vector.load %arg12[%c5_423, %c0_424] : memref<16x64xf32, #tpu.memory_space<vmem>>, vector<1x64xf32>
    %571 = vector.broadcast %570 : vector<1x64xf32> to vector<16x64xf32>
    %572 = arith.mulf %569, %571 : vector<16x64xf32>
    %573 = arith.addf %551, %572 : vector<16x64xf32>
    %c3_425 = arith.constant 3 : index
    %c6_426 = arith.constant 6 : index
    %c0_427 = arith.constant 0 : index
    %c0_428 = arith.constant 0 : index
    %574 = vector.load %arg4[%c3_425, %c6_426, %c0_427, %c0_428] : memref<4x16x16x64xf32, #tpu.memory_space<vmem>>, vector<1x1x16x64xf32>
    %575 = vector.shape_cast %574 : vector<1x1x16x64xf32> to vector<16x64xf32>
    %c6_429 = arith.constant 6 : index
    %c0_430 = arith.constant 0 : index
    %576 = vector.load %arg12[%c6_429, %c0_430] : memref<16x64xf32, #tpu.memory_space<vmem>>, vector<1x64xf32>
    %577 = vector.broadcast %576 : vector<1x64xf32> to vector<16x64xf32>
    %578 = arith.mulf %575, %577 : vector<16x64xf32>
    %579 = arith.addf %556, %578 : vector<16x64xf32>
    %c3_431 = arith.constant 3 : index
    %c7_432 = arith.constant 7 : index
    %c0_433 = arith.constant 0 : index
    %c0_434 = arith.constant 0 : index
    %580 = vector.load %arg4[%c3_431, %c7_432, %c0_433, %c0_434] : memref<4x16x16x64xf32, #tpu.memory_space<vmem>>, vector<1x1x16x64xf32>
    %581 = vector.shape_cast %580 : vector<1x1x16x64xf32> to vector<16x64xf32>
    %c7_435 = arith.constant 7 : index
    %c0_436 = arith.constant 0 : index
    %582 = vector.load %arg12[%c7_435, %c0_436] : memref<16x64xf32, #tpu.memory_space<vmem>>, vector<1x64xf32>
    %583 = vector.broadcast %582 : vector<1x64xf32> to vector<16x64xf32>
    %584 = arith.mulf %581, %583 : vector<16x64xf32>
    %585 = arith.addf %561, %584 : vector<16x64xf32>
    %c3_437 = arith.constant 3 : index
    %c8_438 = arith.constant 8 : index
    %c0_439 = arith.constant 0 : index
    %c0_440 = arith.constant 0 : index
    %586 = vector.load %arg4[%c3_437, %c8_438, %c0_439, %c0_440] : memref<4x16x16x64xf32, #tpu.memory_space<vmem>>, vector<1x1x16x64xf32>
    %587 = vector.shape_cast %586 : vector<1x1x16x64xf32> to vector<16x64xf32>
    %c8_441 = arith.constant 8 : index
    %c0_442 = arith.constant 0 : index
    %588 = vector.load %arg12[%c8_441, %c0_442] : memref<16x64xf32, #tpu.memory_space<vmem>>, vector<1x64xf32>
    %589 = vector.broadcast %588 : vector<1x64xf32> to vector<16x64xf32>
    %590 = arith.mulf %587, %589 : vector<16x64xf32>
    %591 = arith.addf %567, %590 : vector<16x64xf32>
    %c3_443 = arith.constant 3 : index
    %c9_444 = arith.constant 9 : index
    %c0_445 = arith.constant 0 : index
    %c0_446 = arith.constant 0 : index
    %592 = vector.load %arg4[%c3_443, %c9_444, %c0_445, %c0_446] : memref<4x16x16x64xf32, #tpu.memory_space<vmem>>, vector<1x1x16x64xf32>
    %593 = vector.shape_cast %592 : vector<1x1x16x64xf32> to vector<16x64xf32>
    %c9_447 = arith.constant 9 : index
    %c0_448 = arith.constant 0 : index
    %594 = vector.load %arg12[%c9_447, %c0_448] : memref<16x64xf32, #tpu.memory_space<vmem>>, vector<1x64xf32>
    %595 = vector.broadcast %594 : vector<1x64xf32> to vector<16x64xf32>
    %596 = arith.mulf %593, %595 : vector<16x64xf32>
    %597 = arith.addf %573, %596 : vector<16x64xf32>
    %c3_449 = arith.constant 3 : index
    %c10_450 = arith.constant 10 : index
    %c0_451 = arith.constant 0 : index
    %c0_452 = arith.constant 0 : index
    %598 = vector.load %arg4[%c3_449, %c10_450, %c0_451, %c0_452] : memref<4x16x16x64xf32, #tpu.memory_space<vmem>>, vector<1x1x16x64xf32>
    %599 = vector.shape_cast %598 : vector<1x1x16x64xf32> to vector<16x64xf32>
    %c10_453 = arith.constant 10 : index
    %c0_454 = arith.constant 0 : index
    %600 = vector.load %arg12[%c10_453, %c0_454] : memref<16x64xf32, #tpu.memory_space<vmem>>, vector<1x64xf32>
    %601 = vector.broadcast %600 : vector<1x64xf32> to vector<16x64xf32>
    %602 = arith.mulf %599, %601 : vector<16x64xf32>
    %603 = arith.addf %579, %602 : vector<16x64xf32>
    %c3_455 = arith.constant 3 : index
    %c11_456 = arith.constant 11 : index
    %c0_457 = arith.constant 0 : index
    %c0_458 = arith.constant 0 : index
    %604 = vector.load %arg4[%c3_455, %c11_456, %c0_457, %c0_458] : memref<4x16x16x64xf32, #tpu.memory_space<vmem>>, vector<1x1x16x64xf32>
    %605 = vector.shape_cast %604 : vector<1x1x16x64xf32> to vector<16x64xf32>
    %c11_459 = arith.constant 11 : index
    %c0_460 = arith.constant 0 : index
    %606 = vector.load %arg12[%c11_459, %c0_460] : memref<16x64xf32, #tpu.memory_space<vmem>>, vector<1x64xf32>
    %607 = vector.broadcast %606 : vector<1x64xf32> to vector<16x64xf32>
    %608 = arith.mulf %605, %607 : vector<16x64xf32>
    %609 = arith.addf %585, %608 : vector<16x64xf32>
    %c3_461 = arith.constant 3 : index
    %c12_462 = arith.constant 12 : index
    %c0_463 = arith.constant 0 : index
    %c0_464 = arith.constant 0 : index
    %610 = vector.load %arg4[%c3_461, %c12_462, %c0_463, %c0_464] : memref<4x16x16x64xf32, #tpu.memory_space<vmem>>, vector<1x1x16x64xf32>
    %611 = vector.shape_cast %610 : vector<1x1x16x64xf32> to vector<16x64xf32>
    %c12_465 = arith.constant 12 : index
    %c0_466 = arith.constant 0 : index
    %612 = vector.load %arg12[%c12_465, %c0_466] : memref<16x64xf32, #tpu.memory_space<vmem>>, vector<1x64xf32>
    %613 = vector.broadcast %612 : vector<1x64xf32> to vector<16x64xf32>
    %614 = arith.mulf %611, %613 : vector<16x64xf32>
    %615 = arith.addf %591, %614 : vector<16x64xf32>
    %c3_467 = arith.constant 3 : index
    %c13_468 = arith.constant 13 : index
    %c0_469 = arith.constant 0 : index
    %c0_470 = arith.constant 0 : index
    %616 = vector.load %arg4[%c3_467, %c13_468, %c0_469, %c0_470] : memref<4x16x16x64xf32, #tpu.memory_space<vmem>>, vector<1x1x16x64xf32>
    %617 = vector.shape_cast %616 : vector<1x1x16x64xf32> to vector<16x64xf32>
    %c13_471 = arith.constant 13 : index
    %c0_472 = arith.constant 0 : index
    %618 = vector.load %arg12[%c13_471, %c0_472] : memref<16x64xf32, #tpu.memory_space<vmem>>, vector<1x64xf32>
    %619 = vector.broadcast %618 : vector<1x64xf32> to vector<16x64xf32>
    %620 = arith.mulf %617, %619 : vector<16x64xf32>
    %621 = arith.addf %597, %620 : vector<16x64xf32>
    %c3_473 = arith.constant 3 : index
    %c14_474 = arith.constant 14 : index
    %c0_475 = arith.constant 0 : index
    %c0_476 = arith.constant 0 : index
    %622 = vector.load %arg4[%c3_473, %c14_474, %c0_475, %c0_476] : memref<4x16x16x64xf32, #tpu.memory_space<vmem>>, vector<1x1x16x64xf32>
    %623 = vector.shape_cast %622 : vector<1x1x16x64xf32> to vector<16x64xf32>
    %c14_477 = arith.constant 14 : index
    %c0_478 = arith.constant 0 : index
    %624 = vector.load %arg12[%c14_477, %c0_478] : memref<16x64xf32, #tpu.memory_space<vmem>>, vector<1x64xf32>
    %625 = vector.broadcast %624 : vector<1x64xf32> to vector<16x64xf32>
    %626 = arith.mulf %623, %625 : vector<16x64xf32>
    %627 = arith.addf %603, %626 : vector<16x64xf32>
    %c3_479 = arith.constant 3 : index
    %c15_480 = arith.constant 15 : index
    %c0_481 = arith.constant 0 : index
    %c0_482 = arith.constant 0 : index
    %628 = vector.load %arg4[%c3_479, %c15_480, %c0_481, %c0_482] : memref<4x16x16x64xf32, #tpu.memory_space<vmem>>, vector<1x1x16x64xf32>
    %629 = vector.shape_cast %628 : vector<1x1x16x64xf32> to vector<16x64xf32>
    %c15_483 = arith.constant 15 : index
    %c0_484 = arith.constant 0 : index
    %630 = vector.load %arg12[%c15_483, %c0_484] : memref<16x64xf32, #tpu.memory_space<vmem>>, vector<1x64xf32>
    %631 = vector.broadcast %630 : vector<1x64xf32> to vector<16x64xf32>
    %632 = arith.mulf %629, %631 : vector<16x64xf32>
    %633 = arith.addf %609, %632 : vector<16x64xf32>
    %634 = arith.addf %615, %621 : vector<16x64xf32>
    %635 = arith.addf %627, %633 : vector<16x64xf32>
    %636 = arith.addf %634, %635 : vector<16x64xf32>
    %cst_485 = arith.constant 5.000000e-01 : f32
    %637 = vector.broadcast %cst_485 : f32 to vector<16x64xf32>
    %638 = arith.mulf %637, %636 : vector<16x64xf32>
    %cst_486 = arith.constant 0.707106769 : f32
    %639 = vector.broadcast %cst_486 : f32 to vector<16x64xf32>
    %640 = arith.mulf %636, %639 : vector<16x64xf32>
    %641 = math.absf %640 : vector<16x64xf32>
    %cst_487 = arith.constant 0.327591091 : f32
    %642 = vector.broadcast %cst_487 : f32 to vector<16x64xf32>
    %643 = arith.mulf %642, %641 : vector<16x64xf32>
    %cst_488 = arith.constant 1.000000e+00 : f32
    %644 = vector.broadcast %cst_488 : f32 to vector<16x64xf32>
    %645 = arith.addf %644, %643 : vector<16x64xf32>
    %cst_489 = arith.constant 1.000000e+00 : f32
    %646 = vector.broadcast %cst_489 : f32 to vector<16x64xf32>
    %647 = arith.divf %646, %645 : vector<16x64xf32>
    %cst_490 = arith.constant 1.06140542 : f32
    %648 = vector.broadcast %cst_490 : f32 to vector<16x64xf32>
    %649 = arith.mulf %647, %648 : vector<16x64xf32>
    %cst_491 = arith.constant -1.45315206 : f32
    %650 = vector.broadcast %cst_491 : f32 to vector<16x64xf32>
    %651 = arith.addf %650, %649 : vector<16x64xf32>
    %652 = arith.mulf %647, %651 : vector<16x64xf32>
    %cst_492 = arith.constant 1.42141378 : f32
    %653 = vector.broadcast %cst_492 : f32 to vector<16x64xf32>
    %654 = arith.addf %653, %652 : vector<16x64xf32>
    %655 = arith.mulf %647, %654 : vector<16x64xf32>
    %cst_493 = arith.constant -0.284496725 : f32
    %656 = vector.broadcast %cst_493 : f32 to vector<16x64xf32>
    %657 = arith.addf %656, %655 : vector<16x64xf32>
    %658 = arith.mulf %647, %657 : vector<16x64xf32>
    %cst_494 = arith.constant 0.254829586 : f32
    %659 = vector.broadcast %cst_494 : f32 to vector<16x64xf32>
    %660 = arith.addf %659, %658 : vector<16x64xf32>
    %661 = arith.mulf %647, %660 : vector<16x64xf32>
    %cst_495 = arith.constant 0.000000e+00 : f32
    %662 = vector.broadcast %cst_495 : f32 to vector<16x64xf32>
    %663 = arith.subf %662, %641 : vector<16x64xf32>
    %664 = arith.mulf %663, %641 : vector<16x64xf32>
    %665 = math.exp %664 : vector<16x64xf32>
    %666 = arith.mulf %661, %665 : vector<16x64xf32>
    %cst_496 = arith.constant 1.000000e+00 : f32
    %667 = vector.broadcast %cst_496 : f32 to vector<16x64xf32>
    %668 = arith.subf %667, %666 : vector<16x64xf32>
    %cst_497 = arith.constant 0.000000e+00 : f32
    %669 = vector.broadcast %cst_497 : f32 to vector<16x64xf32>
    %670 = arith.cmpf oge, %640, %669 : vector<16x64xf32>
    %cst_498 = arith.constant 0.000000e+00 : f32
    %671 = vector.broadcast %cst_498 : f32 to vector<16x64xf32>
    %672 = arith.subf %671, %668 : vector<16x64xf32>
    %673 = arith.select %670, %668, %672 : vector<16x64xi1>, vector<16x64xf32>
    %cst_499 = arith.constant 1.000000e+00 : f32
    %674 = vector.broadcast %cst_499 : f32 to vector<16x64xf32>
    %675 = arith.addf %674, %673 : vector<16x64xf32>
    %676 = arith.mulf %638, %675 : vector<16x64xf32>
    %c3_500 = arith.constant 3 : index
    %c0_501 = arith.constant 0 : index
    %c0_502 = arith.constant 0 : index
    %677 = vector.load %arg5[%c3_500, %c0_501, %c0_502] : memref<4x64x128xf32, #tpu.memory_space<vmem>>, vector<1x64x128xf32>
    %678 = vector.shape_cast %677 : vector<1x64x128xf32> to vector<64x128xf32>
    %cst_503 = arith.constant dense<0.000000e+00> : vector<16x128xf32>
    %679 = tpu.matmul %676, %678, %cst_503 {dimension_numbers = #tpu.dot_dimension_numbers<[1], [0], [0], [1], [0, 0, 1, 1], [], []>} : vector<16x64xf32>, vector<64x128xf32>, vector<16x128xf32> -> vector<16x128xf32>
    %c3_504 = arith.constant 3 : index
    %c0_505 = arith.constant 0 : index
    %c0_506 = arith.constant 0 : index
    %680 = vector.load %arg6[%c3_504, %c0_505, %c0_506] : memref<4x1x128xf32, #tpu.memory_space<vmem>>, vector<1x1x128xf32>
    %681 = vector.shape_cast %680 : vector<1x1x128xf32> to vector<1x128xf32>
    %682 = vector.broadcast %681 : vector<1x128xf32> to vector<16x128xf32>
    %683 = arith.addf %679, %682 : vector<16x128xf32>
    %684 = vector.extract_strided_slice %683 {offsets = [0, 0], sizes = [16, 64], strides = [1, 1]} : vector<16x128xf32> to vector<16x64xf32>
    %685 = vector.extract_strided_slice %683 {offsets = [0, 64], sizes = [16, 64], strides = [1, 1]} : vector<16x128xf32> to vector<16x64xf32>
    %686 = arith.negf %685 : vector<16x64xf32>
    %687 = math.exp %686 : vector<16x64xf32>
    %cst_507 = arith.constant 1.000000e+00 : f32
    %688 = vector.broadcast %cst_507 : f32 to vector<16x64xf32>
    %689 = arith.addf %688, %687 : vector<16x64xf32>
    %690 = arith.divf %688, %689 : vector<16x64xf32>
    %691 = arith.mulf %684, %690 : vector<16x64xf32>
    %692 = arith.addf %691, %540 : vector<16x64xf32>
    %cst_508 = arith.constant dense<0.000000e+00> : vector<16xf32>
    %693 = vector.multi_reduction <add>, %692, %cst_508 [1] : vector<16x64xf32> to vector<16xf32>
    %694 = vector.shape_cast %693 : vector<16xf32> to vector<16x1xf32>
    %cst_509 = arith.constant 6.400000e+01 : f32
    %695 = vector.broadcast %cst_509 : f32 to vector<16x1xf32>
    %696 = arith.divf %694, %695 : vector<16x1xf32>
    %697 = arith.mulf %692, %692 : vector<16x64xf32>
    %cst_510 = arith.constant dense<0.000000e+00> : vector<16xf32>
    %698 = vector.multi_reduction <add>, %697, %cst_510 [1] : vector<16x64xf32> to vector<16xf32>
    %699 = vector.shape_cast %698 : vector<16xf32> to vector<16x1xf32>
    %cst_511 = arith.constant 6.400000e+01 : f32
    %700 = vector.broadcast %cst_511 : f32 to vector<16x1xf32>
    %701 = arith.divf %699, %700 : vector<16x1xf32>
    %702 = arith.mulf %696, %696 : vector<16x1xf32>
    %703 = arith.subf %701, %702 : vector<16x1xf32>
    %704 = vector.broadcast %696 : vector<16x1xf32> to vector<16x64xf32>
    %705 = arith.subf %692, %704 : vector<16x64xf32>
    %cst_512 = arith.constant 9.99999974E-6 : f32
    %706 = vector.broadcast %cst_512 : f32 to vector<16x1xf32>
    %707 = arith.addf %703, %706 : vector<16x1xf32>
    %708 = math.rsqrt %707 : vector<16x1xf32>
    %709 = vector.broadcast %708 : vector<16x1xf32> to vector<16x64xf32>
    %710 = arith.mulf %705, %709 : vector<16x64xf32>
    %c3_513 = arith.constant 3 : index
    %c0_514 = arith.constant 0 : index
    %c0_515 = arith.constant 0 : index
    %711 = vector.load %arg7[%c3_513, %c0_514, %c0_515] : memref<4x1x64xf32, #tpu.memory_space<vmem>>, vector<1x1x64xf32>
    %712 = vector.shape_cast %711 : vector<1x1x64xf32> to vector<1x64xf32>
    %713 = vector.broadcast %712 : vector<1x64xf32> to vector<16x64xf32>
    %714 = arith.mulf %710, %713 : vector<16x64xf32>
    %c3_516 = arith.constant 3 : index
    %c0_517 = arith.constant 0 : index
    %c0_518 = arith.constant 0 : index
    %715 = vector.load %arg8[%c3_516, %c0_517, %c0_518] : memref<4x1x64xf32, #tpu.memory_space<vmem>>, vector<1x1x64xf32>
    %716 = vector.shape_cast %715 : vector<1x1x64xf32> to vector<1x64xf32>
    %717 = vector.broadcast %716 : vector<1x64xf32> to vector<16x64xf32>
    %718 = arith.addf %714, %717 : vector<16x64xf32>
    %cst_519 = arith.constant dense<0.000000e+00> : vector<64xf32>
    %719 = vector.multi_reduction <add>, %718, %cst_519 [0] : vector<16x64xf32> to vector<64xf32>
    %720 = vector.shape_cast %719 : vector<64xf32> to vector<1x64xf32>
    %cst_520 = arith.constant 1.600000e+01 : f32
    %721 = vector.broadcast %cst_520 : f32 to vector<1x64xf32>
    %722 = arith.divf %720, %721 : vector<1x64xf32>
    %c0_521 = arith.constant 0 : index
    %c0_522 = arith.constant 0 : index
    %723 = vector.load %arg9[%c0_521, %c0_522] : memref<64x8xf32, #tpu.memory_space<vmem>>, vector<64x8xf32>
    %cst_523 = arith.constant dense<0.000000e+00> : vector<1x8xf32>
    %724 = tpu.matmul %722, %723, %cst_523 {dimension_numbers = #tpu.dot_dimension_numbers<[1], [0], [0], [1], [0, 0, 1, 1], [], []>} : vector<1x64xf32>, vector<64x8xf32>, vector<1x8xf32> -> vector<1x8xf32>
    %c0_524 = arith.constant 0 : index
    %c0_525 = arith.constant 0 : index
    %725 = vector.load %arg10[%c0_524, %c0_525] : memref<1x8xf32, #tpu.memory_space<vmem>>, vector<1x8xf32>
    %726 = arith.addf %724, %725 : vector<1x8xf32>
    %727 = arith.negf %726 : vector<1x8xf32>
    %728 = math.exp %727 : vector<1x8xf32>
    %cst_526 = arith.constant 1.000000e+00 : f32
    %729 = vector.broadcast %cst_526 : f32 to vector<1x8xf32>
    %730 = arith.addf %729, %728 : vector<1x8xf32>
    %731 = arith.divf %729, %730 : vector<1x8xf32>
    %c0_527 = arith.constant 0 : index
    %c0_528 = arith.constant 0 : index
    %c0_529 = arith.constant 0 : index
    %732 = vector.load %arg11[%c0_527, %c0_528, %c0_529] : memref<1x1x8xf32, #tpu.memory_space<vmem>>, vector<1x1x8xf32>
    %733 = vector.shape_cast %732 : vector<1x1x8xf32> to vector<1x8xf32>
    %734 = vector.shape_cast %731 : vector<1x8xf32> to vector<1x1x8xf32>
    tpu.vector_store %arg11[%c0_527, %c0_528, %c0_529], %734 {strides = array<i32>} : memref<1x1x8xf32, #tpu.memory_space<vmem>>, vector<1x1x8xf32>,
    return
  }
  func.func @transform_0(%arg0: i32) -> (i32, i32, i32) {
    %c0_i32 = arith.constant 0 : i32
    %c0_i32_0 = arith.constant 0 : i32
    %c0_i32_1 = arith.constant 0 : i32
    return %arg0, %c0_i32, %c0_i32_0 : i32, i32, i32
  }
  func.func @transform_1(%arg0: i32) -> (i32, i32) {
    %c0_i32 = arith.constant 0 : i32
    %c0_i32_0 = arith.constant 0 : i32
    %c0_i32_1 = arith.constant 0 : i32
    return %c0_i32, %c0_i32_0 : i32, i32
  }
  func.func @transform_2(%arg0: i32) -> (i32, i32) {
    %c0_i32 = arith.constant 0 : i32
    %c0_i32_0 = arith.constant 0 : i32
    %c0_i32_1 = arith.constant 0 : i32
    return %c0_i32, %c0_i32_0 : i32, i32
  }
  func.func @transform_3(%arg0: i32) -> (i32, i32, i32, i32) {
    %c0_i32 = arith.constant 0 : i32
    %c0_i32_0 = arith.constant 0 : i32
    %c0_i32_1 = arith.constant 0 : i32
    %c0_i32_2 = arith.constant 0 : i32
    %c0_i32_3 = arith.constant 0 : i32
    return %c0_i32, %c0_i32_0, %c0_i32_1, %c0_i32_2 : i32, i32, i32, i32
  }
  func.func @transform_4(%arg0: i32) -> (i32, i32, i32) {
    %c0_i32 = arith.constant 0 : i32
    %c0_i32_0 = arith.constant 0 : i32
    %c0_i32_1 = arith.constant 0 : i32
    %c0_i32_2 = arith.constant 0 : i32
    return %c0_i32, %c0_i32_0, %c0_i32_1 : i32, i32, i32
  }
  func.func @transform_5(%arg0: i32) -> (i32, i32, i32) {
    %c0_i32 = arith.constant 0 : i32
    %c0_i32_0 = arith.constant 0 : i32
    %c0_i32_1 = arith.constant 0 : i32
    %c0_i32_2 = arith.constant 0 : i32
    return %c0_i32, %c0_i32_0, %c0_i32_1 : i32, i32, i32
  }
  func.func @transform_6(%arg0: i32) -> (i32, i32, i32) {
    %c0_i32 = arith.constant 0 : i32
    %c0_i32_0 = arith.constant 0 : i32
    %c0_i32_1 = arith.constant 0 : i32
    %c0_i32_2 = arith.constant 0 : i32
    return %c0_i32, %c0_i32_0, %c0_i32_1 : i32, i32, i32
  }
  func.func @transform_7(%arg0: i32) -> (i32, i32, i32) {
    %c0_i32 = arith.constant 0 : i32
    %c0_i32_0 = arith.constant 0 : i32
    %c0_i32_1 = arith.constant 0 : i32
    %c0_i32_2 = arith.constant 0 : i32
    return %c0_i32, %c0_i32_0, %c0_i32_1 : i32, i32, i32
  }
  func.func @transform_8(%arg0: i32) -> (i32, i32) {
    %c0_i32 = arith.constant 0 : i32
    %c0_i32_0 = arith.constant 0 : i32
    %c0_i32_1 = arith.constant 0 : i32
    return %c0_i32, %c0_i32_0 : i32, i32
  }
  func.func @transform_9(%arg0: i32) -> (i32, i32) {
    %c0_i32 = arith.constant 0 : i32
    %c0_i32_0 = arith.constant 0 : i32
    %c0_i32_1 = arith.constant 0 : i32
    return %c0_i32, %c0_i32_0 : i32, i32
  }
  func.func @transform_10(%arg0: i32) -> (i32, i32, i32) {
    %c0_i32 = arith.constant 0 : i32
    %c0_i32_0 = arith.constant 0 : i32
    %c0_i32_1 = arith.constant 0 : i32
    return %arg0, %c0_i32, %c0_i32_0 : i32, i32, i32
  }
}

</mosaic_0001>

<llo_original>
// kernel: s4model_forward.1
$region0: #{s4model_forward.1}
  #allocation0 [shape = 'u32[]', space=smem, size = 0x4, offset = 0x4, fixed_abs, tag = 'smem constant byte address 0x4 - core index']
  #allocation1 [shape = 'u32[72,128]{1,0:T(1,128)}', space=vmem, size = 0x9000, scoped, tag = 'internal scratch']
  #allocation2 [shape = 'f32[16,64]{1,0:T(8,128)}', space=vmem, size = 0x2000, scoped, tag = 'scratch operand']
  %s0 = inlined_call_operand.vmem [shape: f32[2,16,12], index: 0, kind: input, shape index: {}]
  %s1 = inlined_call_operand.vmem [shape: f32[12,64], index: 1, kind: input, shape index: {}]
  %s2 = inlined_call_operand.vmem [shape: f32[1,64], index: 2, kind: input, shape index: {}]
  %s3 = inlined_call_operand.vmem [shape: f32[4,16,16,64], index: 3, kind: input, shape index: {}]
  %s4 = inlined_call_operand.vmem [shape: f32[4,64,128], index: 4, kind: input, shape index: {}]
  %s5 = inlined_call_operand.vmem [shape: f32[4,1,128], index: 5, kind: input, shape index: {}]
  %s6 = inlined_call_operand.vmem [shape: f32[4,1,64], index: 6, kind: input, shape index: {}]
  %s7 = inlined_call_operand.vmem [shape: f32[4,1,64], index: 7, kind: input, shape index: {}]
  %s8 = inlined_call_operand.vmem [shape: f32[64,8], index: 8, kind: input, shape index: {}]
  %s9 = inlined_call_operand.vmem [shape: f32[1,8], index: 9, kind: input, shape index: {}]
  %s10 = inlined_call_operand.hbm [shape: f32[2,1,8], index: 10, kind: output, shape index: {}]
  %s11 = sld [smem:[#allocation0]]
  $region73: #{s4model_forward.1} parent=0
    _
  %s13 = ssub.s32 1, %s11
  %s14 = scalar_select 0, %s13, %s11
  $region1: #{s4model_forward.1} parent=0
    #allocation3 [shape = 'u8[1024]{0}', space=vmem, size = 0x400, scoped, tag = 'output window, operand 0']
    #allocation4 [shape = 's32[2]{0}', space=sflag, size = 0x8, scoped, tag = 'scoped memory for s4model_forward.1']
    %15 = vsyncpa [#allocation4], 0
    %s16 = scalar_lea.sflag [#allocation4], 1
    %17 = vsyncpa %s16, 0
    loop: start=0, step=1, limit=4
    $region2: #{s4model_forward.1} parent=1 // loop_pre_header
      _
    $region3: #{s4model_forward.1} parent=1 // loop_header
      %s19 = sphi 0, %s23
      %p20 = scmp.ge.s32.totalorder %s19, 4
      %s29 = sphi 0, %s31
      %s32 = sphi 0, %s29
      %s33 = sphi 0, %s32
      %s49 = sphi 0, %s33
      %s53 = sphi 0, %s53
      %s55 = sphi 0, %s53
      %s56 = sphi 0, %s55
      %s70 = sphi 0, %s56
      %s74 = sphi 0, %s74
      %s76 = sphi 0, %s74
      %s77 = sphi 0, %s76
      %s91 = sphi 0, %s77
      %s95 = sphi 0, %s95
      %s97 = sphi 0, %s95
      %s98 = sphi 0, %s97
      %s112 = sphi 0, %s98
      %s116 = sphi 0, %s116
      %s118 = sphi 0, %s116
      %s119 = sphi 0, %s118
      %s133 = sphi 0, %s119
      %s137 = sphi 0, %s137
      %s139 = sphi 0, %s137
      %s140 = sphi 0, %s139
      %s154 = sphi 0, %s140
      %s158 = sphi 0, %s158
      %s160 = sphi 0, %s158
      %s161 = sphi 0, %s160
      %s175 = sphi 0, %s161
      %s179 = sphi 0, %s179
      %s181 = sphi 0, %s179
      %s182 = sphi 0, %s181
      %s196 = sphi 0, %s182
      %s200 = sphi 0, %s200
      %s202 = sphi 0, %s200
      %s203 = sphi 0, %s202
      %s217 = sphi 0, %s203
      %s221 = sphi 0, %s221
      %s223 = sphi 0, %s221
      %s224 = sphi 0, %s223
      %s238 = sphi 0, %s224
      %s244 = sphi 0, %s246
      %s247 = sphi 0, %s244
      %s248 = sphi 0, %s247
      %s264 = sphi 0, %s248
    $region4: #{s4model_forward.1} parent=1 // loop_header_branch
      %22 = sbr.rel (%p20) target = $region8
    $region5: #{s4model_forward.1} parent=1 // loop_body
      %s24 = ssub.s32 %s19, 1
      %s25 = ssub.s32 %s19, 2
      %s26 = sadd.s32 %s19, 1
      %s27 = ssub.s32 %s19, %s26
      %p28 = scmp.eq.s32.totalorder %s27, 0
      %s30 = sadd.s32 %s29, 1
      %s31 = scalar_select %p28, %s29, %s30
      %p34 = pneg %p28
      %p35 = scmp.eq.s32.totalorder %s19, 1
      %p36 = por %p34, %p35
      %p37 = scmp.ne.s32.totalorder %s29, %s32
      %p38 = scmp.eq.s32.totalorder %s19, 0
      %p39 = por %p37, %p38
      %p40 = scmp.ne.s32.totalorder %s29, %s32
      %p41 = scmp.eq.s32.totalorder %s24, 1
      %p42 = por %p40, %p41
      %p43 = scmp.ne.s32.totalorder %s32, %s33
      %p44 = scmp.eq.s32.totalorder %s24, 0
      %p45 = por %p43, %p44
      %p46 = scmp.ne.s32.totalorder %s32, %s33
      %p47 = scmp.eq.s32.totalorder %s25, 1
      %p48 = por %p46, %p47
      %p50 = scmp.ne.s32.totalorder %s33, %s49
      %p51 = scmp.eq.s32.totalorder %s25, 0
      %p52 = por %p50, %p51
      %s54 = sadd.s32 %s53, 1
      %p57 = scmp.eq.s32.totalorder %s19, 1
      %p58 = scmp.ne.s32.totalorder %s53, %s55
      %p59 = scmp.eq.s32.totalorder %s19, 0
      %p60 = por %p58, %p59
      %p61 = scmp.ne.s32.totalorder %s53, %s55
      %p62 = scmp.eq.s32.totalorder %s24, 1
      %p63 = por %p61, %p62
      %p64 = scmp.ne.s32.totalorder %s55, %s56
      %p65 = scmp.eq.s32.totalorder %s24, 0
      %p66 = por %p64, %p65
      %p67 = scmp.ne.s32.totalorder %s55, %s56
      %p68 = scmp.eq.s32.totalorder %s25, 1
      %p69 = por %p67, %p68
      %p71 = scmp.ne.s32.totalorder %s56, %s70
      %p72 = scmp.eq.s32.totalorder %s25, 0
      %p73 = por %p71, %p72
      %s75 = sadd.s32 %s74, 1
      %p78 = scmp.eq.s32.totalorder %s19, 1
      %p79 = scmp.ne.s32.totalorder %s74, %s76
      %p80 = scmp.eq.s32.totalorder %s19, 0
      %p81 = por %p79, %p80
      %p82 = scmp.ne.s32.totalorder %s74, %s76
      %p83 = scmp.eq.s32.totalorder %s24, 1
      %p84 = por %p82, %p83
      %p85 = scmp.ne.s32.totalorder %s76, %s77
      %p86 = scmp.eq.s32.totalorder %s24, 0
      %p87 = por %p85, %p86
      %p88 = scmp.ne.s32.totalorder %s76, %s77
      %p89 = scmp.eq.s32.totalorder %s25, 1
      %p90 = por %p88, %p89
      %p92 = scmp.ne.s32.totalorder %s77, %s91
      %p93 = scmp.eq.s32.totalorder %s25, 0
      %p94 = por %p92, %p93
      %s96 = sadd.s32 %s95, 1
      %p99 = scmp.eq.s32.totalorder %s19, 1
      %p100 = scmp.ne.s32.totalorder %s95, %s97
      %p101 = scmp.eq.s32.totalorder %s19, 0
      %p102 = por %p100, %p101
      %p103 = scmp.ne.s32.totalorder %s95, %s97
      %p104 = scmp.eq.s32.totalorder %s24, 1
      %p105 = por %p103, %p104
      %p106 = scmp.ne.s32.totalorder %s97, %s98
      %p107 = scmp.eq.s32.totalorder %s24, 0
      %p108 = por %p106, %p107
      %p109 = scmp.ne.s32.totalorder %s97, %s98
      %p110 = scmp.eq.s32.totalorder %s25, 1
      %p111 = por %p109, %p110
      %p113 = scmp.ne.s32.totalorder %s98, %s112
      %p114 = scmp.eq.s32.totalorder %s25, 0
      %p115 = por %p113, %p114
      %s117 = sadd.s32 %s116, 1
      %p120 = scmp.eq.s32.totalorder %s19, 1
      %p121 = scmp.ne.s32.totalorder %s116, %s118
      %p122 = scmp.eq.s32.totalorder %s19, 0
      %p123 = por %p121, %p122
      %p124 = scmp.ne.s32.totalorder %s116, %s118
      %p125 = scmp.eq.s32.totalorder %s24, 1
      %p126 = por %p124, %p125
      %p127 = scmp.ne.s32.totalorder %s118, %s119
      %p128 = scmp.eq.s32.totalorder %s24, 0
      %p129 = por %p127, %p128
      %p130 = scmp.ne.s32.totalorder %s118, %s119
      %p131 = scmp.eq.s32.totalorder %s25, 1
      %p132 = por %p130, %p131
      %p134 = scmp.ne.s32.totalorder %s119, %s133
      %p135 = scmp.eq.s32.totalorder %s25, 0
      %p136 = por %p134, %p135
      %s138 = sadd.s32 %s137, 1
      %p141 = scmp.eq.s32.totalorder %s19, 1
      %p142 = scmp.ne.s32.totalorder %s137, %s139
      %p143 = scmp.eq.s32.totalorder %s19, 0
      %p144 = por %p142, %p143
      %p145 = scmp.ne.s32.totalorder %s137, %s139
      %p146 = scmp.eq.s32.totalorder %s24, 1
      %p147 = por %p145, %p146
      %p148 = scmp.ne.s32.totalorder %s139, %s140
      %p149 = scmp.eq.s32.totalorder %s24, 0
      %p150 = por %p148, %p149
      %p151 = scmp.ne.s32.totalorder %s139, %s140
      %p152 = scmp.eq.s32.totalorder %s25, 1
      %p153 = por %p151, %p152
      %p155 = scmp.ne.s32.totalorder %s140, %s154
      %p156 = scmp.eq.s32.totalorder %s25, 0
      %p157 = por %p155, %p156
      %s159 = sadd.s32 %s158, 1
      %p162 = scmp.eq.s32.totalorder %s19, 1
      %p163 = scmp.ne.s32.totalorder %s158, %s160
      %p164 = scmp.eq.s32.totalorder %s19, 0
      %p165 = por %p163, %p164
      %p166 = scmp.ne.s32.totalorder %s158, %s160
      %p167 = scmp.eq.s32.totalorder %s24, 1
      %p168 = por %p166, %p167
      %p169 = scmp.ne.s32.totalorder %s160, %s161
      %p170 = scmp.eq.s32.totalorder %s24, 0
      %p171 = por %p169, %p170
      %p172 = scmp.ne.s32.totalorder %s160, %s161
      %p173 = scmp.eq.s32.totalorder %s25, 1
      %p174 = por %p172, %p173
      %p176 = scmp.ne.s32.totalorder %s161, %s175
      %p177 = scmp.eq.s32.totalorder %s25, 0
      %p178 = por %p176, %p177
      %s180 = sadd.s32 %s179, 1
      %p183 = scmp.eq.s32.totalorder %s19, 1
      %p184 = scmp.ne.s32.totalorder %s179, %s181
      %p185 = scmp.eq.s32.totalorder %s19, 0
      %p186 = por %p184, %p185
      %p187 = scmp.ne.s32.totalorder %s179, %s181
      %p188 = scmp.eq.s32.totalorder %s24, 1
      %p189 = por %p187, %p188
      %p190 = scmp.ne.s32.totalorder %s181, %s182
      %p191 = scmp.eq.s32.totalorder %s24, 0
      %p192 = por %p190, %p191
      %p193 = scmp.ne.s32.totalorder %s181, %s182
      %p194 = scmp.eq.s32.totalorder %s25, 1
      %p195 = por %p193, %p194
      %p197 = scmp.ne.s32.totalorder %s182, %s196
      %p198 = scmp.eq.s32.totalorder %s25, 0
      %p199 = por %p197, %p198
      %s201 = sadd.s32 %s200, 1
      %p204 = scmp.eq.s32.totalorder %s19, 1
      %p205 = scmp.ne.s32.totalorder %s200, %s202
      %p206 = scmp.eq.s32.totalorder %s19, 0
      %p207 = por %p205, %p206
      %p208 = scmp.ne.s32.totalorder %s200, %s202
      %p209 = scmp.eq.s32.totalorder %s24, 1
      %p210 = por %p208, %p209
      %p211 = scmp.ne.s32.totalorder %s202, %s203
      %p212 = scmp.eq.s32.totalorder %s24, 0
      %p213 = por %p211, %p212
      %p214 = scmp.ne.s32.totalorder %s202, %s203
      %p215 = scmp.eq.s32.totalorder %s25, 1
      %p216 = por %p214, %p215
      %p218 = scmp.ne.s32.totalorder %s203, %s217
      %p219 = scmp.eq.s32.totalorder %s25, 0
      %p220 = por %p218, %p219
      %s222 = sadd.s32 %s221, 1
      %p225 = scmp.eq.s32.totalorder %s19, 1
      %p226 = scmp.ne.s32.totalorder %s221, %s223
      %p227 = scmp.eq.s32.totalorder %s19, 0
      %p228 = por %p226, %p227
      %p229 = scmp.ne.s32.totalorder %s221, %s223
      %p230 = scmp.eq.s32.totalorder %s24, 1
      %p231 = por %p229, %p230
      %p232 = scmp.ne.s32.totalorder %s223, %s224
      %p233 = scmp.eq.s32.totalorder %s24, 0
      %p234 = por %p232, %p233
      %p235 = scmp.ne.s32.totalorder %s223, %s224
      %p236 = scmp.eq.s32.totalorder %s25, 1
      %p237 = por %p235, %p236
      %p239 = scmp.ne.s32.totalorder %s224, %s238
      %p240 = scmp.eq.s32.totalorder %s25, 0
      %p241 = por %p239, %p240
      %s242 = ssub.s32 %s19, %s26
      %p243 = scmp.eq.s32.totalorder %s242, 0
      %s245 = sadd.s32 %s244, 1
      %s246 = scalar_select %p243, %s244, %s245
      %p249 = pneg %p243
      %p250 = scmp.eq.s32.totalorder %s19, 1
      %p251 = por %p249, %p250
      %p252 = scmp.ne.s32.totalorder %s244, %s247
      %p253 = scmp.eq.s32.totalorder %s19, 0
      %p254 = por %p252, %p253
      %p255 = scmp.ne.s32.totalorder %s244, %s247
      %p256 = scmp.eq.s32.totalorder %s24, 1
      %p257 = por %p255, %p256
      %p258 = scmp.ne.s32.totalorder %s247, %s248
      %p259 = scmp.eq.s32.totalorder %s24, 0
      %p260 = por %p258, %p259
      %p261 = scmp.ne.s32.totalorder %s247, %s248
      %p262 = scmp.eq.s32.totalorder %s25, 1
      %p263 = por %p261, %p262
      %p265 = scmp.ne.s32.totalorder %s248, %s264
      %p266 = scmp.eq.s32.totalorder %s25, 0
      %p267 = por %p265, %p266
      %p268 = scmp.le.s32.totalorder 1, %s19
      %p269 = scmp.lt.s32.totalorder %s19, 3
      %p270 = pnand %p268, %p269
      %p271 = pneg %p270
      // Predicated region
      $region9: #{s4model_forward.1} parent=5 // pred_check
        _
      $region10: #{s4model_forward.1} parent=5 // pred_check_branch
        %273 = sbr.rel (%p270) target = $region12
      $region11: #{s4model_forward.1} parent=5 // pred_region
        %s274 = ssub.s32 %s19, 1
        // Predicated region
        $region13: #{s4model_forward.1} parent=11 // pred_check
          %p275 = pneg %p66
        $region14: #{s4model_forward.1} parent=11 // pred_check_branch
          %277 = sbr.rel (%p275) target = $region16
        $region15: #{s4model_forward.1} parent=11 // pred_region
          _
        $region16: #{s4model_forward.1} parent=11 // pred_fallthru
          _
        // Predicated region
        $region17: #{s4model_forward.1} parent=11 // pred_check
          %p278 = pneg %p87
        $region18: #{s4model_forward.1} parent=11 // pred_check_branch
          %280 = sbr.rel (%p278) target = $region20
        $region19: #{s4model_forward.1} parent=11 // pred_region
          _
        $region20: #{s4model_forward.1} parent=11 // pred_fallthru
          _
        // Predicated region
        $region21: #{s4model_forward.1} parent=11 // pred_check
          %p281 = pneg %p108
        $region22: #{s4model_forward.1} parent=11 // pred_check_branch
          %283 = sbr.rel (%p281) target = $region24
        $region23: #{s4model_forward.1} parent=11 // pred_region
          _
        $region24: #{s4model_forward.1} parent=11 // pred_fallthru
          _
        // Predicated region
        $region25: #{s4model_forward.1} parent=11 // pred_check
          %p284 = pneg %p129
        $region26: #{s4model_forward.1} parent=11 // pred_check_branch
          %286 = sbr.rel (%p284) target = $region28
        $region27: #{s4model_forward.1} parent=11 // pred_region
          _
        $region28: #{s4model_forward.1} parent=11 // pred_fallthru
          _
        // Predicated region
        $region29: #{s4model_forward.1} parent=11 // pred_check
          %p287 = pneg %p150
        $region30: #{s4model_forward.1} parent=11 // pred_check_branch
          %289 = sbr.rel (%p287) target = $region32
        $region31: #{s4model_forward.1} parent=11 // pred_region
          _
        $region32: #{s4model_forward.1} parent=11 // pred_fallthru
          _
        // Predicated region
        $region33: #{s4model_forward.1} parent=11 // pred_check
          %p290 = pneg %p171
        $region34: #{s4model_forward.1} parent=11 // pred_check_branch
          %292 = sbr.rel (%p290) target = $region36
        $region35: #{s4model_forward.1} parent=11 // pred_region
          _
        $region36: #{s4model_forward.1} parent=11 // pred_fallthru
          _
        // Predicated region
        $region37: #{s4model_forward.1} parent=11 // pred_check
          %p293 = pneg %p192
        $region38: #{s4model_forward.1} parent=11 // pred_check_branch
          %295 = sbr.rel (%p293) target = $region40
        $region39: #{s4model_forward.1} parent=11 // pred_region
          _
        $region40: #{s4model_forward.1} parent=11 // pred_fallthru
          _
        // Predicated region
        $region41: #{s4model_forward.1} parent=11 // pred_check
          %p296 = pneg %p213
        $region42: #{s4model_forward.1} parent=11 // pred_check_branch
          %298 = sbr.rel (%p296) target = $region44
        $region43: #{s4model_forward.1} parent=11 // pred_region
          _
        $region44: #{s4model_forward.1} parent=11 // pred_fallthru
          _
        // Predicated region
        $region45: #{s4model_forward.1} parent=11 // pred_check
          %p299 = pneg %p234
        $region46: #{s4model_forward.1} parent=11 // pred_check_branch
          %301 = sbr.rel (%p299) target = $region48
        $region47: #{s4model_forward.1} parent=11 // pred_region
          _
        $region48: #{s4model_forward.1} parent=11 // pred_fallthru
          _
      $region12: #{s4model_forward.1} parent=5 // pred_fallthru
        _
      %p302 = scmp.lt.s32.totalorder %s19, 2
      // Predicated region
      $region49: #{s4model_forward.1} parent=5 // pred_check
        %p303 = pneg %p302
      $region50: #{s4model_forward.1} parent=5 // pred_check_branch
        %305 = sbr.rel (%p303) target = $region52
      $region51: #{s4model_forward.1} parent=5 // pred_region
        // Predicated region
        $region53: #{s4model_forward.1} parent=51 // pred_check
          %p306 = pneg %p39
        $region54: #{s4model_forward.1} parent=51 // pred_check_branch
          %308 = sbr.rel (%p306) target = $region56
        $region55: #{s4model_forward.1} parent=51 // pred_region
          %p309 = scmp.lt.s32.totalorder %s19, 1
          %s310 = scalar_select %p309, %s19, 1
          %s311 = smul.addr %s310, 2
          %s312 = smul.addr %s311, 8
          %s313 = scalar_lea.vmem %s0, %s312
        $region56: #{s4model_forward.1} parent=51 // pred_fallthru
          _
      $region52: #{s4model_forward.1} parent=5 // pred_fallthru
        _
      %p314 = scmp.le.s32.totalorder 1, %s19
      %p315 = scmp.lt.s32.totalorder %s19, 3
      %p316 = pnand %p314, %p315
      %p317 = pneg %p316
      // Predicated region
      $region57: #{s4model_forward.1} parent=5 // pred_check
        _
      $region58: #{s4model_forward.1} parent=5 // pred_check_branch
        %319 = sbr.rel (%p316) target = $region60
      $region59: #{s4model_forward.1} parent=5 // pred_region
        %s320 = ssub.s32 %s19, 1
        %p321 = scmp.lt.s32.totalorder %s24, 1
        %s322 = scalar_select %p321, %s24, 1
        %s323 = smul.addr %s322, 2
        %s324 = smul.addr %s323, 8
        %s325 = scalar_lea.vmem %s0, %s324
        %p326 = pneg %p45
        %p327 = pneg %p42
        %p328 = pneg %p66
        %p329 = pneg %p63
        %p330 = pneg %p87
        %p331 = pneg %p84
        %p332 = pneg %p108
        %p333 = pneg %p105
        %p334 = pneg %p129
        %p335 = pneg %p126
        %p336 = pneg %p150
        %p337 = pneg %p147
        %p338 = pneg %p171
        %p339 = pneg %p168
        %p340 = pneg %p192
        %p341 = pneg %p189
        %p342 = pneg %p213
        %p343 = pneg %p210
        %p344 = pneg %p234
        %p345 = pneg %p231
        %p346 = pneg %p260
        %p347 = pneg %p257
        %s348 = sand.u32 %s247, 1
        %s349 = scalar_lea.sflag [#allocation4], %s348
        %s350 = sand.u32 %s247, 1
        %s351 = scalar_lea.vmem [#allocation3], %s350
        %p352 = scmp.lt.s32.totalorder %s24, 1
        %s353 = scalar_select %p352, %s24, 1
        %s354 = smul.addr %s353, 2
        %s355 = smul.addr %s354, 8
        %s356 = scalar_lea.vmem %s0, %s355
        %v357 = vld [vmem:[%s356] sm:$0xff]
        %v358 = vld [vmem:[%s356 + $0x8] sm:$0xff]
        %v359 = vld [vmem:[%s1] sm:$0xff]
        %v360 = vld [vmem:[%s1 + $0x8] sm:$0xf]
        %v361 = vld [vmem:[%s2] sm:$0x1]
        %v363 = vperm.slane %v361, 0
        %vm365 = vcmask 97280
        %v367 = vsel %vm365, %v357, 0
        %v370 = vsel %vm365, %v358, 0
        %vm372 = vcmask 1043456
        %v374 = vsel %vm372, %v360, 0
        %376 = vmatpush.msra.mxu0 0.0
        %377 = vmatpush.msra.mxu0 0.0
        %378 = vmatpush.msra.mxu0 0.0
        %379 = vmatpush.msra.mxu0 0.0
        %380 = vmatpush.msra.mxu0 0.0
        %381 = vmatpush.msra.mxu0 0.0
        %382 = vmatpush.msra.mxu0 0.0
        %383 = vmatpush.msra.mxu0 0.0
        %384 = vmatpush.msra.mxu0 0.0
        %385 = vmatpush.msra.mxu0 0.0
        %386 = vmatpush.msra.mxu0 0.0
        %387 = vmatpush.msra.mxu0 0.0
        %388 = vmatpush.msra.mxu0 0.0
        %389 = vmatpush.msra.mxu0 0.0
        %390 = vmatpush.msra.mxu0 %v374
        %391 = vmatpush.msra.mxu0 %v359
        %392 = vmatmul.f32.gmra.mxu0 %v367
        %v393 = vpop.f32.mrf.mxu0
        %v394 = vadd.f32 %v363, %v393
        %395 = vmatmul.f32.gmra.mxu0 %v370
        %v396 = vpop.f32.mrf.mxu0
        %v397 = vadd.f32 %v363, %v396
        %398 = vdwg.mxu0
        %vm399 = vcmask 523264
        %400 = vst.msk [vmem:[#allocation2] sm:$0xff] %vm399, %v394
        %401 = vst.msk [vmem:[#allocation2 + $0x8] sm:$0xff] %vm399, %v397
        %v402 = vld [vmem:[%s3] sm:$0xff]
        %v403 = vld [vmem:[%s3 + $0x8] sm:$0xff]
        %v404 = vld [vmem:[#allocation2] sm:$0x1]
        %v405 = vperm.slane %v404, 0
        %v406 = vmul.f32 %v402, %v405
        %v407 = vmul.f32 %v403, %v405
        %s408 = scalar_lea.vmem %s3, 16
        %v409 = vld [vmem:[%s408] sm:$0xff]
        %v410 = vld [vmem:[%s408 + $0x8] sm:$0xff]
        %v411 = vld [vmem:[#allocation2 + $0x1] sm:$0x1]
        %v412 = vperm.slane %v411, 0
        %v413 = vmul.f32 %v409, %v412
        %v414 = vmul.f32 %v410, %v412
        %s415 = scalar_lea.vmem %s3, 32
        %v416 = vld [vmem:[%s415] sm:$0xff]
        %v417 = vld [vmem:[%s415 + $0x8] sm:$0xff]
        %v418 = vld [vmem:[#allocation2 + $0x2] sm:$0x1]
        %v419 = vperm.slane %v418, 0
        %v420 = vmul.f32 %v416, %v419
        %v421 = vmul.f32 %v417, %v419
        %s422 = scalar_lea.vmem %s3, 48
        %v423 = vld [vmem:[%s422] sm:$0xff]
        %v424 = vld [vmem:[%s422 + $0x8] sm:$0xff]
        %v425 = vld [vmem:[#allocation2 + $0x3] sm:$0x1]
        %v426 = vperm.slane %v425, 0
        %v427 = vmul.f32 %v423, %v426
        %v428 = vmul.f32 %v424, %v426
        %s429 = scalar_lea.vmem %s3, 64
        %v430 = vld [vmem:[%s429] sm:$0xff]
        %v431 = vld [vmem:[%s429 + $0x8] sm:$0xff]
        %v432 = vld [vmem:[#allocation2 + $0x4] sm:$0x1]
        %v433 = vperm.slane %v432, 0
        %v434 = vmul.f32 %v430, %v433
        %v435 = vmul.f32 %v431, %v433
        %v436 = vadd.f32 %v406, %v434
        %v437 = vadd.f32 %v407, %v435
        %s438 = scalar_lea.vmem %s3, 80
        %v439 = vld [vmem:[%s438] sm:$0xff]
        %v440 = vld [vmem:[%s438 + $0x8] sm:$0xff]
        %v441 = vld [vmem:[#allocation2 + $0x5] sm:$0x1]
        %v442 = vperm.slane %v441, 0
        %v443 = vmul.f32 %v439, %v442
        %v444 = vmul.f32 %v440, %v442
        %v445 = vadd.f32 %v413, %v443
        %v446 = vadd.f32 %v414, %v444
        %s447 = scalar_lea.vmem %s3, 96
        %v448 = vld [vmem:[%s447] sm:$0xff]
        %v449 = vld [vmem:[%s447 + $0x8] sm:$0xff]
        %v450 = vld [vmem:[#allocation2 + $0x6] sm:$0x1]
        %v451 = vperm.slane %v450, 0
        %v452 = vmul.f32 %v448, %v451
        %v453 = vmul.f32 %v449, %v451
        %v454 = vadd.f32 %v420, %v452
        %v455 = vadd.f32 %v421, %v453
        %s456 = scalar_lea.vmem %s3, 112
        %v457 = vld [vmem:[%s456] sm:$0xff]
        %v458 = vld [vmem:[%s456 + $0x8] sm:$0xff]
        %v459 = vld [vmem:[#allocation2 + $0x7] sm:$0x1]
        %v460 = vperm.slane %v459, 0
        %v461 = vmul.f32 %v457, %v460
        %v462 = vmul.f32 %v458, %v460
        %v463 = vadd.f32 %v427, %v461
        %v464 = vadd.f32 %v428, %v462
        %s465 = scalar_lea.vmem %s3, 128
        %v466 = vld [vmem:[%s465] sm:$0xff]
        %v467 = vld [vmem:[%s465 + $0x8] sm:$0xff]
        %v468 = vld [vmem:[#allocation2 + $0x8] sm:$0x1]
        %v469 = vperm.slane %v468, 0
        %v470 = vmul.f32 %v466, %v469
        %v471 = vmul.f32 %v467, %v469
        %v472 = vadd.f32 %v436, %v470
        %v473 = vadd.f32 %v437, %v471
        %s474 = scalar_lea.vmem %s3, 144
        %v475 = vld [vmem:[%s474] sm:$0xff]
        %v476 = vld [vmem:[%s474 + $0x8] sm:$0xff]
        %v477 = vld [vmem:[#allocation2 + $0x9] sm:$0x1]
        %v478 = vperm.slane %v477, 0
        %v479 = vmul.f32 %v475, %v478
        %v480 = vmul.f32 %v476, %v478
        %v481 = vadd.f32 %v445, %v479
        %v482 = vadd.f32 %v446, %v480
        %s483 = scalar_lea.vmem %s3, 160
        %v484 = vld [vmem:[%s483] sm:$0xff]
        %v485 = vld [vmem:[%s483 + $0x8] sm:$0xff]
        %v486 = vld [vmem:[#allocation2 + $0xa] sm:$0x1]
        %v487 = vperm.slane %v486, 0
        %v488 = vmul.f32 %v484, %v487
        %v489 = vmul.f32 %v485, %v487
        %v490 = vadd.f32 %v454, %v488
        %v491 = vadd.f32 %v455, %v489
        %s492 = scalar_lea.vmem %s3, 176
        %v493 = vld [vmem:[%s492] sm:$0xff]
        %v494 = vld [vmem:[%s492 + $0x8] sm:$0xff]
        %v495 = vld [vmem:[#allocation2 + $0xb] sm:$0x1]
        %v496 = vperm.slane %v495, 0
        %v497 = vmul.f32 %v493, %v496
        %v498 = vmul.f32 %v494, %v496
        %v499 = vadd.f32 %v463, %v497
        %v500 = vadd.f32 %v464, %v498
        %s501 = scalar_lea.vmem %s3, 192
        %v502 = vld [vmem:[%s501] sm:$0xff]
        %v503 = vld [vmem:[%s501 + $0x8] sm:$0xff]
        %v504 = vld [vmem:[#allocation2 + $0xc] sm:$0x1]
        %v505 = vperm.slane %v504, 0
        %v506 = vmul.f32 %v502, %v505
        %v507 = vmul.f32 %v503, %v505
        %v508 = vadd.f32 %v472, %v506
        %v509 = vadd.f32 %v473, %v507
        %s510 = scalar_lea.vmem %s3, 208
        %v511 = vld [vmem:[%s510] sm:$0xff]
        %v512 = vld [vmem:[%s510 + $0x8] sm:$0xff]
        %v513 = vld [vmem:[#allocation2 + $0xd] sm:$0x1]
        %v514 = vperm.slane %v513, 0
        %v515 = vmul.f32 %v511, %v514
        %v516 = vmul.f32 %v512, %v514
        %v517 = vadd.f32 %v481, %v515
        %v518 = vadd.f32 %v482, %v516
        %s519 = scalar_lea.vmem %s3, 224
        %v520 = vld [vmem:[%s519] sm:$0xff]
        %v521 = vld [vmem:[%s519 + $0x8] sm:$0xff]
        %v522 = vld [vmem:[#allocation2 + $0xe] sm:$0x1]
        %v523 = vperm.slane %v522, 0
        %v524 = vmul.f32 %v520, %v523
        %v525 = vmul.f32 %v521, %v523
        %v526 = vadd.f32 %v490, %v524
        %v527 = vadd.f32 %v491, %v525
        %s528 = scalar_lea.vmem %s3, 240
        %v529 = vld [vmem:[%s528] sm:$0xff]
        %v530 = vld [vmem:[%s528 + $0x8] sm:$0xff]
        %v531 = vld [vmem:[#allocation2 + $0xf] sm:$0x1]
        %v532 = vperm.slane %v531, 0
        %v533 = vmul.f32 %v529, %v532
        %v534 = vmul.f32 %v530, %v532
        %v535 = vadd.f32 %v499, %v533
        %v536 = vadd.f32 %v500, %v534
        %v537 = vadd.f32 %v508, %v517
        %v538 = vadd.f32 %v509, %v518
        %v539 = vadd.f32 %v526, %v535
        %v540 = vadd.f32 %v527, %v536
        %v541 = vadd.f32 %v537, %v539
        %v542 = vadd.f32 %v538, %v540
        %v543 = vmul.f32 %v541, 0.5
        %v544 = vmul.f32 %v542, 0.5
        %v545 = vmul.f32 %v541, 0.70710677
        %v546 = vmul.f32 %v542, 0.70710677
        %v547 = vand.u32 2147483647, %v545
        %v548 = vand.u32 2147483647, %v546
        %v549 = vmul.f32 %v547, 0.3275911
        %v550 = vmul.f32 %v548, 0.3275911
        %v551 = vadd.f32 %v549, 1.0
        %v552 = vadd.f32 %v550, 1.0
        %v553 = vrcp.pop %v551
        %v554 = vmul.f32 %v551, %v553
        %v555 = vsub.f32 1.0, %v554
        %v556 = vmul.f32 %v553, %v555
        %v557 = vadd.f32 %v553, %v556
        %vm558 = vweird.f32 %v551
        %vm559 = vweird.f32 %v553
        %vm560 = vmor %vm558, %vm559
        %v561 = vsel %vm560, %v553, %v557
        %v562 = vand.u32 2147483647, %v551
        %vm563 = vcmp.eq.f32.partialorder %v562, 8.507059e+37
        %v564 = vand.u32 %v551, 2147483648
        %v565 = vor.u32 1.1754944e-38, %v564
        %v566 = vsel %vm563, %v565, %v561
        %v567 = vmul.f32 1.0, %v566
        %v568 = vrcp.pop %v552
        %v569 = vmul.f32 %v552, %v568
        %v570 = vsub.f32 1.0, %v569
        %v571 = vmul.f32 %v568, %v570
        %v572 = vadd.f32 %v568, %v571
        %vm573 = vweird.f32 %v552
        %vm574 = vweird.f32 %v568
        %vm575 = vmor %vm573, %vm574
        %v576 = vsel %vm575, %v568, %v572
        %v577 = vand.u32 2147483647, %v552
        %vm578 = vcmp.eq.f32.partialorder %v577, 8.507059e+37
        %v579 = vand.u32 %v552, 2147483648
        %v580 = vor.u32 1.1754944e-38, %v579
        %v581 = vsel %vm578, %v580, %v576
        %v582 = vmul.f32 1.0, %v581
        %v583 = vmul.f32 %v567, 1.0614054
        %v584 = vmul.f32 %v582, 1.0614054
        %v585 = vadd.f32 %v583, -1.4531521
        %v586 = vadd.f32 %v584, -1.4531521
        %v587 = vmul.f32 %v567, %v585
        %v588 = vmul.f32 %v582, %v586
        %v589 = vadd.f32 %v587, 1.4214138
        %v590 = vadd.f32 %v588, 1.4214138
        %v591 = vmul.f32 %v567, %v589
        %v592 = vmul.f32 %v582, %v590
        %v593 = vadd.f32 %v591, -0.28449672
        %v594 = vadd.f32 %v592, -0.28449672
        %v595 = vmul.f32 %v567, %v593
        %v596 = vmul.f32 %v582, %v594
        %v597 = vadd.f32 %v595, 0.2548296
        %v598 = vadd.f32 %v596, 0.2548296
        %v599 = vmul.f32 %v567, %v597
        %v600 = vmul.f32 %v582, %v598
        %v601 = vsub.f32 0.0, %v547
        %v602 = vsub.f32 0.0, %v548
        %v603 = vmul.f32 %v601, %v547
        %v604 = vmul.f32 %v602, %v548
        %v605 = vmul.f32 %v603, 1.442695
        %v606 = vpow.pop %v605
        %v607 = vmul.f32 %v604, 1.442695
        %v608 = vpow.pop %v607
        %v609 = vmul.f32 %v599, %v606
        %v610 = vmul.f32 %v600, %v608
        %v611 = vsub.f32 1.0, %v609
        %v612 = vsub.f32 1.0, %v610
        %vm613 = vcmp.ge.f32.partialorder %v545, 0.0
        %vm614 = vcmp.ge.f32.partialorder %v546, 0.0
        %v615 = vsub.f32 0.0, %v611
        %v616 = vsub.f32 0.0, %v612
        %v617 = vsel %vm613, %v611, %v615
        %v618 = vsel %vm614, %v612, %v616
        %v619 = vadd.f32 %v617, 1.0
        %v620 = vadd.f32 %v618, 1.0
        %v621 = vmul.f32 %v543, %v619
        %v622 = vmul.f32 %v544, %v620
        %v623 = vld [vmem:[%s4] sm:$0xff]
        %v624 = vld [vmem:[%s4 + $0x8] sm:$0xff]
        %v625 = vld [vmem:[%s4 + $0x10] sm:$0xff]
        %v626 = vld [vmem:[%s4 + $0x18] sm:$0xff]
        %v627 = vld [vmem:[%s4 + $0x20] sm:$0xff]
        %v628 = vld [vmem:[%s4 + $0x28] sm:$0xff]
        %v629 = vld [vmem:[%s4 + $0x30] sm:$0xff]
        %v630 = vld [vmem:[%s4 + $0x38] sm:$0xff]
        %v631 = vld [vmem:[%s5] sm:$0x1]
        %v633 = vperm.slane %v631, 0
        %v636 = vsel %vm399, %v621, 0
        %v639 = vsel %vm399, %v622, 0
        %641 = vmatpush.msra.mxu0 0.0
        %642 = vmatpush.msra.mxu0 0.0
        %643 = vmatpush.msra.mxu0 0.0
        %644 = vmatpush.msra.mxu0 0.0
        %645 = vmatpush.msra.mxu0 0.0
        %646 = vmatpush.msra.mxu0 0.0
        %647 = vmatpush.msra.mxu0 0.0
        %648 = vmatpush.msra.mxu0 0.0
        %649 = vmatpush.msra.mxu0 %v630
        %650 = vmatpush.msra.mxu0 %v629
        %651 = vmatpush.msra.mxu0 %v628
        %652 = vmatpush.msra.mxu0 %v627
        %653 = vmatpush.msra.mxu0 %v626
        %654 = vmatpush.msra.mxu0 %v625
        %655 = vmatpush.msra.mxu0 %v624
        %656 = vmatpush.msra.mxu0 %v623
        %657 = vmatmul.f32.gmra.mxu0 %v636
        %v658 = vpop.f32.mrf.mxu0
        %v659 = vadd.f32 %v633, %v658
        %660 = vmatmul.f32.gmra.mxu0 %v639
        %v661 = vpop.f32.mrf.mxu0
        %v662 = vadd.f32 %v633, %v661
        %663 = vdwg.mxu0
        %v664 = vxor.u32 %v659, 2147483648
        %v665 = vxor.u32 %v662, 2147483648
        %v666 = vmul.f32 %v664, 1.442695
        %v667 = vpow.pop %v666
        %v668 = vmul.f32 %v665, 1.442695
        %v669 = vpow.pop %v668
        %v670 = vadd.f32 %v667, 1.0
        %v671 = vadd.f32 %v669, 1.0
        %v672 = vrcp.pop %v670
        %v673 = vmul.f32 %v670, %v672
        %v674 = vsub.f32 1.0, %v673
        %v675 = vmul.f32 %v672, %v674
        %v676 = vadd.f32 %v672, %v675
        %vm677 = vweird.f32 %v670
        %vm678 = vweird.f32 %v672
        %vm679 = vmor %vm677, %vm678
        %v680 = vsel %vm679, %v672, %v676
        %v681 = vand.u32 2147483647, %v670
        %vm682 = vcmp.eq.f32.partialorder %v681, 8.507059e+37
        %v683 = vand.u32 %v670, 2147483648
        %v684 = vor.u32 1.1754944e-38, %v683
        %v685 = vsel %vm682, %v684, %v680
        %v686 = vmul.f32 1.0, %v685
        %v687 = vrcp.pop %v671
        %v688 = vmul.f32 %v671, %v687
        %v689 = vsub.f32 1.0, %v688
        %v690 = vmul.f32 %v687, %v689
        %v691 = vadd.f32 %v687, %v690
        %vm692 = vweird.f32 %v671
        %vm693 = vweird.f32 %v687
        %vm694 = vmor %vm692, %vm693
        %v695 = vsel %vm694, %v687, %v691
        %v696 = vand.u32 2147483647, %v671
        %vm697 = vcmp.eq.f32.partialorder %v696, 8.507059e+37
        %v698 = vand.u32 %v671, 2147483648
        %v699 = vor.u32 1.1754944e-38, %v698
        %v700 = vsel %vm697, %v699, %v695
        %v701 = vmul.f32 1.0, %v700
        %704 = vrot.lane.b32.xlu0 %v686, 64
        %v705 = vpop.permute.xlu0 %704
        %706 = vrot.lane.b32.xlu0 %v701, 64
        %v707 = vpop.permute.xlu0 %706
        %v710 = vmul.f32 %v659, %v705
        %v711 = vmul.f32 %v662, %v707
        %v712 = vadd.f32 %v710, %v394
        %v713 = vadd.f32 %v711, %v397
        %v714 = vsel %vm399, %v712, 0.0
        %715 = vadd.xlane.f32.xlu0 %v714
        %v716 = vpop.xlane.xlu0 %715
        %v717 = vsel %vm399, %v713, 0.0
        %718 = vadd.xlane.f32.xlu0 %v717
        %v719 = vpop.xlane.xlu0 %718
        %v720 = vrcp.pop 64.0
        %v721 = vmul.f32 64.0, %v720
        %v722 = vsub.f32 1.0, %v721
        %v723 = vmul.f32 %v720, %v722
        %v724 = vadd.f32 %v720, %v723
        %vm725 = vweird.f32 %v720
        %v726 = vsel %vm725, %v720, %v724
        %v727 = vmul.f32 %v716, %v726
        %v728 = vmul.f32 %v719, %v726
        %v729 = vmul.f32 %v712, %v712
        %v730 = vmul.f32 %v713, %v713
        %v731 = vsel %vm399, %v729, 0.0
        %732 = vadd.xlane.f32.xlu0 %v731
        %v733 = vpop.xlane.xlu0 %732
        %v734 = vsel %vm399, %v730, 0.0
        %735 = vadd.xlane.f32.xlu0 %v734
        %v736 = vpop.xlane.xlu0 %735
        %v737 = vmul.f32 %v733, %v726
        %v738 = vmul.f32 %v736, %v726
        %v739 = vmul.f32 %v727, %v727
        %v740 = vmul.f32 %v728, %v728
        %v741 = vsub.f32 %v737, %v739
        %v742 = vsub.f32 %v738, %v740
        %v743 = vsub.f32 %v712, %v727
        %v744 = vsub.f32 %v713, %v728
        %v745 = vadd.f32 %v741, 1e-05
        %v746 = vadd.f32 %v742, 1e-05
        %v747 = vrsqrt.pop %v745
        %v748 = vmul.f32 %v747, %v745
        %v749 = vmul.f32 %v748, %v747
        %v750 = vmul.f32 0.5, %v749
        %v751 = vsub.f32 1.5, %v750
        %v752 = vmul.f32 %v747, %v751
        %vm753 = vweird.f32 %v745
        %vm754 = vweird.f32 %v747
        %vm755 = vmor %vm753, %vm754
        %v756 = vsel %vm755, %v747, %v752
        %v757 = vrsqrt.pop %v746
        %v758 = vmul.f32 %v757, %v746
        %v759 = vmul.f32 %v758, %v757
        %v760 = vmul.f32 0.5, %v759
        %v761 = vsub.f32 1.5, %v760
        %v762 = vmul.f32 %v757, %v761
        %vm763 = vweird.f32 %v746
        %vm764 = vweird.f32 %v757
        %vm765 = vmor %vm763, %vm764
        %v766 = vsel %vm765, %v757, %v762
        %v767 = vmul.f32 %v743, %v756
        %v768 = vmul.f32 %v744, %v766
        %v769 = vld [vmem:[%s6] sm:$0x1]
        %v771 = vperm.slane %v769, 0
        %v773 = vmul.f32 %v767, %v771
        %v774 = vmul.f32 %v768, %v771
        %v775 = vld [vmem:[%s7] sm:$0x1]
        %v777 = vperm.slane %v775, 0
        %v779 = vadd.f32 %v773, %v777
        %v780 = vadd.f32 %v774, %v777
        %781 = vst.msk [vmem:[#allocation2] sm:$0xff] %vm399, %v779
        %782 = vst.msk [vmem:[#allocation2 + $0x8] sm:$0xff] %vm399, %v780
        %s783 = scalar_lea.vmem %s3, 256
        %v784 = vld [vmem:[%s783] sm:$0xff]
        %v785 = vld [vmem:[%s783 + $0x8] sm:$0xff]
        %v786 = vld [vmem:[#allocation2] sm:$0x1]
        %v787 = vperm.slane %v786, 0
        %v788 = vmul.f32 %v784, %v787
        %v789 = vmul.f32 %v785, %v787
        %s790 = scalar_lea.vmem %s3, 272
        %v791 = vld [vmem:[%s790] sm:$0xff]
        %v792 = vld [vmem:[%s790 + $0x8] sm:$0xff]
        %v793 = vld [vmem:[#allocation2 + $0x1] sm:$0x1]
        %v794 = vperm.slane %v793, 0
        %v795 = vmul.f32 %v791, %v794
        %v796 = vmul.f32 %v792, %v794
        %s797 = scalar_lea.vmem %s3, 288
        %v798 = vld [vmem:[%s797] sm:$0xff]
        %v799 = vld [vmem:[%s797 + $0x8] sm:$0xff]
        %v800 = vld [vmem:[#allocation2 + $0x2] sm:$0x1]
        %v801 = vperm.slane %v800, 0
        %v802 = vmul.f32 %v798, %v801
        %v803 = vmul.f32 %v799, %v801
        %s804 = scalar_lea.vmem %s3, 304
        %v805 = vld [vmem:[%s804] sm:$0xff]
        %v806 = vld [vmem:[%s804 + $0x8] sm:$0xff]
        %v807 = vld [vmem:[#allocation2 + $0x3] sm:$0x1]
        %v808 = vperm.slane %v807, 0
        %v809 = vmul.f32 %v805, %v808
        %v810 = vmul.f32 %v806, %v808
        %s811 = scalar_lea.vmem %s3, 320
        %v812 = vld [vmem:[%s811] sm:$0xff]
        %v813 = vld [vmem:[%s811 + $0x8] sm:$0xff]
        %v814 = vld [vmem:[#allocation2 + $0x4] sm:$0x1]
        %v815 = vperm.slane %v814, 0
        %v816 = vmul.f32 %v812, %v815
        %v817 = vmul.f32 %v813, %v815
        %v818 = vadd.f32 %v788, %v816
        %v819 = vadd.f32 %v789, %v817
        %s820 = scalar_lea.vmem %s3, 336
        %v821 = vld [vmem:[%s820] sm:$0xff]
        %v822 = vld [vmem:[%s820 + $0x8] sm:$0xff]
        %v823 = vld [vmem:[#allocation2 + $0x5] sm:$0x1]
        %v824 = vperm.slane %v823, 0
        %v825 = vmul.f32 %v821, %v824
        %v826 = vmul.f32 %v822, %v824
        %v827 = vadd.f32 %v795, %v825
        %v828 = vadd.f32 %v796, %v826
        %s829 = scalar_lea.vmem %s3, 352
        %v830 = vld [vmem:[%s829] sm:$0xff]
        %v831 = vld [vmem:[%s829 + $0x8] sm:$0xff]
        %v832 = vld [vmem:[#allocation2 + $0x6] sm:$0x1]
        %v833 = vperm.slane %v832, 0
        %v834 = vmul.f32 %v830, %v833
        %v835 = vmul.f32 %v831, %v833
        %v836 = vadd.f32 %v802, %v834
        %v837 = vadd.f32 %v803, %v835
        %s838 = scalar_lea.vmem %s3, 368
        %v839 = vld [vmem:[%s838] sm:$0xff]
        %v840 = vld [vmem:[%s838 + $0x8] sm:$0xff]
        %v841 = vld [vmem:[#allocation2 + $0x7] sm:$0x1]
        %v842 = vperm.slane %v841, 0
        %v843 = vmul.f32 %v839, %v842
        %v844 = vmul.f32 %v840, %v842
        %v845 = vadd.f32 %v809, %v843
        %v846 = vadd.f32 %v810, %v844
        %s847 = scalar_lea.vmem %s3, 384
        %v848 = vld [vmem:[%s847] sm:$0xff]
        %v849 = vld [vmem:[%s847 + $0x8] sm:$0xff]
        %v850 = vld [vmem:[#allocation2 + $0x8] sm:$0x1]
        %v851 = vperm.slane %v850, 0
        %v852 = vmul.f32 %v848, %v851
        %v853 = vmul.f32 %v849, %v851
        %v854 = vadd.f32 %v818, %v852
        %v855 = vadd.f32 %v819, %v853
        %s856 = scalar_lea.vmem %s3, 400
        %v857 = vld [vmem:[%s856] sm:$0xff]
        %v858 = vld [vmem:[%s856 + $0x8] sm:$0xff]
        %v859 = vld [vmem:[#allocation2 + $0x9] sm:$0x1]
        %v860 = vperm.slane %v859, 0
        %v861 = vmul.f32 %v857, %v860
        %v862 = vmul.f32 %v858, %v860
        %v863 = vadd.f32 %v827, %v861
        %v864 = vadd.f32 %v828, %v862
        %s865 = scalar_lea.vmem %s3, 416
        %v866 = vld [vmem:[%s865] sm:$0xff]
        %v867 = vld [vmem:[%s865 + $0x8] sm:$0xff]
        %v868 = vld [vmem:[#allocation2 + $0xa] sm:$0x1]
        %v869 = vperm.slane %v868, 0
        %v870 = vmul.f32 %v866, %v869
        %v871 = vmul.f32 %v867, %v869
        %v872 = vadd.f32 %v836, %v870
        %v873 = vadd.f32 %v837, %v871
        %s874 = scalar_lea.vmem %s3, 432
        %v875 = vld [vmem:[%s874] sm:$0xff]
        %v876 = vld [vmem:[%s874 + $0x8] sm:$0xff]
        %v877 = vld [vmem:[#allocation2 + $0xb] sm:$0x1]
        %v878 = vperm.slane %v877, 0
        %v879 = vmul.f32 %v875, %v878
        %v880 = vmul.f32 %v876, %v878
        %v881 = vadd.f32 %v845, %v879
        %v882 = vadd.f32 %v846, %v880
        %s883 = scalar_lea.vmem %s3, 448
        %v884 = vld [vmem:[%s883] sm:$0xff]
        %v885 = vld [vmem:[%s883 + $0x8] sm:$0xff]
        %v886 = vld [vmem:[#allocation2 + $0xc] sm:$0x1]
        %v887 = vperm.slane %v886, 0
        %v888 = vmul.f32 %v884, %v887
        %v889 = vmul.f32 %v885, %v887
        %v890 = vadd.f32 %v854, %v888
        %v891 = vadd.f32 %v855, %v889
        %s892 = scalar_lea.vmem %s3, 464
        %v893 = vld [vmem:[%s892] sm:$0xff]
        %v894 = vld [vmem:[%s892 + $0x8] sm:$0xff]
        %v895 = vld [vmem:[#allocation2 + $0xd] sm:$0x1]
        %v896 = vperm.slane %v895, 0
        %v897 = vmul.f32 %v893, %v896
        %v898 = vmul.f32 %v894, %v896
        %v899 = vadd.f32 %v863, %v897
        %v900 = vadd.f32 %v864, %v898
        %s901 = scalar_lea.vmem %s3, 480
        %v902 = vld [vmem:[%s901] sm:$0xff]
        %v903 = vld [vmem:[%s901 + $0x8] sm:$0xff]
        %v904 = vld [vmem:[#allocation2 + $0xe] sm:$0x1]
        %v905 = vperm.slane %v904, 0
        %v906 = vmul.f32 %v902, %v905
        %v907 = vmul.f32 %v903, %v905
        %v908 = vadd.f32 %v872, %v906
        %v909 = vadd.f32 %v873, %v907
        %s910 = scalar_lea.vmem %s3, 496
        %v911 = vld [vmem:[%s910] sm:$0xff]
        %v912 = vld [vmem:[%s910 + $0x8] sm:$0xff]
        %v913 = vld [vmem:[#allocation2 + $0xf] sm:$0x1]
        %v914 = vperm.slane %v913, 0
        %v915 = vmul.f32 %v911, %v914
        %v916 = vmul.f32 %v912, %v914
        %v917 = vadd.f32 %v881, %v915
        %v918 = vadd.f32 %v882, %v916
        %v919 = vadd.f32 %v890, %v899
        %v920 = vadd.f32 %v891, %v900
        %v921 = vadd.f32 %v908, %v917
        %v922 = vadd.f32 %v909, %v918
        %v923 = vadd.f32 %v919, %v921
        %v924 = vadd.f32 %v920, %v922
        %v925 = vmul.f32 %v923, 0.5
        %v926 = vmul.f32 %v924, 0.5
        %v927 = vmul.f32 %v923, 0.70710677
        %v928 = vmul.f32 %v924, 0.70710677
        %v929 = vand.u32 2147483647, %v927
        %v930 = vand.u32 2147483647, %v928
        %v931 = vmul.f32 %v929, 0.3275911
        %v932 = vmul.f32 %v930, 0.3275911
        %v933 = vadd.f32 %v931, 1.0
        %v934 = vadd.f32 %v932, 1.0
        %v935 = vrcp.pop %v933
        %v936 = vmul.f32 %v933, %v935
        %v937 = vsub.f32 1.0, %v936
        %v938 = vmul.f32 %v935, %v937
        %v939 = vadd.f32 %v935, %v938
        %vm940 = vweird.f32 %v933
        %vm941 = vweird.f32 %v935
        %vm942 = vmor %vm940, %vm941
        %v943 = vsel %vm942, %v935, %v939
        %v944 = vand.u32 2147483647, %v933
        %vm945 = vcmp.eq.f32.partialorder %v944, 8.507059e+37
        %v946 = vand.u32 %v933, 2147483648
        %v947 = vor.u32 1.1754944e-38, %v946
        %v948 = vsel %vm945, %v947, %v943
        %v949 = vmul.f32 1.0, %v948
        %v950 = vrcp.pop %v934
        %v951 = vmul.f32 %v934, %v950
        %v952 = vsub.f32 1.0, %v951
        %v953 = vmul.f32 %v950, %v952
        %v954 = vadd.f32 %v950, %v953
        %vm955 = vweird.f32 %v934
        %vm956 = vweird.f32 %v950
        %vm957 = vmor %vm955, %vm956
        %v958 = vsel %vm957, %v950, %v954
        %v959 = vand.u32 2147483647, %v934
        %vm960 = vcmp.eq.f32.partialorder %v959, 8.507059e+37
        %v961 = vand.u32 %v934, 2147483648
        %v962 = vor.u32 1.1754944e-38, %v961
        %v963 = vsel %vm960, %v962, %v958
        %v964 = vmul.f32 1.0, %v963
        %v965 = vmul.f32 %v949, 1.0614054
        %v966 = vmul.f32 %v964, 1.0614054
        %v967 = vadd.f32 %v965, -1.4531521
        %v968 = vadd.f32 %v966, -1.4531521
        %v969 = vmul.f32 %v949, %v967
        %v970 = vmul.f32 %v964, %v968
        %v971 = vadd.f32 %v969, 1.4214138
        %v972 = vadd.f32 %v970, 1.4214138
        %v973 = vmul.f32 %v949, %v971
        %v974 = vmul.f32 %v964, %v972
        %v975 = vadd.f32 %v973, -0.28449672
        %v976 = vadd.f32 %v974, -0.28449672
        %v977 = vmul.f32 %v949, %v975
        %v978 = vmul.f32 %v964, %v976
        %v979 = vadd.f32 %v977, 0.2548296
        %v980 = vadd.f32 %v978, 0.2548296
        %v981 = vmul.f32 %v949, %v979
        %v982 = vmul.f32 %v964, %v980
        %v983 = vsub.f32 0.0, %v929
        %v984 = vsub.f32 0.0, %v930
        %v985 = vmul.f32 %v983, %v929
        %v986 = vmul.f32 %v984, %v930
        %v987 = vmul.f32 %v985, 1.442695
        %v988 = vpow.pop %v987
        %v989 = vmul.f32 %v986, 1.442695
        %v990 = vpow.pop %v989
        %v991 = vmul.f32 %v981, %v988
        %v992 = vmul.f32 %v982, %v990
        %v993 = vsub.f32 1.0, %v991
        %v994 = vsub.f32 1.0, %v992
        %vm995 = vcmp.ge.f32.partialorder %v927, 0.0
        %vm996 = vcmp.ge.f32.partialorder %v928, 0.0
        %v997 = vsub.f32 0.0, %v993
        %v998 = vsub.f32 0.0, %v994
        %v999 = vsel %vm995, %v993, %v997
        %v1000 = vsel %vm996, %v994, %v998
        %v1001 = vadd.f32 %v999, 1.0
        %v1002 = vadd.f32 %v1000, 1.0
        %v1003 = vmul.f32 %v925, %v1001
        %v1004 = vmul.f32 %v926, %v1002
        %s1005 = scalar_lea.vmem %s4, 64
        %v1006 = vld [vmem:[%s1005] sm:$0xff]
        %v1007 = vld [vmem:[%s1005 + $0x8] sm:$0xff]
        %v1008 = vld [vmem:[%s1005 + $0x10] sm:$0xff]
        %v1009 = vld [vmem:[%s1005 + $0x18] sm:$0xff]
        %v1010 = vld [vmem:[%s1005 + $0x20] sm:$0xff]
        %v1011 = vld [vmem:[%s1005 + $0x28] sm:$0xff]
        %v1012 = vld [vmem:[%s1005 + $0x30] sm:$0xff]
        %v1013 = vld [vmem:[%s1005 + $0x38] sm:$0xff]
        %s1014 = scalar_lea.vmem %s5, 1
        %v1015 = vld [vmem:[%s1014] sm:$0x1]
        %v1017 = vperm.slane %v1015, 0
        %v1020 = vsel %vm399, %v1003, 0
        %v1023 = vsel %vm399, %v1004, 0
        %1025 = vmatpush.msra.mxu0 0.0
        %1026 = vmatpush.msra.mxu0 0.0
        %1027 = vmatpush.msra.mxu0 0.0
        %1028 = vmatpush.msra.mxu0 0.0
        %1029 = vmatpush.msra.mxu0 0.0
        %1030 = vmatpush.msra.mxu0 0.0
        %1031 = vmatpush.msra.mxu0 0.0
        %1032 = vmatpush.msra.mxu0 0.0
        %1033 = vmatpush.msra.mxu0 %v1013
        %1034 = vmatpush.msra.mxu0 %v1012
        %1035 = vmatpush.msra.mxu0 %v1011
        %1036 = vmatpush.msra.mxu0 %v1010
        %1037 = vmatpush.msra.mxu0 %v1009
        %1038 = vmatpush.msra.mxu0 %v1008
        %1039 = vmatpush.msra.mxu0 %v1007
        %1040 = vmatpush.msra.mxu0 %v1006
        %1041 = vmatmul.f32.gmra.mxu0 %v1020
        %v1042 = vpop.f32.mrf.mxu0
        %v1043 = vadd.f32 %v1017, %v1042
        %1044 = vmatmul.f32.gmra.mxu0 %v1023
        %v1045 = vpop.f32.mrf.mxu0
        %v1046 = vadd.f32 %v1017, %v1045
        %1047 = vdwg.mxu0
        %v1048 = vxor.u32 %v1043, 2147483648
        %v1049 = vxor.u32 %v1046, 2147483648
        %v1050 = vmul.f32 %v1048, 1.442695
        %v1051 = vpow.pop %v1050
        %v1052 = vmul.f32 %v1049, 1.442695
        %v1053 = vpow.pop %v1052
        %v1054 = vadd.f32 %v1051, 1.0
        %v1055 = vadd.f32 %v1053, 1.0
        %v1056 = vrcp.pop %v1054
        %v1057 = vmul.f32 %v1054, %v1056
        %v1058 = vsub.f32 1.0, %v1057
        %v1059 = vmul.f32 %v1056, %v1058
        %v1060 = vadd.f32 %v1056, %v1059
        %vm1061 = vweird.f32 %v1054
        %vm1062 = vweird.f32 %v1056
        %vm1063 = vmor %vm1061, %vm1062
        %v1064 = vsel %vm1063, %v1056, %v1060
        %v1065 = vand.u32 2147483647, %v1054
        %vm1066 = vcmp.eq.f32.partialorder %v1065, 8.507059e+37
        %v1067 = vand.u32 %v1054, 2147483648
        %v1068 = vor.u32 1.1754944e-38, %v1067
        %v1069 = vsel %vm1066, %v1068, %v1064
        %v1070 = vmul.f32 1.0, %v1069
        %v1071 = vrcp.pop %v1055
        %v1072 = vmul.f32 %v1055, %v1071
        %v1073 = vsub.f32 1.0, %v1072
        %v1074 = vmul.f32 %v1071, %v1073
        %v1075 = vadd.f32 %v1071, %v1074
        %vm1076 = vweird.f32 %v1055
        %vm1077 = vweird.f32 %v1071
        %vm1078 = vmor %vm1076, %vm1077
        %v1079 = vsel %vm1078, %v1071, %v1075
        %v1080 = vand.u32 2147483647, %v1055
        %vm1081 = vcmp.eq.f32.partialorder %v1080, 8.507059e+37
        %v1082 = vand.u32 %v1055, 2147483648
        %v1083 = vor.u32 1.1754944e-38, %v1082
        %v1084 = vsel %vm1081, %v1083, %v1079
        %v1085 = vmul.f32 1.0, %v1084
        %1088 = vrot.lane.b32.xlu0 %v1070, 64
        %v1089 = vpop.permute.xlu0 %1088
        %1090 = vrot.lane.b32.xlu0 %v1085, 64
        %v1091 = vpop.permute.xlu0 %1090
        %v1094 = vmul.f32 %v1043, %v1089
        %v1095 = vmul.f32 %v1046, %v1091
        %v1096 = vadd.f32 %v1094, %v779
        %v1097 = vadd.f32 %v1095, %v780
        %v1098 = vsel %vm399, %v1096, 0.0
        %1099 = vadd.xlane.f32.xlu0 %v1098
        %v1100 = vpop.xlane.xlu0 %1099
        %v1101 = vsel %vm399, %v1097, 0.0
        %1102 = vadd.xlane.f32.xlu0 %v1101
        %v1103 = vpop.xlane.xlu0 %1102
        %v1104 = vmul.f32 %v1100, %v726
        %v1105 = vmul.f32 %v1103, %v726
        %v1106 = vmul.f32 %v1096, %v1096
        %v1107 = vmul.f32 %v1097, %v1097
        %v1108 = vsel %vm399, %v1106, 0.0
        %1109 = vadd.xlane.f32.xlu0 %v1108
        %v1110 = vpop.xlane.xlu0 %1109
        %v1111 = vsel %vm399, %v1107, 0.0
        %1112 = vadd.xlane.f32.xlu0 %v1111
        %v1113 = vpop.xlane.xlu0 %1112
        %v1114 = vmul.f32 %v1110, %v726
        %v1115 = vmul.f32 %v1113, %v726
        %v1116 = vmul.f32 %v1104, %v1104
        %v1117 = vmul.f32 %v1105, %v1105
        %v1118 = vsub.f32 %v1114, %v1116
        %v1119 = vsub.f32 %v1115, %v1117
        %v1120 = vsub.f32 %v1096, %v1104
        %v1121 = vsub.f32 %v1097, %v1105
        %v1122 = vadd.f32 %v1118, 1e-05
        %v1123 = vadd.f32 %v1119, 1e-05
        %v1124 = vrsqrt.pop %v1122
        %v1125 = vmul.f32 %v1124, %v1122
        %v1126 = vmul.f32 %v1125, %v1124
        %v1127 = vmul.f32 0.5, %v1126
        %v1128 = vsub.f32 1.5, %v1127
        %v1129 = vmul.f32 %v1124, %v1128
        %vm1130 = vweird.f32 %v1122
        %vm1131 = vweird.f32 %v1124
        %vm1132 = vmor %vm1130, %vm1131
        %v1133 = vsel %vm1132, %v1124, %v1129
        %v1134 = vrsqrt.pop %v1123
        %v1135 = vmul.f32 %v1134, %v1123
        %v1136 = vmul.f32 %v1135, %v1134
        %v1137 = vmul.f32 0.5, %v1136
        %v1138 = vsub.f32 1.5, %v1137
        %v1139 = vmul.f32 %v1134, %v1138
        %vm1140 = vweird.f32 %v1123
        %vm1141 = vweird.f32 %v1134
        %vm1142 = vmor %vm1140, %vm1141
        %v1143 = vsel %vm1142, %v1134, %v1139
        %v1144 = vmul.f32 %v1120, %v1133
        %v1145 = vmul.f32 %v1121, %v1143
        %s1146 = scalar_lea.vmem %s6, 1
        %v1147 = vld [vmem:[%s1146] sm:$0x1]
        %v1149 = vperm.slane %v1147, 0
        %v1151 = vmul.f32 %v1144, %v1149
        %v1152 = vmul.f32 %v1145, %v1149
        %s1153 = scalar_lea.vmem %s7, 1
        %v1154 = vld [vmem:[%s1153] sm:$0x1]
        %v1156 = vperm.slane %v1154, 0
        %v1158 = vadd.f32 %v1151, %v1156
        %v1159 = vadd.f32 %v1152, %v1156
        %1160 = vst.msk [vmem:[#allocation2] sm:$0xff] %vm399, %v1158
        %1161 = vst.msk [vmem:[#allocation2 + $0x8] sm:$0xff] %vm399, %v1159
        %s1162 = scalar_lea.vmem %s3, 512
        %v1163 = vld [vmem:[%s1162] sm:$0xff]
        %v1164 = vld [vmem:[%s1162 + $0x8] sm:$0xff]
        %v1165 = vld [vmem:[#allocation2] sm:$0x1]
        %v1166 = vperm.slane %v1165, 0
        %v1167 = vmul.f32 %v1163, %v1166
        %v1168 = vmul.f32 %v1164, %v1166
        %s1169 = scalar_lea.vmem %s3, 528
        %v1170 = vld [vmem:[%s1169] sm:$0xff]
        %v1171 = vld [vmem:[%s1169 + $0x8] sm:$0xff]
        %v1172 = vld [vmem:[#allocation2 + $0x1] sm:$0x1]
        %v1173 = vperm.slane %v1172, 0
        %v1174 = vmul.f32 %v1170, %v1173
        %v1175 = vmul.f32 %v1171, %v1173
        %s1176 = scalar_lea.vmem %s3, 544
        %v1177 = vld [vmem:[%s1176] sm:$0xff]
        %v1178 = vld [vmem:[%s1176 + $0x8] sm:$0xff]
        %v1179 = vld [vmem:[#allocation2 + $0x2] sm:$0x1]
        %v1180 = vperm.slane %v1179, 0
        %v1181 = vmul.f32 %v1177, %v1180
        %v1182 = vmul.f32 %v1178, %v1180
        %s1183 = scalar_lea.vmem %s3, 560
        %v1184 = vld [vmem:[%s1183] sm:$0xff]
        %v1185 = vld [vmem:[%s1183 + $0x8] sm:$0xff]
        %v1186 = vld [vmem:[#allocation2 + $0x3] sm:$0x1]
        %v1187 = vperm.slane %v1186, 0
        %v1188 = vmul.f32 %v1184, %v1187
        %v1189 = vmul.f32 %v1185, %v1187
        %s1190 = scalar_lea.vmem %s3, 576
        %v1191 = vld [vmem:[%s1190] sm:$0xff]
        %v1192 = vld [vmem:[%s1190 + $0x8] sm:$0xff]
        %v1193 = vld [vmem:[#allocation2 + $0x4] sm:$0x1]
        %v1194 = vperm.slane %v1193, 0
        %v1195 = vmul.f32 %v1191, %v1194
        %v1196 = vmul.f32 %v1192, %v1194
        %v1197 = vadd.f32 %v1167, %v1195
        %v1198 = vadd.f32 %v1168, %v1196
        %s1199 = scalar_lea.vmem %s3, 592
        %v1200 = vld [vmem:[%s1199] sm:$0xff]
        %v1201 = vld [vmem:[%s1199 + $0x8] sm:$0xff]
        %v1202 = vld [vmem:[#allocation2 + $0x5] sm:$0x1]
        %v1203 = vperm.slane %v1202, 0
        %v1204 = vmul.f32 %v1200, %v1203
        %v1205 = vmul.f32 %v1201, %v1203
        %v1206 = vadd.f32 %v1174, %v1204
        %v1207 = vadd.f32 %v1175, %v1205
        %s1208 = scalar_lea.vmem %s3, 608
        %v1209 = vld [vmem:[%s1208] sm:$0xff]
        %v1210 = vld [vmem:[%s1208 + $0x8] sm:$0xff]
        %v1211 = vld [vmem:[#allocation2 + $0x6] sm:$0x1]
        %v1212 = vperm.slane %v1211, 0
        %v1213 = vmul.f32 %v1209, %v1212
        %v1214 = vmul.f32 %v1210, %v1212
        %v1215 = vadd.f32 %v1181, %v1213
        %v1216 = vadd.f32 %v1182, %v1214
        %s1217 = scalar_lea.vmem %s3, 624
        %v1218 = vld [vmem:[%s1217] sm:$0xff]
        %v1219 = vld [vmem:[%s1217 + $0x8] sm:$0xff]
        %v1220 = vld [vmem:[#allocation2 + $0x7] sm:$0x1]
        %v1221 = vperm.slane %v1220, 0
        %v1222 = vmul.f32 %v1218, %v1221
        %v1223 = vmul.f32 %v1219, %v1221
        %v1224 = vadd.f32 %v1188, %v1222
        %v1225 = vadd.f32 %v1189, %v1223
        %s1226 = scalar_lea.vmem %s3, 640
        %v1227 = vld [vmem:[%s1226] sm:$0xff]
        %v1228 = vld [vmem:[%s1226 + $0x8] sm:$0xff]
        %v1229 = vld [vmem:[#allocation2 + $0x8] sm:$0x1]
        %v1230 = vperm.slane %v1229, 0
        %v1231 = vmul.f32 %v1227, %v1230
        %v1232 = vmul.f32 %v1228, %v1230
        %v1233 = vadd.f32 %v1197, %v1231
        %v1234 = vadd.f32 %v1198, %v1232
        %s1235 = scalar_lea.vmem %s3, 656
        %v1236 = vld [vmem:[%s1235] sm:$0xff]
        %v1237 = vld [vmem:[%s1235 + $0x8] sm:$0xff]
        %v1238 = vld [vmem:[#allocation2 + $0x9] sm:$0x1]
        %v1239 = vperm.slane %v1238, 0
        %v1240 = vmul.f32 %v1236, %v1239
        %v1241 = vmul.f32 %v1237, %v1239
        %v1242 = vadd.f32 %v1206, %v1240
        %v1243 = vadd.f32 %v1207, %v1241
        %s1244 = scalar_lea.vmem %s3, 672
        %v1245 = vld [vmem:[%s1244] sm:$0xff]
        %v1246 = vld [vmem:[%s1244 + $0x8] sm:$0xff]
        %v1247 = vld [vmem:[#allocation2 + $0xa] sm:$0x1]
        %v1248 = vperm.slane %v1247, 0
        %v1249 = vmul.f32 %v1245, %v1248
        %v1250 = vmul.f32 %v1246, %v1248
        %v1251 = vadd.f32 %v1215, %v1249
        %v1252 = vadd.f32 %v1216, %v1250
        %s1253 = scalar_lea.vmem %s3, 688
        %v1254 = vld [vmem:[%s1253] sm:$0xff]
        %v1255 = vld [vmem:[%s1253 + $0x8] sm:$0xff]
        %v1256 = vld [vmem:[#allocation2 + $0xb] sm:$0x1]
        %v1257 = vperm.slane %v1256, 0
        %v1258 = vmul.f32 %v1254, %v1257
        %v1259 = vmul.f32 %v1255, %v1257
        %v1260 = vadd.f32 %v1224, %v1258
        %v1261 = vadd.f32 %v1225, %v1259
        %s1262 = scalar_lea.vmem %s3, 704
        %v1263 = vld [vmem:[%s1262] sm:$0xff]
        %v1264 = vld [vmem:[%s1262 + $0x8] sm:$0xff]
        %v1265 = vld [vmem:[#allocation2 + $0xc] sm:$0x1]
        %v1266 = vperm.slane %v1265, 0
        %v1267 = vmul.f32 %v1263, %v1266
        %v1268 = vmul.f32 %v1264, %v1266
        %v1269 = vadd.f32 %v1233, %v1267
        %v1270 = vadd.f32 %v1234, %v1268
        %s1271 = scalar_lea.vmem %s3, 720
        %v1272 = vld [vmem:[%s1271] sm:$0xff]
        %v1273 = vld [vmem:[%s1271 + $0x8] sm:$0xff]
        %v1274 = vld [vmem:[#allocation2 + $0xd] sm:$0x1]
        %v1275 = vperm.slane %v1274, 0
        %v1276 = vmul.f32 %v1272, %v1275
        %v1277 = vmul.f32 %v1273, %v1275
        %v1278 = vadd.f32 %v1242, %v1276
        %v1279 = vadd.f32 %v1243, %v1277
        %s1280 = scalar_lea.vmem %s3, 736
        %v1281 = vld [vmem:[%s1280] sm:$0xff]
        %v1282 = vld [vmem:[%s1280 + $0x8] sm:$0xff]
        %v1283 = vld [vmem:[#allocation2 + $0xe] sm:$0x1]
        %v1284 = vperm.slane %v1283, 0
        %v1285 = vmul.f32 %v1281, %v1284
        %v1286 = vmul.f32 %v1282, %v1284
        %v1287 = vadd.f32 %v1251, %v1285
        %v1288 = vadd.f32 %v1252, %v1286
        %s1289 = scalar_lea.vmem %s3, 752
        %v1290 = vld [vmem:[%s1289] sm:$0xff]
        %v1291 = vld [vmem:[%s1289 + $0x8] sm:$0xff]
        %v1292 = vld [vmem:[#allocation2 + $0xf] sm:$0x1]
        %v1293 = vperm.slane %v1292, 0
        %v1294 = vmul.f32 %v1290, %v1293
        %v1295 = vmul.f32 %v1291, %v1293
        %v1296 = vadd.f32 %v1260, %v1294
        %v1297 = vadd.f32 %v1261, %v1295
        %v1298 = vadd.f32 %v1269, %v1278
        %v1299 = vadd.f32 %v1270, %v1279
        %v1300 = vadd.f32 %v1287, %v1296
        %v1301 = vadd.f32 %v1288, %v1297
        %v1302 = vadd.f32 %v1298, %v1300
        %v1303 = vadd.f32 %v1299, %v1301
        %v1304 = vmul.f32 %v1302, 0.5
        %v1305 = vmul.f32 %v1303, 0.5
        %v1306 = vmul.f32 %v1302, 0.70710677
        %v1307 = vmul.f32 %v1303, 0.70710677
        %v1308 = vand.u32 2147483647, %v1306
        %v1309 = vand.u32 2147483647, %v1307
        %v1310 = vmul.f32 %v1308, 0.3275911
        %v1311 = vmul.f32 %v1309, 0.3275911
        %v1312 = vadd.f32 %v1310, 1.0
        %v1313 = vadd.f32 %v1311, 1.0
        %v1314 = vrcp.pop %v1312
        %v1315 = vmul.f32 %v1312, %v1314
        %v1316 = vsub.f32 1.0, %v1315
        %v1317 = vmul.f32 %v1314, %v1316
        %v1318 = vadd.f32 %v1314, %v1317
        %vm1319 = vweird.f32 %v1312
        %vm1320 = vweird.f32 %v1314
        %vm1321 = vmor %vm1319, %vm1320
        %v1322 = vsel %vm1321, %v1314, %v1318
        %v1323 = vand.u32 2147483647, %v1312
        %vm1324 = vcmp.eq.f32.partialorder %v1323, 8.507059e+37
        %v1325 = vand.u32 %v1312, 2147483648
        %v1326 = vor.u32 1.1754944e-38, %v1325
        %v1327 = vsel %vm1324, %v1326, %v1322
        %v1328 = vmul.f32 1.0, %v1327
        %v1329 = vrcp.pop %v1313
        %v1330 = vmul.f32 %v1313, %v1329
        %v1331 = vsub.f32 1.0, %v1330
        %v1332 = vmul.f32 %v1329, %v1331
        %v1333 = vadd.f32 %v1329, %v1332
        %vm1334 = vweird.f32 %v1313
        %vm1335 = vweird.f32 %v1329
        %vm1336 = vmor %vm1334, %vm1335
        %v1337 = vsel %vm1336, %v1329, %v1333
        %v1338 = vand.u32 2147483647, %v1313
        %vm1339 = vcmp.eq.f32.partialorder %v1338, 8.507059e+37
        %v1340 = vand.u32 %v1313, 2147483648
        %v1341 = vor.u32 1.1754944e-38, %v1340
        %v1342 = vsel %vm1339, %v1341, %v1337
        %v1343 = vmul.f32 1.0, %v1342
        %v1344 = vmul.f32 %v1328, 1.0614054
        %v1345 = vmul.f32 %v1343, 1.0614054
        %v1346 = vadd.f32 %v1344, -1.4531521
        %v1347 = vadd.f32 %v1345, -1.4531521
        %v1348 = vmul.f32 %v1328, %v1346
        %v1349 = vmul.f32 %v1343, %v1347
        %v1350 = vadd.f32 %v1348, 1.4214138
        %v1351 = vadd.f32 %v1349, 1.4214138
        %v1352 = vmul.f32 %v1328, %v1350
        %v1353 = vmul.f32 %v1343, %v1351
        %v1354 = vadd.f32 %v1352, -0.28449672
        %v1355 = vadd.f32 %v1353, -0.28449672
        %v1356 = vmul.f32 %v1328, %v1354
        %v1357 = vmul.f32 %v1343, %v1355
        %v1358 = vadd.f32 %v1356, 0.2548296
        %v1359 = vadd.f32 %v1357, 0.2548296
        %v1360 = vmul.f32 %v1328, %v1358
        %v1361 = vmul.f32 %v1343, %v1359
        %v1362 = vsub.f32 0.0, %v1308
        %v1363 = vsub.f32 0.0, %v1309
        %v1364 = vmul.f32 %v1362, %v1308
        %v1365 = vmul.f32 %v1363, %v1309
        %v1366 = vmul.f32 %v1364, 1.442695
        %v1367 = vpow.pop %v1366
        %v1368 = vmul.f32 %v1365, 1.442695
        %v1369 = vpow.pop %v1368
        %v1370 = vmul.f32 %v1360, %v1367
        %v1371 = vmul.f32 %v1361, %v1369
        %v1372 = vsub.f32 1.0, %v1370
        %v1373 = vsub.f32 1.0, %v1371
        %vm1374 = vcmp.ge.f32.partialorder %v1306, 0.0
        %vm1375 = vcmp.ge.f32.partialorder %v1307, 0.0
        %v1376 = vsub.f32 0.0, %v1372
        %v1377 = vsub.f32 0.0, %v1373
        %v1378 = vsel %vm1374, %v1372, %v1376
        %v1379 = vsel %vm1375, %v1373, %v1377
        %v1380 = vadd.f32 %v1378, 1.0
        %v1381 = vadd.f32 %v1379, 1.0
        %v1382 = vmul.f32 %v1304, %v1380
        %v1383 = vmul.f32 %v1305, %v1381
        %s1384 = scalar_lea.vmem %s4, 128
        %v1385 = vld [vmem:[%s1384] sm:$0xff]
        %v1386 = vld [vmem:[%s1384 + $0x8] sm:$0xff]
        %v1387 = vld [vmem:[%s1384 + $0x10] sm:$0xff]
        %v1388 = vld [vmem:[%s1384 + $0x18] sm:$0xff]
        %v1389 = vld [vmem:[%s1384 + $0x20] sm:$0xff]
        %v1390 = vld [vmem:[%s1384 + $0x28] sm:$0xff]
        %v1391 = vld [vmem:[%s1384 + $0x30] sm:$0xff]
        %v1392 = vld [vmem:[%s1384 + $0x38] sm:$0xff]
        %s1393 = scalar_lea.vmem %s5, 2
        %v1394 = vld [vmem:[%s1393] sm:$0x1]
        %v1396 = vperm.slane %v1394, 0
        %v1399 = vsel %vm399, %v1382, 0
        %v1402 = vsel %vm399, %v1383, 0
        %1404 = vmatpush.msra.mxu0 0.0
        %1405 = vmatpush.msra.mxu0 0.0
        %1406 = vmatpush.msra.mxu0 0.0
        %1407 = vmatpush.msra.mxu0 0.0
        %1408 = vmatpush.msra.mxu0 0.0
        %1409 = vmatpush.msra.mxu0 0.0
        %1410 = vmatpush.msra.mxu0 0.0
        %1411 = vmatpush.msra.mxu0 0.0
        %1412 = vmatpush.msra.mxu0 %v1392
        %1413 = vmatpush.msra.mxu0 %v1391
        %1414 = vmatpush.msra.mxu0 %v1390
        %1415 = vmatpush.msra.mxu0 %v1389
        %1416 = vmatpush.msra.mxu0 %v1388
        %1417 = vmatpush.msra.mxu0 %v1387
        %1418 = vmatpush.msra.mxu0 %v1386
        %1419 = vmatpush.msra.mxu0 %v1385
        %1420 = vmatmul.f32.gmra.mxu0 %v1399
        %v1421 = vpop.f32.mrf.mxu0
        %v1422 = vadd.f32 %v1396, %v1421
        %1423 = vmatmul.f32.gmra.mxu0 %v1402
        %v1424 = vpop.f32.mrf.mxu0
        %v1425 = vadd.f32 %v1396, %v1424
        %1426 = vdwg.mxu0
        %v1427 = vxor.u32 %v1422, 2147483648
        %v1428 = vxor.u32 %v1425, 2147483648
        %v1429 = vmul.f32 %v1427, 1.442695
        %v1430 = vpow.pop %v1429
        %v1431 = vmul.f32 %v1428, 1.442695
        %v1432 = vpow.pop %v1431
        %v1433 = vadd.f32 %v1430, 1.0
        %v1434 = vadd.f32 %v1432, 1.0
        %v1435 = vrcp.pop %v1433
        %v1436 = vmul.f32 %v1433, %v1435
        %v1437 = vsub.f32 1.0, %v1436
        %v1438 = vmul.f32 %v1435, %v1437
        %v1439 = vadd.f32 %v1435, %v1438
        %vm1440 = vweird.f32 %v1433
        %vm1441 = vweird.f32 %v1435
        %vm1442 = vmor %vm1440, %vm1441
        %v1443 = vsel %vm1442, %v1435, %v1439
        %v1444 = vand.u32 2147483647, %v1433
        %vm1445 = vcmp.eq.f32.partialorder %v1444, 8.507059e+37
        %v1446 = vand.u32 %v1433, 2147483648
        %v1447 = vor.u32 1.1754944e-38, %v1446
        %v1448 = vsel %vm1445, %v1447, %v1443
        %v1449 = vmul.f32 1.0, %v1448
        %v1450 = vrcp.pop %v1434
        %v1451 = vmul.f32 %v1434, %v1450
        %v1452 = vsub.f32 1.0, %v1451
        %v1453 = vmul.f32 %v1450, %v1452
        %v1454 = vadd.f32 %v1450, %v1453
        %vm1455 = vweird.f32 %v1434
        %vm1456 = vweird.f32 %v1450
        %vm1457 = vmor %vm1455, %vm1456
        %v1458 = vsel %vm1457, %v1450, %v1454
        %v1459 = vand.u32 2147483647, %v1434
        %vm1460 = vcmp.eq.f32.partialorder %v1459, 8.507059e+37
        %v1461 = vand.u32 %v1434, 2147483648
        %v1462 = vor.u32 1.1754944e-38, %v1461
        %v1463 = vsel %vm1460, %v1462, %v1458
        %v1464 = vmul.f32 1.0, %v1463
        %1467 = vrot.lane.b32.xlu0 %v1449, 64
        %v1468 = vpop.permute.xlu0 %1467
        %1469 = vrot.lane.b32.xlu0 %v1464, 64
        %v1470 = vpop.permute.xlu0 %1469
        %v1473 = vmul.f32 %v1422, %v1468
        %v1474 = vmul.f32 %v1425, %v1470
        %v1475 = vadd.f32 %v1473, %v1158
        %v1476 = vadd.f32 %v1474, %v1159
        %v1477 = vsel %vm399, %v1475, 0.0
        %1478 = vadd.xlane.f32.xlu0 %v1477
        %v1479 = vpop.xlane.xlu0 %1478
        %v1480 = vsel %vm399, %v1476, 0.0
        %1481 = vadd.xlane.f32.xlu0 %v1480
        %v1482 = vpop.xlane.xlu0 %1481
        %v1483 = vmul.f32 %v1479, %v726
        %v1484 = vmul.f32 %v1482, %v726
        %v1485 = vmul.f32 %v1475, %v1475
        %v1486 = vmul.f32 %v1476, %v1476
        %v1487 = vsel %vm399, %v1485, 0.0
        %1488 = vadd.xlane.f32.xlu0 %v1487
        %v1489 = vpop.xlane.xlu0 %1488
        %v1490 = vsel %vm399, %v1486, 0.0
        %1491 = vadd.xlane.f32.xlu0 %v1490
        %v1492 = vpop.xlane.xlu0 %1491
        %v1493 = vmul.f32 %v1489, %v726
        %v1494 = vmul.f32 %v1492, %v726
        %v1495 = vmul.f32 %v1483, %v1483
        %v1496 = vmul.f32 %v1484, %v1484
        %v1497 = vsub.f32 %v1493, %v1495
        %v1498 = vsub.f32 %v1494, %v1496
        %v1499 = vsub.f32 %v1475, %v1483
        %v1500 = vsub.f32 %v1476, %v1484
        %v1501 = vadd.f32 %v1497, 1e-05
        %v1502 = vadd.f32 %v1498, 1e-05
        %v1503 = vrsqrt.pop %v1501
        %v1504 = vmul.f32 %v1503, %v1501
        %v1505 = vmul.f32 %v1504, %v1503
        %v1506 = vmul.f32 0.5, %v1505
        %v1507 = vsub.f32 1.5, %v1506
        %v1508 = vmul.f32 %v1503, %v1507
        %vm1509 = vweird.f32 %v1501
        %vm1510 = vweird.f32 %v1503
        %vm1511 = vmor %vm1509, %vm1510
        %v1512 = vsel %vm1511, %v1503, %v1508
        %v1513 = vrsqrt.pop %v1502
        %v1514 = vmul.f32 %v1513, %v1502
        %v1515 = vmul.f32 %v1514, %v1513
        %v1516 = vmul.f32 0.5, %v1515
        %v1517 = vsub.f32 1.5, %v1516
        %v1518 = vmul.f32 %v1513, %v1517
        %vm1519 = vweird.f32 %v1502
        %vm1520 = vweird.f32 %v1513
        %vm1521 = vmor %vm1519, %vm1520
        %v1522 = vsel %vm1521, %v1513, %v1518
        %v1523 = vmul.f32 %v1499, %v1512
        %v1524 = vmul.f32 %v1500, %v1522
        %s1525 = scalar_lea.vmem %s6, 2
        %v1526 = vld [vmem:[%s1525] sm:$0x1]
        %v1528 = vperm.slane %v1526, 0
        %v1530 = vmul.f32 %v1523, %v1528
        %v1531 = vmul.f32 %v1524, %v1528
        %s1532 = scalar_lea.vmem %s7, 2
        %v1533 = vld [vmem:[%s1532] sm:$0x1]
        %v1535 = vperm.slane %v1533, 0
        %v1537 = vadd.f32 %v1530, %v1535
        %v1538 = vadd.f32 %v1531, %v1535
        %1539 = vst.msk [vmem:[#allocation2] sm:$0xff] %vm399, %v1537
        %1540 = vst.msk [vmem:[#allocation2 + $0x8] sm:$0xff] %vm399, %v1538
        %s1541 = scalar_lea.vmem %s3, 768
        %v1542 = vld [vmem:[%s1541] sm:$0xff]
        %v1543 = vld [vmem:[%s1541 + $0x8] sm:$0xff]
        %v1544 = vld [vmem:[#allocation2] sm:$0x1]
        %v1545 = vperm.slane %v1544, 0
        %v1546 = vmul.f32 %v1542, %v1545
        %v1547 = vmul.f32 %v1543, %v1545
        %s1548 = scalar_lea.vmem %s3, 784
        %v1549 = vld [vmem:[%s1548] sm:$0xff]
        %v1550 = vld [vmem:[%s1548 + $0x8] sm:$0xff]
        %v1551 = vld [vmem:[#allocation2 + $0x1] sm:$0x1]
        %v1552 = vperm.slane %v1551, 0
        %v1553 = vmul.f32 %v1549, %v1552
        %v1554 = vmul.f32 %v1550, %v1552
        %s1555 = scalar_lea.vmem %s3, 800
        %v1556 = vld [vmem:[%s1555] sm:$0xff]
        %v1557 = vld [vmem:[%s1555 + $0x8] sm:$0xff]
        %v1558 = vld [vmem:[#allocation2 + $0x2] sm:$0x1]
        %v1559 = vperm.slane %v1558, 0
        %v1560 = vmul.f32 %v1556, %v1559
        %v1561 = vmul.f32 %v1557, %v1559
        %s1562 = scalar_lea.vmem %s3, 816
        %v1563 = vld [vmem:[%s1562] sm:$0xff]
        %v1564 = vld [vmem:[%s1562 + $0x8] sm:$0xff]
        %v1565 = vld [vmem:[#allocation2 + $0x3] sm:$0x1]
        %v1566 = vperm.slane %v1565, 0
        %v1567 = vmul.f32 %v1563, %v1566
        %v1568 = vmul.f32 %v1564, %v1566
        %s1569 = scalar_lea.vmem %s3, 832
        %v1570 = vld [vmem:[%s1569] sm:$0xff]
        %v1571 = vld [vmem:[%s1569 + $0x8] sm:$0xff]
        %v1572 = vld [vmem:[#allocation2 + $0x4] sm:$0x1]
        %v1573 = vperm.slane %v1572, 0
        %v1574 = vmul.f32 %v1570, %v1573
        %v1575 = vmul.f32 %v1571, %v1573
        %v1576 = vadd.f32 %v1546, %v1574
        %v1577 = vadd.f32 %v1547, %v1575
        %s1578 = scalar_lea.vmem %s3, 848
        %v1579 = vld [vmem:[%s1578] sm:$0xff]
        %v1580 = vld [vmem:[%s1578 + $0x8] sm:$0xff]
        %v1581 = vld [vmem:[#allocation2 + $0x5] sm:$0x1]
        %v1582 = vperm.slane %v1581, 0
        %v1583 = vmul.f32 %v1579, %v1582
        %v1584 = vmul.f32 %v1580, %v1582
        %v1585 = vadd.f32 %v1553, %v1583
        %v1586 = vadd.f32 %v1554, %v1584
        %s1587 = scalar_lea.vmem %s3, 864
        %v1588 = vld [vmem:[%s1587] sm:$0xff]
        %v1589 = vld [vmem:[%s1587 + $0x8] sm:$0xff]
        %v1590 = vld [vmem:[#allocation2 + $0x6] sm:$0x1]
        %v1591 = vperm.slane %v1590, 0
        %v1592 = vmul.f32 %v1588, %v1591
        %v1593 = vmul.f32 %v1589, %v1591
        %v1594 = vadd.f32 %v1560, %v1592
        %v1595 = vadd.f32 %v1561, %v1593
        %s1596 = scalar_lea.vmem %s3, 880
        %v1597 = vld [vmem:[%s1596] sm:$0xff]
        %v1598 = vld [vmem:[%s1596 + $0x8] sm:$0xff]
        %v1599 = vld [vmem:[#allocation2 + $0x7] sm:$0x1]
        %v1600 = vperm.slane %v1599, 0
        %v1601 = vmul.f32 %v1597, %v1600
        %v1602 = vmul.f32 %v1598, %v1600
        %v1603 = vadd.f32 %v1567, %v1601
        %v1604 = vadd.f32 %v1568, %v1602
        %s1605 = scalar_lea.vmem %s3, 896
        %v1606 = vld [vmem:[%s1605] sm:$0xff]
        %v1607 = vld [vmem:[%s1605 + $0x8] sm:$0xff]
        %v1608 = vld [vmem:[#allocation2 + $0x8] sm:$0x1]
        %v1609 = vperm.slane %v1608, 0
        %v1610 = vmul.f32 %v1606, %v1609
        %v1611 = vmul.f32 %v1607, %v1609
        %v1612 = vadd.f32 %v1576, %v1610
        %v1613 = vadd.f32 %v1577, %v1611
        %s1614 = scalar_lea.vmem %s3, 912
        %v1615 = vld [vmem:[%s1614] sm:$0xff]
        %v1616 = vld [vmem:[%s1614 + $0x8] sm:$0xff]
        %v1617 = vld [vmem:[#allocation2 + $0x9] sm:$0x1]
        %v1618 = vperm.slane %v1617, 0
        %v1619 = vmul.f32 %v1615, %v1618
        %v1620 = vmul.f32 %v1616, %v1618
        %v1621 = vadd.f32 %v1585, %v1619
        %v1622 = vadd.f32 %v1586, %v1620
        %s1623 = scalar_lea.vmem %s3, 928
        %v1624 = vld [vmem:[%s1623] sm:$0xff]
        %v1625 = vld [vmem:[%s1623 + $0x8] sm:$0xff]
        %v1626 = vld [vmem:[#allocation2 + $0xa] sm:$0x1]
        %v1627 = vperm.slane %v1626, 0
        %v1628 = vmul.f32 %v1624, %v1627
        %v1629 = vmul.f32 %v1625, %v1627
        %v1630 = vadd.f32 %v1594, %v1628
        %v1631 = vadd.f32 %v1595, %v1629
        %s1632 = scalar_lea.vmem %s3, 944
        %v1633 = vld [vmem:[%s1632] sm:$0xff]
        %v1634 = vld [vmem:[%s1632 + $0x8] sm:$0xff]
        %v1635 = vld [vmem:[#allocation2 + $0xb] sm:$0x1]
        %v1636 = vperm.slane %v1635, 0
        %v1637 = vmul.f32 %v1633, %v1636
        %v1638 = vmul.f32 %v1634, %v1636
        %v1639 = vadd.f32 %v1603, %v1637
        %v1640 = vadd.f32 %v1604, %v1638
        %s1641 = scalar_lea.vmem %s3, 960
        %v1642 = vld [vmem:[%s1641] sm:$0xff]
        %v1643 = vld [vmem:[%s1641 + $0x8] sm:$0xff]
        %v1644 = vld [vmem:[#allocation2 + $0xc] sm:$0x1]
        %v1645 = vperm.slane %v1644, 0
        %v1646 = vmul.f32 %v1642, %v1645
        %v1647 = vmul.f32 %v1643, %v1645
        %v1648 = vadd.f32 %v1612, %v1646
        %v1649 = vadd.f32 %v1613, %v1647
        %s1650 = scalar_lea.vmem %s3, 976
        %v1651 = vld [vmem:[%s1650] sm:$0xff]
        %v1652 = vld [vmem:[%s1650 + $0x8] sm:$0xff]
        %v1653 = vld [vmem:[#allocation2 + $0xd] sm:$0x1]
        %v1654 = vperm.slane %v1653, 0
        %v1655 = vmul.f32 %v1651, %v1654
        %v1656 = vmul.f32 %v1652, %v1654
        %v1657 = vadd.f32 %v1621, %v1655
        %v1658 = vadd.f32 %v1622, %v1656
        %s1659 = scalar_lea.vmem %s3, 992
        %v1660 = vld [vmem:[%s1659] sm:$0xff]
        %v1661 = vld [vmem:[%s1659 + $0x8] sm:$0xff]
        %v1662 = vld [vmem:[#allocation2 + $0xe] sm:$0x1]
        %v1663 = vperm.slane %v1662, 0
        %v1664 = vmul.f32 %v1660, %v1663
        %v1665 = vmul.f32 %v1661, %v1663
        %v1666 = vadd.f32 %v1630, %v1664
        %v1667 = vadd.f32 %v1631, %v1665
        %s1668 = scalar_lea.vmem %s3, 1008
        %v1669 = vld [vmem:[%s1668] sm:$0xff]
        %v1670 = vld [vmem:[%s1668 + $0x8] sm:$0xff]
        %v1671 = vld [vmem:[#allocation2 + $0xf] sm:$0x1]
        %v1672 = vperm.slane %v1671, 0
        %v1673 = vmul.f32 %v1669, %v1672
        %v1674 = vmul.f32 %v1670, %v1672
        %v1675 = vadd.f32 %v1639, %v1673
        %v1676 = vadd.f32 %v1640, %v1674
        %v1677 = vadd.f32 %v1648, %v1657
        %v1678 = vadd.f32 %v1649, %v1658
        %v1679 = vadd.f32 %v1666, %v1675
        %v1680 = vadd.f32 %v1667, %v1676
        %v1681 = vadd.f32 %v1677, %v1679
        %v1682 = vadd.f32 %v1678, %v1680
        %v1683 = vmul.f32 %v1681, 0.5
        %v1684 = vmul.f32 %v1682, 0.5
        %v1685 = vmul.f32 %v1681, 0.70710677
        %v1686 = vmul.f32 %v1682, 0.70710677
        %v1687 = vand.u32 2147483647, %v1685
        %v1688 = vand.u32 2147483647, %v1686
        %v1689 = vmul.f32 %v1687, 0.3275911
        %v1690 = vmul.f32 %v1688, 0.3275911
        %v1691 = vadd.f32 %v1689, 1.0
        %v1692 = vadd.f32 %v1690, 1.0
        %v1693 = vrcp.pop %v1691
        %v1694 = vmul.f32 %v1691, %v1693
        %v1695 = vsub.f32 1.0, %v1694
        %v1696 = vmul.f32 %v1693, %v1695
        %v1697 = vadd.f32 %v1693, %v1696
        %vm1698 = vweird.f32 %v1691
        %vm1699 = vweird.f32 %v1693
        %vm1700 = vmor %vm1698, %vm1699
        %v1701 = vsel %vm1700, %v1693, %v1697
        %v1702 = vand.u32 2147483647, %v1691
        %vm1703 = vcmp.eq.f32.partialorder %v1702, 8.507059e+37
        %v1704 = vand.u32 %v1691, 2147483648
        %v1705 = vor.u32 1.1754944e-38, %v1704
        %v1706 = vsel %vm1703, %v1705, %v1701
        %v1707 = vmul.f32 1.0, %v1706
        %v1708 = vrcp.pop %v1692
        %v1709 = vmul.f32 %v1692, %v1708
        %v1710 = vsub.f32 1.0, %v1709
        %v1711 = vmul.f32 %v1708, %v1710
        %v1712 = vadd.f32 %v1708, %v1711
        %vm1713 = vweird.f32 %v1692
        %vm1714 = vweird.f32 %v1708
        %vm1715 = vmor %vm1713, %vm1714
        %v1716 = vsel %vm1715, %v1708, %v1712
        %v1717 = vand.u32 2147483647, %v1692
        %vm1718 = vcmp.eq.f32.partialorder %v1717, 8.507059e+37
        %v1719 = vand.u32 %v1692, 2147483648
        %v1720 = vor.u32 1.1754944e-38, %v1719
        %v1721 = vsel %vm1718, %v1720, %v1716
        %v1722 = vmul.f32 1.0, %v1721
        %v1723 = vmul.f32 %v1707, 1.0614054
        %v1724 = vmul.f32 %v1722, 1.0614054
        %v1725 = vadd.f32 %v1723, -1.4531521
        %v1726 = vadd.f32 %v1724, -1.4531521
        %v1727 = vmul.f32 %v1707, %v1725
        %v1728 = vmul.f32 %v1722, %v1726
        %v1729 = vadd.f32 %v1727, 1.4214138
        %v1730 = vadd.f32 %v1728, 1.4214138
        %v1731 = vmul.f32 %v1707, %v1729
        %v1732 = vmul.f32 %v1722, %v1730
        %v1733 = vadd.f32 %v1731, -0.28449672
        %v1734 = vadd.f32 %v1732, -0.28449672
        %v1735 = vmul.f32 %v1707, %v1733
        %v1736 = vmul.f32 %v1722, %v1734
        %v1737 = vadd.f32 %v1735, 0.2548296
        %v1738 = vadd.f32 %v1736, 0.2548296
        %v1739 = vmul.f32 %v1707, %v1737
        %v1740 = vmul.f32 %v1722, %v1738
        %v1741 = vsub.f32 0.0, %v1687
        %v1742 = vsub.f32 0.0, %v1688
        %v1743 = vmul.f32 %v1741, %v1687
        %v1744 = vmul.f32 %v1742, %v1688
        %v1745 = vmul.f32 %v1743, 1.442695
        %v1746 = vpow.pop %v1745
        %v1747 = vmul.f32 %v1744, 1.442695
        %v1748 = vpow.pop %v1747
        %v1749 = vmul.f32 %v1739, %v1746
        %v1750 = vmul.f32 %v1740, %v1748
        %v1751 = vsub.f32 1.0, %v1749
        %v1752 = vsub.f32 1.0, %v1750
        %vm1753 = vcmp.ge.f32.partialorder %v1685, 0.0
        %vm1754 = vcmp.ge.f32.partialorder %v1686, 0.0
        %v1755 = vsub.f32 0.0, %v1751
        %v1756 = vsub.f32 0.0, %v1752
        %v1757 = vsel %vm1753, %v1751, %v1755
        %v1758 = vsel %vm1754, %v1752, %v1756
        %v1759 = vadd.f32 %v1757, 1.0
        %v1760 = vadd.f32 %v1758, 1.0
        %v1761 = vmul.f32 %v1683, %v1759
        %v1762 = vmul.f32 %v1684, %v1760
        %s1763 = scalar_lea.vmem %s4, 192
        %v1764 = vld [vmem:[%s1763] sm:$0xff]
        %v1765 = vld [vmem:[%s1763 + $0x8] sm:$0xff]
        %v1766 = vld [vmem:[%s1763 + $0x10] sm:$0xff]
        %v1767 = vld [vmem:[%s1763 + $0x18] sm:$0xff]
        %v1768 = vld [vmem:[%s1763 + $0x20] sm:$0xff]
        %v1769 = vld [vmem:[%s1763 + $0x28] sm:$0xff]
        %v1770 = vld [vmem:[%s1763 + $0x30] sm:$0xff]
        %v1771 = vld [vmem:[%s1763 + $0x38] sm:$0xff]
        %s1772 = scalar_lea.vmem %s5, 3
        %v1773 = vld [vmem:[%s1772] sm:$0x1]
        %v1775 = vperm.slane %v1773, 0
        %v1778 = vsel %vm399, %v1761, 0
        %v1781 = vsel %vm399, %v1762, 0
        %1783 = vmatpush.msra.mxu0 0.0
        %1784 = vmatpush.msra.mxu0 0.0
        %1785 = vmatpush.msra.mxu0 0.0
        %1786 = vmatpush.msra.mxu0 0.0
        %1787 = vmatpush.msra.mxu0 0.0
        %1788 = vmatpush.msra.mxu0 0.0
        %1789 = vmatpush.msra.mxu0 0.0
        %1790 = vmatpush.msra.mxu0 0.0
        %1791 = vmatpush.msra.mxu0 %v1771
        %1792 = vmatpush.msra.mxu0 %v1770
        %1793 = vmatpush.msra.mxu0 %v1769
        %1794 = vmatpush.msra.mxu0 %v1768
        %1795 = vmatpush.msra.mxu0 %v1767
        %1796 = vmatpush.msra.mxu0 %v1766
        %1797 = vmatpush.msra.mxu0 %v1765
        %1798 = vmatpush.msra.mxu0 %v1764
        %1799 = vmatmul.f32.gmra.mxu0 %v1778
        %v1800 = vpop.f32.mrf.mxu0
        %v1801 = vadd.f32 %v1775, %v1800
        %1802 = vmatmul.f32.gmra.mxu0 %v1781
        %v1803 = vpop.f32.mrf.mxu0
        %v1804 = vadd.f32 %v1775, %v1803
        %1805 = vdwg.mxu0
        %v1806 = vxor.u32 %v1801, 2147483648
        %v1807 = vxor.u32 %v1804, 2147483648
        %v1808 = vmul.f32 %v1806, 1.442695
        %v1809 = vpow.pop %v1808
        %v1810 = vmul.f32 %v1807, 1.442695
        %v1811 = vpow.pop %v1810
        %v1812 = vadd.f32 %v1809, 1.0
        %v1813 = vadd.f32 %v1811, 1.0
        %v1814 = vrcp.pop %v1812
        %v1815 = vmul.f32 %v1812, %v1814
        %v1816 = vsub.f32 1.0, %v1815
        %v1817 = vmul.f32 %v1814, %v1816
        %v1818 = vadd.f32 %v1814, %v1817
        %vm1819 = vweird.f32 %v1812
        %vm1820 = vweird.f32 %v1814
        %vm1821 = vmor %vm1819, %vm1820
        %v1822 = vsel %vm1821, %v1814, %v1818
        %v1823 = vand.u32 2147483647, %v1812
        %vm1824 = vcmp.eq.f32.partialorder %v1823, 8.507059e+37
        %v1825 = vand.u32 %v1812, 2147483648
        %v1826 = vor.u32 1.1754944e-38, %v1825
        %v1827 = vsel %vm1824, %v1826, %v1822
        %v1828 = vmul.f32 1.0, %v1827
        %v1829 = vrcp.pop %v1813
        %v1830 = vmul.f32 %v1813, %v1829
        %v1831 = vsub.f32 1.0, %v1830
        %v1832 = vmul.f32 %v1829, %v1831
        %v1833 = vadd.f32 %v1829, %v1832
        %vm1834 = vweird.f32 %v1813
        %vm1835 = vweird.f32 %v1829
        %vm1836 = vmor %vm1834, %vm1835
        %v1837 = vsel %vm1836, %v1829, %v1833
        %v1838 = vand.u32 2147483647, %v1813
        %vm1839 = vcmp.eq.f32.partialorder %v1838, 8.507059e+37
        %v1840 = vand.u32 %v1813, 2147483648
        %v1841 = vor.u32 1.1754944e-38, %v1840
        %v1842 = vsel %vm1839, %v1841, %v1837
        %v1843 = vmul.f32 1.0, %v1842
        %1846 = vrot.lane.b32.xlu0 %v1828, 64
        %v1847 = vpop.permute.xlu0 %1846
        %1848 = vrot.lane.b32.xlu0 %v1843, 64
        %v1849 = vpop.permute.xlu0 %1848
        %v1852 = vmul.f32 %v1801, %v1847
        %v1853 = vmul.f32 %v1804, %v1849
        %v1854 = vadd.f32 %v1852, %v1537
        %v1855 = vadd.f32 %v1853, %v1538
        %v1856 = vsel %vm399, %v1854, 0.0
        %1857 = vadd.xlane.f32.xlu0 %v1856
        %v1858 = vpop.xlane.xlu0 %1857
        %v1859 = vsel %vm399, %v1855, 0.0
        %1860 = vadd.xlane.f32.xlu0 %v1859
        %v1861 = vpop.xlane.xlu0 %1860
        %v1862 = vmul.f32 %v1858, %v726
        %v1863 = vmul.f32 %v1861, %v726
        %v1864 = vmul.f32 %v1854, %v1854
        %v1865 = vmul.f32 %v1855, %v1855
        %v1866 = vsel %vm399, %v1864, 0.0
        %1867 = vadd.xlane.f32.xlu0 %v1866
        %v1868 = vpop.xlane.xlu0 %1867
        %v1869 = vsel %vm399, %v1865, 0.0
        %1870 = vadd.xlane.f32.xlu0 %v1869
        %v1871 = vpop.xlane.xlu0 %1870
        %v1872 = vmul.f32 %v1868, %v726
        %v1873 = vmul.f32 %v1871, %v726
        %v1874 = vmul.f32 %v1862, %v1862
        %v1875 = vmul.f32 %v1863, %v1863
        %v1876 = vsub.f32 %v1872, %v1874
        %v1877 = vsub.f32 %v1873, %v1875
        %v1878 = vsub.f32 %v1854, %v1862
        %v1879 = vsub.f32 %v1855, %v1863
        %v1880 = vadd.f32 %v1876, 1e-05
        %v1881 = vadd.f32 %v1877, 1e-05
        %v1882 = vrsqrt.pop %v1880
        %v1883 = vmul.f32 %v1882, %v1880
        %v1884 = vmul.f32 %v1883, %v1882
        %v1885 = vmul.f32 0.5, %v1884
        %v1886 = vsub.f32 1.5, %v1885
        %v1887 = vmul.f32 %v1882, %v1886
        %vm1888 = vweird.f32 %v1880
        %vm1889 = vweird.f32 %v1882
        %vm1890 = vmor %vm1888, %vm1889
        %v1891 = vsel %vm1890, %v1882, %v1887
        %v1892 = vrsqrt.pop %v1881
        %v1893 = vmul.f32 %v1892, %v1881
        %v1894 = vmul.f32 %v1893, %v1892
        %v1895 = vmul.f32 0.5, %v1894
        %v1896 = vsub.f32 1.5, %v1895
        %v1897 = vmul.f32 %v1892, %v1896
        %vm1898 = vweird.f32 %v1881
        %vm1899 = vweird.f32 %v1892
        %vm1900 = vmor %vm1898, %vm1899
        %v1901 = vsel %vm1900, %v1892, %v1897
        %v1902 = vmul.f32 %v1878, %v1891
        %v1903 = vmul.f32 %v1879, %v1901
        %s1904 = scalar_lea.vmem %s6, 3
        %v1905 = vld [vmem:[%s1904] sm:$0x1]
        %v1907 = vperm.slane %v1905, 0
        %v1909 = vmul.f32 %v1902, %v1907
        %v1910 = vmul.f32 %v1903, %v1907
        %s1911 = scalar_lea.vmem %s7, 3
        %v1912 = vld [vmem:[%s1911] sm:$0x1]
        %v1914 = vperm.slane %v1912, 0
        %v1916 = vadd.f32 %v1909, %v1914
        %v1917 = vadd.f32 %v1910, %v1914
        %v1918 = vsel %vm399, %v1916, 0.0
        %v1919 = vsel %vm399, %v1917, 0.0
        %v1920 = vadd.f32 %v1918, %v1919
        %v1921 = vrot.slane %v1920, 4
        %v1922 = vadd.f32 %v1920, %v1921
        %v1923 = vrot.slane %v1922, 2
        %v1924 = vadd.f32 %v1922, %v1923
        %v1925 = vrot.slane %v1924, 1
        %v1926 = vadd.f32 %v1924, %v1925
        %v1927 = vrcp.pop 16.0
        %v1928 = vmul.f32 16.0, %v1927
        %v1929 = vsub.f32 1.0, %v1928
        %v1930 = vmul.f32 %v1927, %v1929
        %v1931 = vadd.f32 %v1927, %v1930
        %vm1932 = vweird.f32 %v1927
        %v1933 = vsel %vm1932, %v1927, %v1931
        %v1934 = vmul.f32 %v1926, %v1933
        %v1935 = vld [vmem:[%s8] sm:$0xff]
        %v1936 = vld [vmem:[%s8 + $0x8] sm:$0xff]
        %v1937 = vld [vmem:[%s8 + $0x10] sm:$0xff]
        %v1938 = vld [vmem:[%s8 + $0x18] sm:$0xff]
        %v1939 = vld [vmem:[%s8 + $0x20] sm:$0xff]
        %v1940 = vld [vmem:[%s8 + $0x28] sm:$0xff]
        %v1941 = vld [vmem:[%s8 + $0x30] sm:$0xff]
        %v1942 = vld [vmem:[%s8 + $0x38] sm:$0xff]
        %v1943 = vld [vmem:[%s9] sm:$0x1]
        %v1945 = vsel %vm399, %v1934, 0
        %1947 = vmatpush.msra.mxu0 0.0
        %1948 = vmatpush.msra.mxu0 0.0
        %1949 = vmatpush.msra.mxu0 0.0
        %1950 = vmatpush.msra.mxu0 0.0
        %1951 = vmatpush.msra.mxu0 0.0
        %1952 = vmatpush.msra.mxu0 0.0
        %1953 = vmatpush.msra.mxu0 0.0
        %1954 = vmatpush.msra.mxu0 0.0
        %1955 = vmatpush.msra.mxu0 %v1942
        %1956 = vmatpush.msra.mxu0 %v1941
        %1957 = vmatpush.msra.mxu0 %v1940
        %1958 = vmatpush.msra.mxu0 %v1939
        %1959 = vmatpush.msra.mxu0 %v1938
        %1960 = vmatpush.msra.mxu0 %v1937
        %1961 = vmatpush.msra.mxu0 %v1936
        %1962 = vmatpush.msra.mxu0 %v1935
        %1963 = vmatmul.f32.gmra.mxu0 %v1945
        %v1964 = vpop.f32.mrf.mxu0
        %v1965 = vadd.f32 %v1943, %v1964
        %1966 = vdwg.mxu0
        %v1967 = vxor.u32 %v1965, 2147483648
        %v1968 = vmul.f32 %v1967, 1.442695
        %v1969 = vpow.pop %v1968
        %v1970 = vadd.f32 %v1969, 1.0
        %v1971 = vrcp.pop %v1970
        %v1972 = vmul.f32 %v1970, %v1971
        %v1973 = vsub.f32 1.0, %v1972
        %v1974 = vmul.f32 %v1971, %v1973
        %v1975 = vadd.f32 %v1971, %v1974
        %vm1976 = vweird.f32 %v1970
        %vm1977 = vweird.f32 %v1971
        %vm1978 = vmor %vm1976, %vm1977
        %v1979 = vsel %vm1978, %v1971, %v1975
        %v1980 = vand.u32 2147483647, %v1970
        %vm1981 = vcmp.eq.f32.partialorder %v1980, 8.507059e+37
        %v1982 = vand.u32 %v1970, 2147483648
        %v1983 = vor.u32 1.1754944e-38, %v1982
        %v1984 = vsel %vm1981, %v1983, %v1979
        %v1985 = vmul.f32 1.0, %v1984
        %vm1986 = vcmask 57344
        %1987 = vst.msk [vmem:[%s351] sm:$0x1] %vm1986, %v1985
        %s1988 = sand.u32 %s247, 1
        %s1989 = scalar_lea.sflag [#allocation4], %s1988
        %s1990 = sand.u32 %s247, 1
        %s1991 = scalar_lea.vmem [#allocation3], %s1990
        // Predicated region
        $region61: #{s4model_forward.1} parent=59 // pred_check
          %p1992 = pneg %p257
        $region62: #{s4model_forward.1} parent=59 // pred_check_branch
          %1994 = sbr.rel (%p1992) target = $region64
        $region63: #{s4model_forward.1} parent=59 // pred_region
          %1996 = vsyncadd %s1989, 0
          %s1997 = scalar_lea.hbm %s10, %s24
          %s1999 = sshll.u32 %s1991, 4
          %s2000 = int_to_ptr.vmem [resolvable:$true] %s1999
          %s2001 = sshll.u32 %s1997, 4
          %s2002 = int_to_ptr.hbm [resolvable:$true] %s2001
          %2004 = dma.vmem_to_hbm [thread:$0]  %s2000, 16, %s2002, %s1989
        $region64: #{s4model_forward.1} parent=59 // pred_fallthru
          _
      $region60: #{s4model_forward.1} parent=5 // pred_fallthru
        _
      %p2005 = scmp.le.s32.totalorder 2, %s19
      // Predicated region
      $region65: #{s4model_forward.1} parent=5 // pred_check
        %p2006 = pneg %p2005
      $region66: #{s4model_forward.1} parent=5 // pred_check_branch
        %2008 = sbr.rel (%p2006) target = $region68
      $region67: #{s4model_forward.1} parent=5 // pred_region
        %s2009 = ssub.s32 %s19, 2
        // Predicated region
        $region69: #{s4model_forward.1} parent=67 // pred_check
          %p2010 = pneg %p263
        $region70: #{s4model_forward.1} parent=67 // pred_check_branch
          %2012 = sbr.rel (%p2010) target = $region72
        $region71: #{s4model_forward.1} parent=67 // pred_region
          %s2013 = sand.u32 %s248, 1
          %s2014 = scalar_lea.sflag [#allocation4], %s2013
          %s2015 = sand.u32 %s248, 1
          %s2016 = scalar_lea.vmem [#allocation3], %s2015
          %2018 = dma.done %s2014, 16
        $region72: #{s4model_forward.1} parent=67 // pred_fallthru
          _
      $region68: #{s4model_forward.1} parent=5 // pred_fallthru
        _
    $region6: #{s4model_forward.1} parent=1 // loop_footer
      %s23 = sadd.s32 1, %s19
    $region7: #{s4model_forward.1} parent=1 // loop_footer_branch
      %18 = sbr.rel target = $region3
    $region8: #{s4model_forward.1} parent=1 // loop_exit
      _
    %2019 = vsyncpa [#allocation4], 1
    %s2020 = scalar_lea.sflag [#allocation4], 1
    %2021 = vsyncpa %s2020, 1

</llo_original>
